<compile_context>
chip_gen: v5e
topology: v5e:2x2
jax: 0.10.0
libtpu: 0.0.40
codegen_flags: <defaults>
</compile_context>

<pallas_src>
import functools

import numpy as np
import jax
import jax.numpy as jnp
from jax.experimental import pallas as pl
from jax.experimental.pallas import tpu as pltpu


def _round_up(x, m):
    return (x + m - 1) // m * m


# ----------------------------------------------------------------------------------
# Fused matmul + per-column affine (+ReLU) kernels
# ----------------------------------------------------------------------------------
def _mm_affine_single_k(a_ref, b_ref, scale_ref, shift_ref, o_ref, *, relu):
    """Whole K in one tile: no accumulator scratch, direct epilogue."""
    acc = jnp.dot(a_ref[...], b_ref[...], preferred_element_type=jnp.float32)
    out = acc * scale_ref[...] + shift_ref[...]
    if relu:
        out = jnp.maximum(out, 0.0)
    o_ref[...] = out.astype(o_ref.dtype)


def _mm_affine_multi_k(a_ref, b_ref, scale_ref, shift_ref, o_ref, acc_ref, *, relu):
    """K tiled on grid axis 3 (reduction axis last); f32 VMEM accumulator."""
    @pl.when(pl.program_id(3) == 0)
    def _init():
        acc_ref[...] = jnp.zeros_like(acc_ref)

    acc_ref[...] += jnp.dot(a_ref[...], b_ref[...], preferred_element_type=jnp.float32)

    @pl.when(pl.program_id(3) == pl.num_programs(3) - 1)
    def _finalize():
        out = acc_ref[...] * scale_ref[...] + shift_ref[...]
        if relu:
            out = jnp.maximum(out, 0.0)
        o_ref[...] = out.astype(o_ref.dtype)


def conv_mm(a, b, scale, shift, *, relu=True, out_dtype=jnp.bfloat16):
    """relu?((A[Nb,M,K] @ B[K,N]) * scale[N] + shift[N]) -> (Nb, Mp, Np) (padded).

    bf16 MXU operands, f32 accumulation, lane-dense (>=128) N tiles.
    """
    Nb, M, K = a.shape
    K2, N = b.shape
    assert K == K2, (a.shape, b.shape)

    tn = min(512, _round_up(N, 128))
    Np = _round_up(N, tn)
    tm = min(512, _round_up(M, 16))
    Mp = _round_up(M, tm)
    Kp = _round_up(K, 128)
    if Kp <= 1024:
        tk = Kp
    else:
        tk = 512
        Kp = _round_up(K, tk)
    nk = Kp // tk

    a_p = jnp.pad(a.astype(jnp.bfloat16), ((0, 0), (0, Mp - M), (0, Kp - K)))
    b_p = jnp.pad(b.astype(jnp.bfloat16), ((0, Kp - K), (0, Np - N)))
    scale_p = jnp.pad(scale.reshape(1, N).astype(jnp.float32), ((0, 0), (0, Np - N)))
    shift_p = jnp.pad(shift.reshape(1, N).astype(jnp.float32), ((0, 0), (0, Np - N)))

    if nk == 1:
        kernel = functools.partial(_mm_affine_single_k, relu=relu)
        grid = (Nb, Mp // tm, Np // tn)
        in_specs = [
            pl.BlockSpec((None, tm, tk), lambda bb, i, j: (bb, i, 0)),
            pl.BlockSpec((tk, tn), lambda bb, i, j: (0, j)),
            pl.BlockSpec((1, tn), lambda bb, i, j: (0, j)),
            pl.BlockSpec((1, tn), lambda bb, i, j: (0, j)),
        ]
        out_specs = pl.BlockSpec((None, tm, tn), lambda bb, i, j: (bb, i, j))
        scratch = []
        dims = ("parallel", "parallel", "parallel")
    else:
        kernel = functools.partial(_mm_affine_multi_k, relu=relu)
        grid = (Nb, Mp // tm, Np // tn, nk)
        in_specs = [
            pl.BlockSpec((None, tm, tk), lambda bb, i, j, k: (bb, i, k)),
            pl.BlockSpec((tk, tn), lambda bb, i, j, k: (k, j)),
            pl.BlockSpec((1, tn), lambda bb, i, j, k: (0, j)),
            pl.BlockSpec((1, tn), lambda bb, i, j, k: (0, j)),
        ]
        out_specs = pl.BlockSpec((None, tm, tn), lambda bb, i, j, k: (bb, i, j))
        scratch = [pltpu.VMEM((tm, tn), jnp.float32)]
        dims = ("parallel", "parallel", "parallel", "arbitrary")

    return pl.pallas_call(
        kernel,
        out_shape=jax.ShapeDtypeStruct((Nb, Mp, Np), out_dtype),
        grid=grid,
        in_specs=in_specs,
        out_specs=out_specs,
        scratch_shapes=scratch,
        compiler_params=pltpu.CompilerParams(
            dimension_semantics=dims,
            vmem_limit_bytes=32 * 1024 * 1024,
        ),
    )(a_p, b_p, scale_p, shift_p)


# ----------------------------------------------------------------------------------
# Projection kernel: reads the branch outputs separately (no HBM concat), adds the
# per-batch pooled-branch contribution as a bias, then BN affine + ReLU.
# ----------------------------------------------------------------------------------
def _proj_kernel(*refs, n_br, cb, relu):
    a_refs = refs[:n_br]
    b_ref, scale_ref, shift_ref, bias_ref, o_ref = refs[n_br:]
    acc = jnp.dot(a_refs[0][...], b_ref[0:cb, :], preferred_element_type=jnp.float32)
    for t in range(1, n_br):
        acc = acc + jnp.dot(a_refs[t][...], b_ref[t * cb:(t + 1) * cb, :],
                            preferred_element_type=jnp.float32)
    out = (acc + bias_ref[...]) * scale_ref[...] + shift_ref[...]
    if relu:
        out = jnp.maximum(out, 0.0)
    o_ref[...] = out.astype(o_ref.dtype)


def proj_mm(branches, wproj, scale, shift, bias, *, relu=True, out_dtype=jnp.float32):
    """relu((sum_t branches[t] @ Wproj[t*Cb:(t+1)*Cb] + bias[batch]) * scale + shift)."""
    n_br = len(branches)
    Nb, Mp, Cb = branches[0].shape
    assert Cb % 128 == 0, "per-branch channel count must be lane-aligned"
    Kb = n_br * Cb
    assert wproj.shape[0] == Kb, (wproj.shape, Kb)
    N = wproj.shape[1]

    tn = min(512, _round_up(N, 128))
    Np = _round_up(N, tn)
    tm = min(512, Mp)                      # Mp is a multiple of the branch tile -> divides

    w_p = jnp.pad(wproj.astype(jnp.bfloat16), ((0, 0), (0, Np - N)))
    scale_p = jnp.pad(scale.reshape(1, N).astype(jnp.float32), ((0, 0), (0, Np - N)))
    shift_p = jnp.pad(shift.reshape(1, N).astype(jnp.float32), ((0, 0), (0, Np - N)))
    bias_p = jnp.pad(bias.reshape(Nb, 1, N).astype(jnp.float32),
                     ((0, 0), (0, 0), (0, Np - N)))

    in_specs = [pl.BlockSpec((None, tm, Cb), lambda bb, i, j: (bb, i, 0))
                for _ in range(n_br)]
    in_specs += [
        pl.BlockSpec((Kb, tn), lambda bb, i, j: (0, j)),
        pl.BlockSpec((1, tn), lambda bb, i, j: (0, j)),
        pl.BlockSpec((1, tn), lambda bb, i, j: (0, j)),
        pl.BlockSpec((None, 1, tn), lambda bb, i, j: (bb, 0, j)),
    ]

    out = pl.pallas_call(
        functools.partial(_proj_kernel, n_br=n_br, cb=Cb, relu=relu),
        out_shape=jax.ShapeDtypeStruct((Nb, Mp, Np), out_dtype),
        grid=(Nb, Mp // tm, Np // tn),
        in_specs=in_specs,
        out_specs=pl.BlockSpec((None, tm, tn), lambda bb, i, j: (bb, i, j)),
        compiler_params=pltpu.CompilerParams(
            dimension_semantics=("parallel", "parallel", "parallel"),
            vmem_limit_bytes=32 * 1024 * 1024,
        ),
    )(*[br.astype(jnp.bfloat16) for br in branches], w_p, scale_p, shift_p, bias_p)
    return out[:, :, :N]


# ----------------------------------------------------------------------------------
# bf16 im2col for the dilated 3x3 branches (layout plumbing feeding the Pallas matmul)
# ----------------------------------------------------------------------------------
def _im2col_nhwc_bf16(x_bf, k, dilation, padding):
    Nb, H, W, C = x_bf.shape
    xp = jnp.pad(x_bf, ((0, 0), (padding, padding), (padding, padding), (0, 0)))
    taps = []
    for i in range(k):
        for j in range(k):
            hs, ws = i * dilation, j * dilation
            taps.append(xp[:, hs:hs + H, ws:ws + W, :])
    a = jnp.stack(taps, axis=3)                          # (Nb, H, W, k*k, C)
    return a.reshape(Nb, H * W, k * k * C)


# ----------------------------------------------------------------------------------
# Deterministic parameter construction (eval-mode BN folded into scale/shift)
# ----------------------------------------------------------------------------------
def _conv_w(key, cout, cin, k):
    fan_in = cin * k * k
    return jax.random.normal(key, (cout, cin, k, k), jnp.float32) / np.sqrt(fan_in)


def _bn(key, c, eps=1e-5):
    k1, k2, k3, k4 = jax.random.split(key, 4)
    gamma = 1.0 + 0.1 * jax.random.normal(k1, (c,), jnp.float32)
    beta = 0.1 * jax.random.normal(k2, (c,), jnp.float32)
    mean = 0.1 * jax.random.normal(k3, (c,), jnp.float32)
    var = jax.random.uniform(k4, (c,), jnp.float32, 0.5, 1.5)
    scale = gamma / jnp.sqrt(var + eps)
    shift = beta - mean * scale
    return scale, shift


def init_params(key, in_channels, atrous_rates, out_channels=256):
    n_branches = 2 + len(atrous_rates)                   # 1x1 + dilated + pooling
    ks = iter(jax.random.split(key, 2 + 2 * len(atrous_rates) + 4))
    p = {}
    p['conv1x1_w'] = _conv_w(next(ks), out_channels, in_channels, 1)
    p['bn1x1_s'], p['bn1x1_b'] = _bn(next(ks), out_channels)
    for r_i in range(len(atrous_rates)):
        p[f'conv_r{r_i}_w'] = _conv_w(next(ks), out_channels, in_channels, 3)
        p[f'bn_r{r_i}_s'], p[f'bn_r{r_i}_b'] = _bn(next(ks), out_channels)
    p['pool_w'] = _conv_w(next(ks), out_channels, in_channels, 1)
    p['bn_pool_s'], p['bn_pool_b'] = _bn(next(ks), out_channels)
    p['proj_w'] = _conv_w(next(ks), out_channels, n_branches * out_channels, 1)
    p['bn_proj_s'], p['bn_proj_b'] = _bn(next(ks), out_channels)
    return p


# ----------------------------------------------------------------------------------
# ASPP.forward
# ----------------------------------------------------------------------------------
def aspp_forward(x_nchw, p, atrous_rates):
    Nb, Cin, H, W = x_nchw.shape
    Cout = p['conv1x1_w'].shape[0]
    HW = H * W
    x = jnp.transpose(x_nchw, (0, 2, 3, 1))              # NCHW -> NHWC (f32)
    x_bf = x.astype(jnp.bfloat16)                        # cast once, before im2col

    branch_outs = []

    # --- branch 0: 1x1 conv + BN + ReLU (un-fused, lane-dense N = Cout) ---
    branch_outs.append(
        conv_mm(x_bf.reshape(Nb, HW, Cin),
                p['conv1x1_w'].reshape(Cout, Cin).T,
                p['bn1x1_s'], p['bn1x1_b'], relu=True, out_dtype=jnp.bfloat16))

    # --- dilated 3x3 branches (ASPPConv) ---
    for r_i, r in enumerate(atrous_rates):
        a = _im2col_nhwc_bf16(x_bf, 3, r, r)             # (Nb, HW, 9*Cin) bf16
        w = jnp.transpose(p[f'conv_r{r_i}_w'], (2, 3, 1, 0)).reshape(9 * Cin, Cout)
        branch_outs.append(
            conv_mm(a, w, p[f'bn_r{r_i}_s'], p[f'bn_r{r_i}_b'],
                    relu=True, out_dtype=jnp.bfloat16))

    # --- ASPPPooling in plain JAX (only Nb rows of work), folded into the projection
    #     as a per-batch bias.  Bilinear upsample of a 1x1 map (align_corners=False)
    #     is exactly a per-batch broadcast, so no interpolation is needed. ---
    gap = jnp.mean(x, axis=(1, 2))                       # (Nb, Cin) f32
    ypool = jnp.maximum(
        (gap @ p['pool_w'].reshape(Cout, Cin).T) * p['bn_pool_s'] + p['bn_pool_b'], 0.0)

    wproj = jnp.transpose(p['proj_w'], (2, 3, 1, 0)).reshape(-1, Cout)  # (n_tot*Cout, Cout)
    n_br = len(branch_outs)
    pool_bias = ypool @ wproj[n_br * Cout:, :]           # (Nb, Cout) f32

    # --- projection 1x1 conv + BN + ReLU over the (never-materialized) concat ---
    out = proj_mm(branch_outs, wproj[:n_br * Cout, :],
                  p['bn_proj_s'], p['bn_proj_b'], pool_bias,
                  relu=True, out_dtype=jnp.float32)      # (Nb, HWp, Cout)
    # TODO(synk): nn.Dropout(0.5) in `project` is identity in eval mode (omitted).

    out = out[:, :HW, :].reshape(Nb, H, W, Cout)
    return jnp.transpose(out, (0, 3, 1, 2))              # NHWC -> NCHW


# ----------------------------------------------------------------------------------
# Pure-JAX reference (f32, lax.conv) for correctness checking
# ----------------------------------------------------------------------------------
def _ref_conv_bn_relu(x_nhwc, w_oihw, scale, shift, *, padding=0, dilation=1):
    y = jax.lax.conv_general_dilated(
        x_nhwc, jnp.transpose(w_oihw, (2, 3, 1, 0)), (1, 1),
        [(padding, padding), (padding, padding)],
        rhs_dilation=(dilation, dilation),
        dimension_numbers=('NHWC', 'HWIO', 'NHWC'))
    return jnp.maximum(y * scale + shift, 0.0)


def aspp_reference(x_nchw, p, atrous_rates):
    x = jnp.transpose(x_nchw, (0, 2, 3, 1))
    Nb, H, W, _ = x.shape
    res = [_ref_conv_bn_relu(x, p['conv1x1_w'], p['bn1x1_s'], p['bn1x1_b'])]
    for r_i, r in enumerate(atrous_rates):
        res.append(_ref_conv_bn_relu(x, p[f'conv_r{r_i}_w'],
                                     p[f'bn_r{r_i}_s'], p[f'bn_r{r_i}_b'],
                                     padding=r, dilation=r))
    gap = jnp.mean(x, axis=(1, 2), keepdims=True)
    yp = _ref_conv_bn_relu(gap, p['pool_w'], p['bn_pool_s'], p['bn_pool_b'])
    res.append(jnp.broadcast_to(yp, (Nb, H, W, yp.shape[-1])))
    cat = jnp.concatenate(res, axis=-1)
    out = _ref_conv_bn_relu(cat, p['proj_w'], p['bn_proj_s'], p['bn_proj_b'])
    return jnp.transpose(out, (0, 3, 1, 2))


if __name__ == "__main__":
    Nb, Cin, H, W = 2, 16, 16, 16
    rates = (2, 4, 6)
    Cout = 256

    x = jax.random.normal(jax.random.PRNGKey(0), (Nb, Cin, H, W), jnp.float32)
    params = init_params(jax.random.PRNGKey(1), Cin, rates, Cout)

    fwd = jax.jit(aspp_forward, static_argnames=('atrous_rates',))
    out = jax.block_until_ready(fwd(x, params, atrous_rates=rates))

    assert out.shape == (Nb, Cout, H, W), out.shape
    assert bool(jnp.all(jnp.isfinite(out)))

    ref = np.asarray(jax.block_until_ready(aspp_reference(x, params, rates)))
    got = np.asarray(out)
    err = np.max(np.abs(got - ref)) / (np.max(np.abs(ref)) + 1e-6)
    assert err < 0.05, f"relative-to-max error too large: {err}"

    print("KERNEL_OK")
</pallas_src>

<mosaic_0001>
module attributes {stable_mosaic.version = 11 : i64} {
  func.func @_mm_affine_single_k(%arg0: i32, %arg1: i32, %arg2: i32, %arg3: memref<1x256x256xbf16, #tpu.memory_space<vmem>>, %arg4: memref<256x256xbf16, #tpu.memory_space<vmem>>, %arg5: memref<1x256xf32, #tpu.memory_space<vmem>>, %arg6: memref<1x256xf32, #tpu.memory_space<vmem>>, %arg7: memref<1x256x256xbf16, #tpu.memory_space<vmem>>) attributes {dimension_semantics = [#tpu.dimension_semantics<parallel>, #tpu.dimension_semantics<parallel>, #tpu.dimension_semantics<parallel>], iteration_bounds = array<i64: 2, 1, 1>, scalar_prefetch = 0 : i64, scratch_operands = 0 : i64, tpu.core_type = #tpu.core_type<tc>, window_params = [{transform_indices = @transform_0, window_bounds = array<i64: 1, 256, 256>}, {transform_indices = @transform_1, window_bounds = array<i64: 256, 256>}, {transform_indices = @transform_2, window_bounds = array<i64: 1, 256>}, {transform_indices = @transform_3, window_bounds = array<i64: 1, 256>}, {transform_indices = @transform_4, window_bounds = array<i64: 1, 256, 256>}]} {
    %c0 = arith.constant 0 : index
    %c0_0 = arith.constant 0 : index
    %c0_1 = arith.constant 0 : index
    %0 = vector.load %arg3[%c0, %c0_0, %c0_1] : memref<1x256x256xbf16, #tpu.memory_space<vmem>>, vector<1x256x256xbf16>
    %1 = vector.shape_cast %0 : vector<1x256x256xbf16> to vector<256x256xbf16>
    %c0_2 = arith.constant 0 : index
    %c0_3 = arith.constant 0 : index
    %2 = vector.load %arg4[%c0_2, %c0_3] : memref<256x256xbf16, #tpu.memory_space<vmem>>, vector<256x256xbf16>
    %cst = arith.constant dense<0.000000e+00> : vector<256x256xf32>
    %3 = tpu.matmul %1, %2, %cst {dimension_numbers = #tpu.dot_dimension_numbers<[1], [0], [0], [1], [0, 0, 1, 1], [], []>} : vector<256x256xbf16>, vector<256x256xbf16>, vector<256x256xf32> -> vector<256x256xf32>
    %c0_4 = arith.constant 0 : index
    %c0_5 = arith.constant 0 : index
    %4 = vector.load %arg5[%c0_4, %c0_5] : memref<1x256xf32, #tpu.memory_space<vmem>>, vector<1x256xf32>
    %5 = vector.broadcast %4 : vector<1x256xf32> to vector<256x256xf32>
    %6 = arith.mulf %3, %5 : vector<256x256xf32>
    %c0_6 = arith.constant 0 : index
    %c0_7 = arith.constant 0 : index
    %7 = vector.load %arg6[%c0_6, %c0_7] : memref<1x256xf32, #tpu.memory_space<vmem>>, vector<1x256xf32>
    %8 = vector.broadcast %7 : vector<1x256xf32> to vector<256x256xf32>
    %9 = arith.addf %6, %8 : vector<256x256xf32>
    %cst_8 = arith.constant 0.000000e+00 : f32
    %10 = vector.broadcast %cst_8 : f32 to vector<256x256xf32>
    %11 = arith.maximumf %9, %10 : vector<256x256xf32>
    %12 = arith.truncf %11 : vector<256x256xf32> to vector<256x256xbf16>
    %c0_9 = arith.constant 0 : index
    %c0_10 = arith.constant 0 : index
    %c0_11 = arith.constant 0 : index
    %13 = vector.load %arg7[%c0_9, %c0_10, %c0_11] : memref<1x256x256xbf16, #tpu.memory_space<vmem>>, vector<1x256x256xbf16>
    %14 = vector.shape_cast %13 : vector<1x256x256xbf16> to vector<256x256xbf16>
    %15 = vector.shape_cast %12 : vector<256x256xbf16> to vector<1x256x256xbf16>
    tpu.vector_store %arg7[%c0_9, %c0_10, %c0_11], %15 {strides = array<i32>} : memref<1x256x256xbf16, #tpu.memory_space<vmem>>, vector<1x256x256xbf16>,
    return
  }
  func.func @transform_0(%arg0: i32, %arg1: i32, %arg2: i32) -> (i32, i32, i32) {
    %c0_i32 = arith.constant 0 : i32
    %c0_i32_0 = arith.constant 0 : i32
    return %arg0, %arg1, %c0_i32 : i32, i32, i32
  }
  func.func @transform_1(%arg0: i32, %arg1: i32, %arg2: i32) -> (i32, i32) {
    %c0_i32 = arith.constant 0 : i32
    %c0_i32_0 = arith.constant 0 : i32
    return %c0_i32, %arg2 : i32, i32
  }
  func.func @transform_2(%arg0: i32, %arg1: i32, %arg2: i32) -> (i32, i32) {
    %c0_i32 = arith.constant 0 : i32
    %c0_i32_0 = arith.constant 0 : i32
    return %c0_i32, %arg2 : i32, i32
  }
  func.func @transform_3(%arg0: i32, %arg1: i32, %arg2: i32) -> (i32, i32) {
    %c0_i32 = arith.constant 0 : i32
    %c0_i32_0 = arith.constant 0 : i32
    return %c0_i32, %arg2 : i32, i32
  }
  func.func @transform_4(%arg0: i32, %arg1: i32, %arg2: i32) -> (i32, i32, i32) {
    %c0_i32 = arith.constant 0 : i32
    return %arg0, %arg1, %arg2 : i32, i32, i32
  }
}

module attributes {stable_mosaic.version = 11 : i64} {
  func.func @_mm_affine_single_k(%arg0: i32, %arg1: i32, %arg2: i32, %arg3: memref<1x256x128xbf16, #tpu.memory_space<vmem>>, %arg4: memref<128x256xbf16, #tpu.memory_space<vmem>>, %arg5: memref<1x256xf32, #tpu.memory_space<vmem>>, %arg6: memref<1x256xf32, #tpu.memory_space<vmem>>, %arg7: memref<1x256x256xbf16, #tpu.memory_space<vmem>>) attributes {dimension_semantics = [#tpu.dimension_semantics<parallel>, #tpu.dimension_semantics<parallel>, #tpu.dimension_semantics<parallel>], iteration_bounds = array<i64: 2, 1, 1>, scalar_prefetch = 0 : i64, scratch_operands = 0 : i64, tpu.core_type = #tpu.core_type<tc>, window_params = [{transform_indices = @transform_0, window_bounds = array<i64: 1, 256, 128>}, {transform_indices = @transform_1, window_bounds = array<i64: 128, 256>}, {transform_indices = @transform_2, window_bounds = array<i64: 1, 256>}, {transform_indices = @transform_3, window_bounds = array<i64: 1, 256>}, {transform_indices = @transform_4, window_bounds = array<i64: 1, 256, 256>}]} {
    %c0 = arith.constant 0 : index
    %c0_0 = arith.constant 0 : index
    %c0_1 = arith.constant 0 : index
    %0 = vector.load %arg3[%c0, %c0_0, %c0_1] : memref<1x256x128xbf16, #tpu.memory_space<vmem>>, vector<1x256x128xbf16>
    %1 = vector.shape_cast %0 : vector<1x256x128xbf16> to vector<256x128xbf16>
    %c0_2 = arith.constant 0 : index
    %c0_3 = arith.constant 0 : index
    %2 = vector.load %arg4[%c0_2, %c0_3] : memref<128x256xbf16, #tpu.memory_space<vmem>>, vector<128x256xbf16>
    %cst = arith.constant dense<0.000000e+00> : vector<256x256xf32>
    %3 = tpu.matmul %1, %2, %cst {dimension_numbers = #tpu.dot_dimension_numbers<[1], [0], [0], [1], [0, 0, 1, 1], [], []>} : vector<256x128xbf16>, vector<128x256xbf16>, vector<256x256xf32> -> vector<256x256xf32>
    %c0_4 = arith.constant 0 : index
    %c0_5 = arith.constant 0 : index
    %4 = vector.load %arg5[%c0_4, %c0_5] : memref<1x256xf32, #tpu.memory_space<vmem>>, vector<1x256xf32>
    %5 = vector.broadcast %4 : vector<1x256xf32> to vector<256x256xf32>
    %6 = arith.mulf %3, %5 : vector<256x256xf32>
    %c0_6 = arith.constant 0 : index
    %c0_7 = arith.constant 0 : index
    %7 = vector.load %arg6[%c0_6, %c0_7] : memref<1x256xf32, #tpu.memory_space<vmem>>, vector<1x256xf32>
    %8 = vector.broadcast %7 : vector<1x256xf32> to vector<256x256xf32>
    %9 = arith.addf %6, %8 : vector<256x256xf32>
    %cst_8 = arith.constant 0.000000e+00 : f32
    %10 = vector.broadcast %cst_8 : f32 to vector<256x256xf32>
    %11 = arith.maximumf %9, %10 : vector<256x256xf32>
    %12 = arith.truncf %11 : vector<256x256xf32> to vector<256x256xbf16>
    %c0_9 = arith.constant 0 : index
    %c0_10 = arith.constant 0 : index
    %c0_11 = arith.constant 0 : index
    %13 = vector.load %arg7[%c0_9, %c0_10, %c0_11] : memref<1x256x256xbf16, #tpu.memory_space<vmem>>, vector<1x256x256xbf16>
    %14 = vector.shape_cast %13 : vector<1x256x256xbf16> to vector<256x256xbf16>
    %15 = vector.shape_cast %12 : vector<256x256xbf16> to vector<1x256x256xbf16>
    tpu.vector_store %arg7[%c0_9, %c0_10, %c0_11], %15 {strides = array<i32>} : memref<1x256x256xbf16, #tpu.memory_space<vmem>>, vector<1x256x256xbf16>,
    return
  }
  func.func @transform_0(%arg0: i32, %arg1: i32, %arg2: i32) -> (i32, i32, i32) {
    %c0_i32 = arith.constant 0 : i32
    %c0_i32_0 = arith.constant 0 : i32
    return %arg0, %arg1, %c0_i32 : i32, i32, i32
  }
  func.func @transform_1(%arg0: i32, %arg1: i32, %arg2: i32) -> (i32, i32) {
    %c0_i32 = arith.constant 0 : i32
    %c0_i32_0 = arith.constant 0 : i32
    return %c0_i32, %arg2 : i32, i32
  }
  func.func @transform_2(%arg0: i32, %arg1: i32, %arg2: i32) -> (i32, i32) {
    %c0_i32 = arith.constant 0 : i32
    %c0_i32_0 = arith.constant 0 : i32
    return %c0_i32, %arg2 : i32, i32
  }
  func.func @transform_3(%arg0: i32, %arg1: i32, %arg2: i32) -> (i32, i32) {
    %c0_i32 = arith.constant 0 : i32
    %c0_i32_0 = arith.constant 0 : i32
    return %c0_i32, %arg2 : i32, i32
  }
  func.func @transform_4(%arg0: i32, %arg1: i32, %arg2: i32) -> (i32, i32, i32) {
    %c0_i32 = arith.constant 0 : i32
    return %arg0, %arg1, %arg2 : i32, i32, i32
  }
}

module attributes {stable_mosaic.version = 11 : i64} {
  func.func @_proj_kernel(%arg0: i32, %arg1: i32, %arg2: i32, %arg3: memref<1x256x256xbf16, #tpu.memory_space<vmem>>, %arg4: memref<1x256x256xbf16, #tpu.memory_space<vmem>>, %arg5: memref<1x256x256xbf16, #tpu.memory_space<vmem>>, %arg6: memref<1x256x256xbf16, #tpu.memory_space<vmem>>, %arg7: memref<1024x256xbf16, #tpu.memory_space<vmem>>, %arg8: memref<1x256xf32, #tpu.memory_space<vmem>>, %arg9: memref<1x256xf32, #tpu.memory_space<vmem>>, %arg10: memref<1x1x256xf32, #tpu.memory_space<vmem>>, %arg11: memref<1x256x256xf32, #tpu.memory_space<vmem>>) attributes {dimension_semantics = [#tpu.dimension_semantics<parallel>, #tpu.dimension_semantics<parallel>, #tpu.dimension_semantics<parallel>], iteration_bounds = array<i64: 2, 1, 1>, scalar_prefetch = 0 : i64, scratch_operands = 0 : i64, tpu.core_type = #tpu.core_type<tc>, window_params = [{transform_indices = @transform_0, window_bounds = array<i64: 1, 256, 256>}, {transform_indices = @transform_1, window_bounds = array<i64: 1, 256, 256>}, {transform_indices = @transform_2, window_bounds = array<i64: 1, 256, 256>}, {transform_indices = @transform_3, window_bounds = array<i64: 1, 256, 256>}, {transform_indices = @transform_4, window_bounds = array<i64: 1024, 256>}, {transform_indices = @transform_5, window_bounds = array<i64: 1, 256>}, {transform_indices = @transform_6, window_bounds = array<i64: 1, 256>}, {transform_indices = @transform_7, window_bounds = array<i64: 1, 1, 256>}, {transform_indices = @transform_8, window_bounds = array<i64: 1, 256, 256>}]} {
    %c0 = arith.constant 0 : index
    %c0_0 = arith.constant 0 : index
    %c0_1 = arith.constant 0 : index
    %0 = vector.load %arg3[%c0, %c0_0, %c0_1] : memref<1x256x256xbf16, #tpu.memory_space<vmem>>, vector<1x256x256xbf16>
    %1 = vector.shape_cast %0 : vector<1x256x256xbf16> to vector<256x256xbf16>
    %c0_2 = arith.constant 0 : index
    %c0_3 = arith.constant 0 : index
    %2 = vector.load %arg7[%c0_2, %c0_3] : memref<1024x256xbf16, #tpu.memory_space<vmem>>, vector<256x256xbf16>
    %cst = arith.constant dense<0.000000e+00> : vector<256x256xf32>
    %3 = tpu.matmul %1, %2, %cst {dimension_numbers = #tpu.dot_dimension_numbers<[1], [0], [0], [1], [0, 0, 1, 1], [], []>} : vector<256x256xbf16>, vector<256x256xbf16>, vector<256x256xf32> -> vector<256x256xf32>
    %c0_4 = arith.constant 0 : index
    %c0_5 = arith.constant 0 : index
    %c0_6 = arith.constant 0 : index
    %4 = vector.load %arg4[%c0_4, %c0_5, %c0_6] : memref<1x256x256xbf16, #tpu.memory_space<vmem>>, vector<1x256x256xbf16>
    %5 = vector.shape_cast %4 : vector<1x256x256xbf16> to vector<256x256xbf16>
    %c256 = arith.constant 256 : index
    %c0_7 = arith.constant 0 : index
    %6 = vector.load %arg7[%c256, %c0_7] : memref<1024x256xbf16, #tpu.memory_space<vmem>>, vector<256x256xbf16>
    %cst_8 = arith.constant dense<0.000000e+00> : vector<256x256xf32>
    %7 = tpu.matmul %5, %6, %cst_8 {dimension_numbers = #tpu.dot_dimension_numbers<[1], [0], [0], [1], [0, 0, 1, 1], [], []>} : vector<256x256xbf16>, vector<256x256xbf16>, vector<256x256xf32> -> vector<256x256xf32>
    %8 = arith.addf %3, %7 : vector<256x256xf32>
    %c0_9 = arith.constant 0 : index
    %c0_10 = arith.constant 0 : index
    %c0_11 = arith.constant 0 : index
    %9 = vector.load %arg5[%c0_9, %c0_10, %c0_11] : memref<1x256x256xbf16, #tpu.memory_space<vmem>>, vector<1x256x256xbf16>
    %10 = vector.shape_cast %9 : vector<1x256x256xbf16> to vector<256x256xbf16>
    %c512 = arith.constant 512 : index
    %c0_12 = arith.constant 0 : index
    %11 = vector.load %arg7[%c512, %c0_12] : memref<1024x256xbf16, #tpu.memory_space<vmem>>, vector<256x256xbf16>
    %cst_13 = arith.constant dense<0.000000e+00> : vector<256x256xf32>
    %12 = tpu.matmul %10, %11, %cst_13 {dimension_numbers = #tpu.dot_dimension_numbers<[1], [0], [0], [1], [0, 0, 1, 1], [], []>} : vector<256x256xbf16>, vector<256x256xbf16>, vector<256x256xf32> -> vector<256x256xf32>
    %13 = arith.addf %8, %12 : vector<256x256xf32>
    %c0_14 = arith.constant 0 : index
    %c0_15 = arith.constant 0 : index
    %c0_16 = arith.constant 0 : index
    %14 = vector.load %arg6[%c0_14, %c0_15, %c0_16] : memref<1x256x256xbf16, #tpu.memory_space<vmem>>, vector<1x256x256xbf16>
    %15 = vector.shape_cast %14 : vector<1x256x256xbf16> to vector<256x256xbf16>
    %c768 = arith.constant 768 : index
    %c0_17 = arith.constant 0 : index
    %16 = vector.load %arg7[%c768, %c0_17] : memref<1024x256xbf16, #tpu.memory_space<vmem>>, vector<256x256xbf16>
    %cst_18 = arith.constant dense<0.000000e+00> : vector<256x256xf32>
    %17 = tpu.matmul %15, %16, %cst_18 {dimension_numbers = #tpu.dot_dimension_numbers<[1], [0], [0], [1], [0, 0, 1, 1], [], []>} : vector<256x256xbf16>, vector<256x256xbf16>, vector<256x256xf32> -> vector<256x256xf32>
    %18 = arith.addf %13, %17 : vector<256x256xf32>
    %c0_19 = arith.constant 0 : index
    %c0_20 = arith.constant 0 : index
    %c0_21 = arith.constant 0 : index
    %19 = vector.load %arg10[%c0_19, %c0_20, %c0_21] : memref<1x1x256xf32, #tpu.memory_space<vmem>>, vector<1x1x256xf32>
    %20 = vector.shape_cast %19 : vector<1x1x256xf32> to vector<1x256xf32>
    %21 = vector.broadcast %20 : vector<1x256xf32> to vector<256x256xf32>
    %22 = arith.addf %18, %21 : vector<256x256xf32>
    %c0_22 = arith.constant 0 : index
    %c0_23 = arith.constant 0 : index
    %23 = vector.load %arg8[%c0_22, %c0_23] : memref<1x256xf32, #tpu.memory_space<vmem>>, vector<1x256xf32>
    %24 = vector.broadcast %23 : vector<1x256xf32> to vector<256x256xf32>
    %25 = arith.mulf %22, %24 : vector<256x256xf32>
    %c0_24 = arith.constant 0 : index
    %c0_25 = arith.constant 0 : index
    %26 = vector.load %arg9[%c0_24, %c0_25] : memref<1x256xf32, #tpu.memory_space<vmem>>, vector<1x256xf32>
    %27 = vector.broadcast %26 : vector<1x256xf32> to vector<256x256xf32>
    %28 = arith.addf %25, %27 : vector<256x256xf32>
    %cst_26 = arith.constant 0.000000e+00 : f32
    %29 = vector.broadcast %cst_26 : f32 to vector<256x256xf32>
    %30 = arith.maximumf %28, %29 : vector<256x256xf32>
    %c0_27 = arith.constant 0 : index
    %c0_28 = arith.constant 0 : index
    %c0_29 = arith.constant 0 : index
    %31 = vector.load %arg11[%c0_27, %c0_28, %c0_29] : memref<1x256x256xf32, #tpu.memory_space<vmem>>, vector<1x256x256xf32>
    %32 = vector.shape_cast %31 : vector<1x256x256xf32> to vector<256x256xf32>
    %33 = vector.shape_cast %30 : vector<256x256xf32> to vector<1x256x256xf32>
    tpu.vector_store %arg11[%c0_27, %c0_28, %c0_29], %33 {strides = array<i32>} : memref<1x256x256xf32, #tpu.memory_space<vmem>>, vector<1x256x256xf32>,
    return
  }
  func.func @transform_0(%arg0: i32, %arg1: i32, %arg2: i32) -> (i32, i32, i32) {
    %c0_i32 = arith.constant 0 : i32
    %c0_i32_0 = arith.constant 0 : i32
    return %arg0, %arg1, %c0_i32 : i32, i32, i32
  }
  func.func @transform_1(%arg0: i32, %arg1: i32, %arg2: i32) -> (i32, i32, i32) {
    %c0_i32 = arith.constant 0 : i32
    %c0_i32_0 = arith.constant 0 : i32
    return %arg0, %arg1, %c0_i32 : i32, i32, i32
  }
  func.func @transform_2(%arg0: i32, %arg1: i32, %arg2: i32) -> (i32, i32, i32) {
    %c0_i32 = arith.constant 0 : i32
    %c0_i32_0 = arith.constant 0 : i32
    return %arg0, %arg1, %c0_i32 : i32, i32, i32
  }
  func.func @transform_3(%arg0: i32, %arg1: i32, %arg2: i32) -> (i32, i32, i32) {
    %c0_i32 = arith.constant 0 : i32
    %c0_i32_0 = arith.constant 0 : i32
    return %arg0, %arg1, %c0_i32 : i32, i32, i32
  }
  func.func @transform_4(%arg0: i32, %arg1: i32, %arg2: i32) -> (i32, i32) {
    %c0_i32 = arith.constant 0 : i32
    %c0_i32_0 = arith.constant 0 : i32
    return %c0_i32, %arg2 : i32, i32
  }
  func.func @transform_5(%arg0: i32, %arg1: i32, %arg2: i32) -> (i32, i32) {
    %c0_i32 = arith.constant 0 : i32
    %c0_i32_0 = arith.constant 0 : i32
    return %c0_i32, %arg2 : i32, i32
  }
  func.func @transform_6(%arg0: i32, %arg1: i32, %arg2: i32) -> (i32, i32) {
    %c0_i32 = arith.constant 0 : i32
    %c0_i32_0 = arith.constant 0 : i32
    return %c0_i32, %arg2 : i32, i32
  }
  func.func @transform_7(%arg0: i32, %arg1: i32, %arg2: i32) -> (i32, i32, i32) {
    %c0_i32 = arith.constant 0 : i32
    %c0_i32_0 = arith.constant 0 : i32
    return %arg0, %c0_i32, %arg2 : i32, i32, i32
  }
  func.func @transform_8(%arg0: i32, %arg1: i32, %arg2: i32) -> (i32, i32, i32) {
    %c0_i32 = arith.constant 0 : i32
    return %arg0, %arg1, %arg2 : i32, i32, i32
  }
}

</mosaic_0001>

<llo_original>
// kernel: aspp_forward.5
$region0: #{aspp_forward.5}
  #allocation0 [shape = 'u32[]', space=smem, size = 0x4, offset = 0x4, fixed_abs, tag = 'smem constant byte address 0x4 - core index']
  #allocation1 [shape = 'u32[72,128]{1,0:T(1,128)}', space=vmem, size = 0x9000, scoped, tag = 'internal scratch']
  %s0 = inlined_call_operand.vmem [shape: bf16[2,256,128], index: 0, kind: input, shape index: {}]
  %s1 = inlined_call_operand.vmem [shape: bf16[128,256], index: 1, kind: input, shape index: {}]
  %s2 = inlined_call_operand.vmem [shape: f32[1,256], index: 2, kind: input, shape index: {}]
  %s3 = inlined_call_operand.vmem [shape: f32[1,256], index: 3, kind: input, shape index: {}]
  %s4 = inlined_call_operand.vmem [shape: bf16[2,256,256], index: 4, kind: output, shape index: {}]
  %s5 = sld [smem:[#allocation0]]
  $region49: #{aspp_forward.5} parent=0
    _
  %s7 = ssub.s32 1, %s5
  %s8 = scalar_select 0, %s7, %s5
  loop: start=0, step=1, limit=4
  $region2: #{aspp_forward.5} parent=0 // loop_pre_header
    _
  $region3: #{aspp_forward.5} parent=0 // loop_header
    %s10 = sphi 0, %s14
    %p11 = scmp.ge.s32.totalorder %s10, 4
    %s17 = sphi 0, %s36
    %s18 = sphi 0, %s32
    %s19 = sphi 0, %s28
    %s20 = sphi 0, %s17
    %s21 = sphi 0, %s18
    %s22 = sphi 0, %s19
    %s23 = sphi 0, %s20
    %s24 = sphi 0, %s21
    %s25 = sphi 0, %s22
    %s41 = sphi 0, %s43
    %s44 = sphi 0, %s41
    %s45 = sphi 0, %s44
    %s61 = sphi 0, %s45
    %s67 = sphi 0, %s69
    %s70 = sphi 0, %s67
    %s71 = sphi 0, %s70
    %s87 = sphi 0, %s71
    %s93 = sphi 0, %s95
    %s96 = sphi 0, %s93
    %s97 = sphi 0, %s96
    %s113 = sphi 0, %s97
    %s119 = sphi 0, %s121
    %s122 = sphi 0, %s119
    %s123 = sphi 0, %s122
    %s139 = sphi 0, %s123
    %s149 = sphi 0, %s151
    %s152 = sphi 0, %s149
    %s153 = sphi 0, %s152
    %s169 = sphi 0, %s153
  $region4: #{aspp_forward.5} parent=0 // loop_header_branch
    %13 = sbr.rel (%p11) target = $region8
  $region5: #{aspp_forward.5} parent=0 // loop_body
    %s15 = ssub.s32 %s10, 1
    %s16 = ssub.s32 %s10, 2
    %s26 = sadd.s32 1, %s19
    %p27 = scmp.ge.s32.totalorder %s26, 1
    %s28 = scalar_select %p27, 0, %s26
    %s29 = sadd.s32 1, %s18
    %s30 = scalar_select %p27, %s29, %s18
    %p31 = scmp.ge.s32.totalorder %s30, 1
    %s32 = scalar_select %p31, 0, %s30
    %s33 = sadd.s32 1, %s17
    %s34 = scalar_select %p31, %s33, %s17
    %p35 = scmp.ge.s32.totalorder %s34, 2
    %s36 = scalar_select %p35, 0, %s34
    %s37 = ssub.s32 %s17, %s36
    %s38 = ssub.s32 %s18, %s32
    %s39 = sor.u32 %s37, %s38
    %p40 = scmp.eq.s32.totalorder %s39, 0
    %s42 = sadd.s32 %s41, 1
    %s43 = scalar_select %p40, %s41, %s42
    %p46 = pneg %p40
    %p47 = scmp.eq.s32.totalorder %s10, 1
    %p48 = por %p46, %p47
    %p49 = scmp.ne.s32.totalorder %s41, %s44
    %p50 = scmp.eq.s32.totalorder %s10, 0
    %p51 = por %p49, %p50
    %p52 = scmp.ne.s32.totalorder %s41, %s44
    %p53 = scmp.eq.s32.totalorder %s15, 1
    %p54 = por %p52, %p53
    %p55 = scmp.ne.s32.totalorder %s44, %s45
    %p56 = scmp.eq.s32.totalorder %s15, 0
    %p57 = por %p55, %p56
    %p58 = scmp.ne.s32.totalorder %s44, %s45
    %p59 = scmp.eq.s32.totalorder %s16, 1
    %p60 = por %p58, %p59
    %p62 = scmp.ne.s32.totalorder %s45, %s61
    %p63 = scmp.eq.s32.totalorder %s16, 0
    %p64 = por %p62, %p63
    %s65 = ssub.s32 %s19, %s28
    %p66 = scmp.eq.s32.totalorder %s65, 0
    %s68 = sadd.s32 %s67, 1
    %s69 = scalar_select %p66, %s67, %s68
    %p72 = pneg %p66
    %p73 = scmp.eq.s32.totalorder %s10, 1
    %p74 = por %p72, %p73
    %p75 = scmp.ne.s32.totalorder %s67, %s70
    %p76 = scmp.eq.s32.totalorder %s10, 0
    %p77 = por %p75, %p76
    %p78 = scmp.ne.s32.totalorder %s67, %s70
    %p79 = scmp.eq.s32.totalorder %s15, 1
    %p80 = por %p78, %p79
    %p81 = scmp.ne.s32.totalorder %s70, %s71
    %p82 = scmp.eq.s32.totalorder %s15, 0
    %p83 = por %p81, %p82
    %p84 = scmp.ne.s32.totalorder %s70, %s71
    %p85 = scmp.eq.s32.totalorder %s16, 1
    %p86 = por %p84, %p85
    %p88 = scmp.ne.s32.totalorder %s71, %s87
    %p89 = scmp.eq.s32.totalorder %s16, 0
    %p90 = por %p88, %p89
    %s91 = ssub.s32 %s19, %s28
    %p92 = scmp.eq.s32.totalorder %s91, 0
    %s94 = sadd.s32 %s93, 1
    %s95 = scalar_select %p92, %s93, %s94
    %p98 = pneg %p92
    %p99 = scmp.eq.s32.totalorder %s10, 1
    %p100 = por %p98, %p99
    %p101 = scmp.ne.s32.totalorder %s93, %s96
    %p102 = scmp.eq.s32.totalorder %s10, 0
    %p103 = por %p101, %p102
    %p104 = scmp.ne.s32.totalorder %s93, %s96
    %p105 = scmp.eq.s32.totalorder %s15, 1
    %p106 = por %p104, %p105
    %p107 = scmp.ne.s32.totalorder %s96, %s97
    %p108 = scmp.eq.s32.totalorder %s15, 0
    %p109 = por %p107, %p108
    %p110 = scmp.ne.s32.totalorder %s96, %s97
    %p111 = scmp.eq.s32.totalorder %s16, 1
    %p112 = por %p110, %p111
    %p114 = scmp.ne.s32.totalorder %s97, %s113
    %p115 = scmp.eq.s32.totalorder %s16, 0
    %p116 = por %p114, %p115
    %s117 = ssub.s32 %s19, %s28
    %p118 = scmp.eq.s32.totalorder %s117, 0
    %s120 = sadd.s32 %s119, 1
    %s121 = scalar_select %p118, %s119, %s120
    %p124 = pneg %p118
    %p125 = scmp.eq.s32.totalorder %s10, 1
    %p126 = por %p124, %p125
    %p127 = scmp.ne.s32.totalorder %s119, %s122
    %p128 = scmp.eq.s32.totalorder %s10, 0
    %p129 = por %p127, %p128
    %p130 = scmp.ne.s32.totalorder %s119, %s122
    %p131 = scmp.eq.s32.totalorder %s15, 1
    %p132 = por %p130, %p131
    %p133 = scmp.ne.s32.totalorder %s122, %s123
    %p134 = scmp.eq.s32.totalorder %s15, 0
    %p135 = por %p133, %p134
    %p136 = scmp.ne.s32.totalorder %s122, %s123
    %p137 = scmp.eq.s32.totalorder %s16, 1
    %p138 = por %p136, %p137
    %p140 = scmp.ne.s32.totalorder %s123, %s139
    %p141 = scmp.eq.s32.totalorder %s16, 0
    %p142 = por %p140, %p141
    %s143 = ssub.s32 %s17, %s36
    %s144 = ssub.s32 %s18, %s32
    %s145 = sor.u32 %s143, %s144
    %s146 = ssub.s32 %s19, %s28
    %s147 = sor.u32 %s145, %s146
    %p148 = scmp.eq.s32.totalorder %s147, 0
    %s150 = sadd.s32 %s149, 1
    %s151 = scalar_select %p148, %s149, %s150
    %p154 = pneg %p148
    %p155 = scmp.eq.s32.totalorder %s10, 1
    %p156 = por %p154, %p155
    %p157 = scmp.ne.s32.totalorder %s149, %s152
    %p158 = scmp.eq.s32.totalorder %s10, 0
    %p159 = por %p157, %p158
    %p160 = scmp.ne.s32.totalorder %s149, %s152
    %p161 = scmp.eq.s32.totalorder %s15, 1
    %p162 = por %p160, %p161
    %p163 = scmp.ne.s32.totalorder %s152, %s153
    %p164 = scmp.eq.s32.totalorder %s15, 0
    %p165 = por %p163, %p164
    %p166 = scmp.ne.s32.totalorder %s152, %s153
    %p167 = scmp.eq.s32.totalorder %s16, 1
    %p168 = por %p166, %p167
    %p170 = scmp.ne.s32.totalorder %s153, %s169
    %p171 = scmp.eq.s32.totalorder %s16, 0
    %p172 = por %p170, %p171
    %p173 = scmp.le.s32.totalorder 1, %s10
    %p174 = scmp.lt.s32.totalorder %s10, 3
    %p175 = pnand %p173, %p174
    %p176 = pneg %p175
    // Predicated region
    $region9: #{aspp_forward.5} parent=5 // pred_check
      _
    $region10: #{aspp_forward.5} parent=5 // pred_check_branch
      %178 = sbr.rel (%p175) target = $region12
    $region11: #{aspp_forward.5} parent=5 // pred_region
      %s179 = ssub.s32 %s10, 1
      // Predicated region
      $region13: #{aspp_forward.5} parent=11 // pred_check
        %p180 = pneg %p83
      $region14: #{aspp_forward.5} parent=11 // pred_check_branch
        %182 = sbr.rel (%p180) target = $region16
      $region15: #{aspp_forward.5} parent=11 // pred_region
        %s183 = smul.u32 2, %s22
        %p184 = scmp.lt.s32.totalorder %s183, 1
        %s185 = scalar_select %p184, %s183, 1
        %s186 = smul.addr %s185, 4
        %s187 = scalar_lea.vmem %s1, %s186
        %s188 = smul.u32 2, %s22
      $region16: #{aspp_forward.5} parent=11 // pred_fallthru
        _
      // Predicated region
      $region17: #{aspp_forward.5} parent=11 // pred_check
        %p189 = pneg %p109
      $region18: #{aspp_forward.5} parent=11 // pred_check_branch
        %191 = sbr.rel (%p189) target = $region20
      $region19: #{aspp_forward.5} parent=11 // pred_region
        %s192 = smul.u32 2, %s22
        %p193 = scmp.lt.s32.totalorder %s192, 1
        %s194 = scalar_select %p193, %s192, 1
        %s195 = scalar_lea.vmem %s2, %s194
        %s196 = smul.u32 2, %s22
      $region20: #{aspp_forward.5} parent=11 // pred_fallthru
        _
      // Predicated region
      $region21: #{aspp_forward.5} parent=11 // pred_check
        %p197 = pneg %p135
      $region22: #{aspp_forward.5} parent=11 // pred_check_branch
        %199 = sbr.rel (%p197) target = $region24
      $region23: #{aspp_forward.5} parent=11 // pred_region
        %s200 = smul.u32 2, %s22
        %p201 = scmp.lt.s32.totalorder %s200, 1
        %s202 = scalar_select %p201, %s200, 1
        %s203 = scalar_lea.vmem %s3, %s202
        %s204 = smul.u32 2, %s22
      $region24: #{aspp_forward.5} parent=11 // pred_fallthru
        _
    $region12: #{aspp_forward.5} parent=5 // pred_fallthru
      _
    %p205 = scmp.lt.s32.totalorder %s10, 2
    // Predicated region
    $region25: #{aspp_forward.5} parent=5 // pred_check
      %p206 = pneg %p205
    $region26: #{aspp_forward.5} parent=5 // pred_check_branch
      %208 = sbr.rel (%p206) target = $region28
    $region27: #{aspp_forward.5} parent=5 // pred_region
      // Predicated region
      $region29: #{aspp_forward.5} parent=27 // pred_check
        %p209 = pneg %p51
      $region30: #{aspp_forward.5} parent=27 // pred_check_branch
        %211 = sbr.rel (%p209) target = $region32
      $region31: #{aspp_forward.5} parent=27 // pred_region
        %s212 = smul.u32 32, %s18
        %p213 = scmp.lt.s32.totalorder %s17, 1
        %s214 = scalar_select %p213, %s17, 1
        %p215 = scmp.lt.s32.totalorder %s212, 31
        %s216 = scalar_select %p215, %s212, 31
        %s217 = smul.addr %s214, 32
        %s218 = sadd.s32 %s216, %s217
        %s219 = smul.addr %s218, 4
        %s220 = scalar_lea.vmem %s0, %s219
        %s221 = smul.u32 32, %s18
      $region32: #{aspp_forward.5} parent=27 // pred_fallthru
        _
    $region28: #{aspp_forward.5} parent=5 // pred_fallthru
      _
    %p222 = scmp.le.s32.totalorder 1, %s10
    %p223 = scmp.lt.s32.totalorder %s10, 3
    %p224 = pnand %p222, %p223
    %p225 = pneg %p224
    // Predicated region
    $region33: #{aspp_forward.5} parent=5 // pred_check
      _
    $region34: #{aspp_forward.5} parent=5 // pred_check_branch
      %227 = sbr.rel (%p224) target = $region36
    $region35: #{aspp_forward.5} parent=5 // pred_region
      %s228 = ssub.s32 %s10, 1
      %s229 = smul.u32 32, %s21
      %p230 = scmp.lt.s32.totalorder %s20, 1
      %s231 = scalar_select %p230, %s20, 1
      %p232 = scmp.lt.s32.totalorder %s229, 31
      %s233 = scalar_select %p232, %s229, 31
      %s234 = smul.addr %s231, 32
      %s235 = sadd.s32 %s233, %s234
      %s236 = smul.addr %s235, 4
      %s237 = scalar_lea.vmem %s0, %s236
      %p238 = pneg %p57
      %p239 = pneg %p54
      %s240 = smul.u32 2, %s22
      %p241 = scmp.lt.s32.totalorder %s240, 1
      %s242 = scalar_select %p241, %s240, 1
      %s243 = smul.addr %s242, 4
      %s244 = scalar_lea.vmem %s1, %s243
      %p245 = pneg %p83
      %p246 = pneg %p80
      %s247 = smul.u32 2, %s22
      %p248 = scmp.lt.s32.totalorder %s247, 1
      %s249 = scalar_select %p248, %s247, 1
      %s250 = scalar_lea.vmem %s2, %s249
      %p251 = pneg %p109
      %p252 = pneg %p106
      %s253 = smul.u32 2, %s22
      %p254 = scmp.lt.s32.totalorder %s253, 1
      %s255 = scalar_select %p254, %s253, 1
      %s256 = scalar_lea.vmem %s3, %s255
      %p257 = pneg %p135
      %p258 = pneg %p132
      %p259 = pneg %p165
      %p260 = pneg %p162
      %s261 = smul.u32 32, %s21
      %s262 = smul.u32 2, %s22
      %p263 = scmp.lt.s32.totalorder %s20, 1
      %s264 = scalar_select %p263, %s20, 1
      %p265 = scmp.lt.s32.totalorder %s261, 31
      %s266 = scalar_select %p265, %s261, 31
      %p267 = scmp.lt.s32.totalorder %s262, 1
      %s268 = scalar_select %p267, %s262, 1
      %s269 = smul.addr %s266, 2
      %s270 = sadd.s32 %s268, %s269
      %s271 = smul.addr %s264, 64
      %s272 = sadd.s32 %s270, %s271
      %s273 = smul.addr %s272, 4
      %s274 = scalar_lea.vmem %s4, %s273
      %s275 = smul.u32 32, %s21
      %p276 = scmp.lt.s32.totalorder %s20, 1
      %s277 = scalar_select %p276, %s20, 1
      %p278 = scmp.lt.s32.totalorder %s275, 31
      %s279 = scalar_select %p278, %s275, 31
      %s280 = smul.addr %s277, 32
      %s281 = sadd.s32 %s279, %s280
      %s282 = smul.addr %s281, 4
      %s283 = scalar_lea.vmem %s0, %s282
      %s284 = smul.u32 32, %s21
      %s285 = smul.u32 2, %s22
      %p286 = scmp.lt.s32.totalorder %s285, 1
      %s287 = scalar_select %p286, %s285, 1
      %s288 = smul.addr %s287, 4
      %s289 = scalar_lea.vmem %s1, %s288
      %s290 = smul.u32 2, %s22
      %s291 = smul.u32 2, %s22
      %p292 = scmp.lt.s32.totalorder %s291, 1
      %s293 = scalar_select %p292, %s291, 1
      %s294 = scalar_lea.vmem %s2, %s293
      %s295 = smul.u32 2, %s22
      %s296 = smul.u32 2, %s22
      %p297 = scmp.lt.s32.totalorder %s296, 1
      %s298 = scalar_select %p297, %s296, 1
      %s299 = scalar_lea.vmem %s3, %s298
      %s300 = smul.u32 2, %s22
      %s301 = smul.u32 32, %s21
      %s302 = smul.u32 2, %s22
      %p303 = scmp.lt.s32.totalorder %s20, 1
      %s304 = scalar_select %p303, %s20, 1
      %p305 = scmp.lt.s32.totalorder %s301, 31
      %s306 = scalar_select %p305, %s301, 31
      %p307 = scmp.lt.s32.totalorder %s302, 1
      %s308 = scalar_select %p307, %s302, 1
      %s309 = smul.addr %s306, 2
      %s310 = sadd.s32 %s308, %s309
      %s311 = smul.addr %s304, 64
      %s312 = sadd.s32 %s310, %s311
      %s313 = smul.addr %s312, 4
      %s314 = scalar_lea.vmem %s4, %s313
      %s315 = smul.u32 32, %s21
      %s316 = smul.u32 2, %s22
      %v317 = vld [vmem:[%s283] sm:$0xf]
      %v318 = vld [vmem:[%s283 + $0x4] sm:$0xf]
      %v319 = vld [vmem:[%s283 + $0x8] sm:$0xf]
      %v320 = vld [vmem:[%s283 + $0xc] sm:$0xf]
      %v321 = vld [vmem:[%s283 + $0x10] sm:$0xf]
      %v322 = vld [vmem:[%s283 + $0x14] sm:$0xf]
      %v323 = vld [vmem:[%s283 + $0x18] sm:$0xf]
      %v324 = vld [vmem:[%s283 + $0x1c] sm:$0xf]
      %v325 = vld [vmem:[%s283 + $0x20] sm:$0xf]
      %v326 = vld [vmem:[%s283 + $0x24] sm:$0xf]
      %v327 = vld [vmem:[%s283 + $0x28] sm:$0xf]
      %v328 = vld [vmem:[%s283 + $0x2c] sm:$0xf]
      %v329 = vld [vmem:[%s283 + $0x30] sm:$0xf]
      %v330 = vld [vmem:[%s283 + $0x34] sm:$0xf]
      %v331 = vld [vmem:[%s283 + $0x38] sm:$0xf]
      %v332 = vld [vmem:[%s283 + $0x3c] sm:$0xf]
      %v333 = vld [vmem:[%s283 + $0x40] sm:$0xf]
      %v334 = vld [vmem:[%s283 + $0x44] sm:$0xf]
      %v335 = vld [vmem:[%s283 + $0x48] sm:$0xf]
      %v336 = vld [vmem:[%s283 + $0x4c] sm:$0xf]
      %v337 = vld [vmem:[%s283 + $0x50] sm:$0xf]
      %v338 = vld [vmem:[%s283 + $0x54] sm:$0xf]
      %v339 = vld [vmem:[%s283 + $0x58] sm:$0xf]
      %v340 = vld [vmem:[%s283 + $0x5c] sm:$0xf]
      %v341 = vld [vmem:[%s283 + $0x60] sm:$0xf]
      %v342 = vld [vmem:[%s283 + $0x64] sm:$0xf]
      %v343 = vld [vmem:[%s283 + $0x68] sm:$0xf]
      %v344 = vld [vmem:[%s283 + $0x6c] sm:$0xf]
      %v345 = vld [vmem:[%s283 + $0x70] sm:$0xf]
      %v346 = vld [vmem:[%s283 + $0x74] sm:$0xf]
      %v347 = vld [vmem:[%s283 + $0x78] sm:$0xf]
      %v348 = vld [vmem:[%s283 + $0x7c] sm:$0xf]
      %v349 = vld [vmem:[%s289] sm:$0xff]
      %v350 = vld [vmem:[%s289 + $0x8] sm:$0xff]
      %v351 = vld [vmem:[%s289 + $0x10] sm:$0xff]
      %v352 = vld [vmem:[%s289 + $0x18] sm:$0xff]
      %v353 = vld [vmem:[%s289 + $0x20] sm:$0xff]
      %v354 = vld [vmem:[%s289 + $0x28] sm:$0xff]
      %v355 = vld [vmem:[%s289 + $0x30] sm:$0xff]
      %v356 = vld [vmem:[%s289 + $0x38] sm:$0xff]
      %v357 = vld [vmem:[%s289 + $0x40] sm:$0xff]
      %v358 = vld [vmem:[%s289 + $0x48] sm:$0xff]
      %v359 = vld [vmem:[%s289 + $0x50] sm:$0xff]
      %v360 = vld [vmem:[%s289 + $0x58] sm:$0xff]
      %v361 = vld [vmem:[%s289 + $0x60] sm:$0xff]
      %v362 = vld [vmem:[%s289 + $0x68] sm:$0xff]
      %v363 = vld [vmem:[%s289 + $0x70] sm:$0xff]
      %v364 = vld [vmem:[%s289 + $0x78] sm:$0xff]
      %v397 = vunpack.c.l.b16 %v317
      %v398 = vunpack.c.l.b16 %v318
      %v399 = vunpack.c.l.b16 %v319
      %v400 = vunpack.c.l.b16 %v320
      %v401 = vunpack.c.l.b16 %v321
      %v402 = vunpack.c.l.b16 %v322
      %v403 = vunpack.c.l.b16 %v323
      %v404 = vunpack.c.l.b16 %v324
      %v405 = vunpack.c.l.b16 %v325
      %v406 = vunpack.c.l.b16 %v326
      %v407 = vunpack.c.l.b16 %v327
      %v408 = vunpack.c.l.b16 %v328
      %v409 = vunpack.c.l.b16 %v329
      %v410 = vunpack.c.l.b16 %v330
      %v411 = vunpack.c.l.b16 %v331
      %v412 = vunpack.c.l.b16 %v332
      %v413 = vunpack.c.l.b16 %v333
      %v414 = vunpack.c.l.b16 %v334
      %v415 = vunpack.c.l.b16 %v335
      %v416 = vunpack.c.l.b16 %v336
      %v417 = vunpack.c.l.b16 %v337
      %v418 = vunpack.c.l.b16 %v338
      %v419 = vunpack.c.l.b16 %v339
      %v420 = vunpack.c.l.b16 %v340
      %v421 = vunpack.c.l.b16 %v341
      %v422 = vunpack.c.l.b16 %v342
      %v423 = vunpack.c.l.b16 %v343
      %v424 = vunpack.c.l.b16 %v344
      %v425 = vunpack.c.l.b16 %v345
      %v426 = vunpack.c.l.b16 %v346
      %v427 = vunpack.c.l.b16 %v347
      %v428 = vunpack.c.l.b16 %v348
      %v429 = vpack.c.b16 %v398, %v397
      %v430 = vpack.c.b16 %v400, %v399
      %v431 = vpack.c.b16 %v402, %v401
      %v432 = vpack.c.b16 %v404, %v403
      %v433 = vpack.c.b16 %v406, %v405
      %v434 = vpack.c.b16 %v408, %v407
      %v435 = vpack.c.b16 %v410, %v409
      %v436 = vpack.c.b16 %v412, %v411
      %v437 = vpack.c.b16 %v414, %v413
      %v438 = vpack.c.b16 %v416, %v415
      %v439 = vpack.c.b16 %v418, %v417
      %v440 = vpack.c.b16 %v420, %v419
      %v441 = vpack.c.b16 %v422, %v421
      %v442 = vpack.c.b16 %v424, %v423
      %v443 = vpack.c.b16 %v426, %v425
      %v444 = vpack.c.b16 %v428, %v427
      %v477 = vunpack.c.l.b16 %v349
      %v478 = vunpack.c.h.b16 %v349
      %v479 = vunpack.c.l.b16 %v350
      %v480 = vunpack.c.h.b16 %v350
      %v481 = vunpack.c.l.b16 %v351
      %v482 = vunpack.c.h.b16 %v351
      %v483 = vunpack.c.l.b16 %v352
      %v484 = vunpack.c.h.b16 %v352
      %v485 = vunpack.c.l.b16 %v353
      %v486 = vunpack.c.h.b16 %v353
      %v487 = vunpack.c.l.b16 %v354
      %v488 = vunpack.c.h.b16 %v354
      %v489 = vunpack.c.l.b16 %v355
      %v490 = vunpack.c.h.b16 %v355
      %v491 = vunpack.c.l.b16 %v356
      %v492 = vunpack.c.h.b16 %v356
      %v493 = vunpack.c.l.b16 %v357
      %v494 = vunpack.c.h.b16 %v357
      %v495 = vunpack.c.l.b16 %v358
      %v496 = vunpack.c.h.b16 %v358
      %v497 = vunpack.c.l.b16 %v359
      %v498 = vunpack.c.h.b16 %v359
      %v499 = vunpack.c.l.b16 %v360
      %v500 = vunpack.c.h.b16 %v360
      %v501 = vunpack.c.l.b16 %v361
      %v502 = vunpack.c.h.b16 %v361
      %v503 = vunpack.c.l.b16 %v362
      %v504 = vunpack.c.h.b16 %v362
      %v505 = vunpack.c.l.b16 %v363
      %v506 = vunpack.c.h.b16 %v363
      %v507 = vunpack.c.l.b16 %v364
      %v508 = vunpack.c.h.b16 %v364
      %v509 = vpack.c.b16 %v479, %v477
      %v510 = vpack.c.b16 %v480, %v478
      %v511 = vpack.c.b16 %v483, %v481
      %v512 = vpack.c.b16 %v484, %v482
      %v513 = vpack.c.b16 %v487, %v485
      %v514 = vpack.c.b16 %v488, %v486
      %v515 = vpack.c.b16 %v491, %v489
      %v516 = vpack.c.b16 %v492, %v490
      %v517 = vpack.c.b16 %v495, %v493
      %v518 = vpack.c.b16 %v496, %v494
      %v519 = vpack.c.b16 %v499, %v497
      %v520 = vpack.c.b16 %v500, %v498
      %v521 = vpack.c.b16 %v503, %v501
      %v522 = vpack.c.b16 %v504, %v502
      %v523 = vpack.c.b16 %v507, %v505
      %v524 = vpack.c.b16 %v508, %v506
      %541 = vmatpush.bf16.msra.mxu0 %v523
      %542 = vmatpush.bf16.msra.mxu0 %v521
      %543 = vmatpush.bf16.msra.mxu0 %v519
      %544 = vmatpush.bf16.msra.mxu0 %v517
      %545 = vmatpush.bf16.msra.mxu0 %v515
      %546 = vmatpush.bf16.msra.mxu0 %v513
      %547 = vmatpush.bf16.msra.mxu0 %v511
      %548 = vmatpush.bf16.msra.mxu0 %v509
      %549 = vmatmul.bf16.gmra.mxu0 %v429
      %v550 = vpop.f32.mrf.mxu0
      %v551 = vadd.f32 0.0, %v550
      %v552 = vpop.f32.mrf.mxu0
      %v553 = vadd.f32 0.0, %v552
      %554 = vmatmul.bf16.gmra.mxu0 %v430
      %v555 = vpop.f32.mrf.mxu0
      %v556 = vadd.f32 0.0, %v555
      %v557 = vpop.f32.mrf.mxu0
      %v558 = vadd.f32 0.0, %v557
      %559 = vmatmul.bf16.gmra.mxu0 %v431
      %v560 = vpop.f32.mrf.mxu0
      %v561 = vadd.f32 0.0, %v560
      %v562 = vpop.f32.mrf.mxu0
      %v563 = vadd.f32 0.0, %v562
      %564 = vmatmul.bf16.gmra.mxu0 %v432
      %v565 = vpop.f32.mrf.mxu0
      %v566 = vadd.f32 0.0, %v565
      %v567 = vpop.f32.mrf.mxu0
      %v568 = vadd.f32 0.0, %v567
      %569 = vmatmul.bf16.gmra.mxu0 %v433
      %v570 = vpop.f32.mrf.mxu0
      %v571 = vadd.f32 0.0, %v570
      %v572 = vpop.f32.mrf.mxu0
      %v573 = vadd.f32 0.0, %v572
      %574 = vmatmul.bf16.gmra.mxu0 %v434
      %v575 = vpop.f32.mrf.mxu0
      %v576 = vadd.f32 0.0, %v575
      %v577 = vpop.f32.mrf.mxu0
      %v578 = vadd.f32 0.0, %v577
      %579 = vmatmul.bf16.gmra.mxu0 %v435
      %v580 = vpop.f32.mrf.mxu0
      %v581 = vadd.f32 0.0, %v580
      %v582 = vpop.f32.mrf.mxu0
      %v583 = vadd.f32 0.0, %v582
      %584 = vmatmul.bf16.gmra.mxu0 %v436
      %v585 = vpop.f32.mrf.mxu0
      %v586 = vadd.f32 0.0, %v585
      %v587 = vpop.f32.mrf.mxu0
      %v588 = vadd.f32 0.0, %v587
      %589 = vmatmul.bf16.gmra.mxu0 %v437
      %v590 = vpop.f32.mrf.mxu0
      %v591 = vadd.f32 0.0, %v590
      %v592 = vpop.f32.mrf.mxu0
      %v593 = vadd.f32 0.0, %v592
      %594 = vmatmul.bf16.gmra.mxu0 %v438
      %v595 = vpop.f32.mrf.mxu0
      %v596 = vadd.f32 0.0, %v595
      %v597 = vpop.f32.mrf.mxu0
      %v598 = vadd.f32 0.0, %v597
      %599 = vmatmul.bf16.gmra.mxu0 %v439
      %v600 = vpop.f32.mrf.mxu0
      %v601 = vadd.f32 0.0, %v600
      %v602 = vpop.f32.mrf.mxu0
      %v603 = vadd.f32 0.0, %v602
      %604 = vmatmul.bf16.gmra.mxu0 %v440
      %v605 = vpop.f32.mrf.mxu0
      %v606 = vadd.f32 0.0, %v605
      %v607 = vpop.f32.mrf.mxu0
      %v608 = vadd.f32 0.0, %v607
      %609 = vmatmul.bf16.gmra.mxu0 %v441
      %v610 = vpop.f32.mrf.mxu0
      %v611 = vadd.f32 0.0, %v610
      %v612 = vpop.f32.mrf.mxu0
      %v613 = vadd.f32 0.0, %v612
      %614 = vmatmul.bf16.gmra.mxu0 %v442
      %v615 = vpop.f32.mrf.mxu0
      %v616 = vadd.f32 0.0, %v615
      %v617 = vpop.f32.mrf.mxu0
      %v618 = vadd.f32 0.0, %v617
      %619 = vmatmul.bf16.gmra.mxu0 %v443
      %v620 = vpop.f32.mrf.mxu0
      %v621 = vadd.f32 0.0, %v620
      %v622 = vpop.f32.mrf.mxu0
      %v623 = vadd.f32 0.0, %v622
      %624 = vmatmul.bf16.gmra.mxu0 %v444
      %v625 = vpop.f32.mrf.mxu0
      %v626 = vadd.f32 0.0, %v625
      %v627 = vpop.f32.mrf.mxu0
      %v628 = vadd.f32 0.0, %v627
      %629 = vdwg.mxu0
      %630 = vmatpush.bf16.msra.mxu0 %v524
      %631 = vmatpush.bf16.msra.mxu0 %v522
      %632 = vmatpush.bf16.msra.mxu0 %v520
      %633 = vmatpush.bf16.msra.mxu0 %v518
      %634 = vmatpush.bf16.msra.mxu0 %v516
      %635 = vmatpush.bf16.msra.mxu0 %v514
      %636 = vmatpush.bf16.msra.mxu0 %v512
      %637 = vmatpush.bf16.msra.mxu0 %v510
      %638 = vmatmul.bf16.gmra.mxu0 %v429
      %v639 = vpop.f32.mrf.mxu0
      %v640 = vadd.f32 0.0, %v639
      %v641 = vpop.f32.mrf.mxu0
      %v642 = vadd.f32 0.0, %v641
      %643 = vmatmul.bf16.gmra.mxu0 %v430
      %v644 = vpop.f32.mrf.mxu0
      %v645 = vadd.f32 0.0, %v644
      %v646 = vpop.f32.mrf.mxu0
      %v647 = vadd.f32 0.0, %v646
      %648 = vmatmul.bf16.gmra.mxu0 %v431
      %v649 = vpop.f32.mrf.mxu0
      %v650 = vadd.f32 0.0, %v649
      %v651 = vpop.f32.mrf.mxu0
      %v652 = vadd.f32 0.0, %v651
      %653 = vmatmul.bf16.gmra.mxu0 %v432
      %v654 = vpop.f32.mrf.mxu0
      %v655 = vadd.f32 0.0, %v654
      %v656 = vpop.f32.mrf.mxu0
      %v657 = vadd.f32 0.0, %v656
      %658 = vmatmul.bf16.gmra.mxu0 %v433
      %v659 = vpop.f32.mrf.mxu0
      %v660 = vadd.f32 0.0, %v659
      %v661 = vpop.f32.mrf.mxu0
      %v662 = vadd.f32 0.0, %v661
      %663 = vmatmul.bf16.gmra.mxu0 %v434
      %v664 = vpop.f32.mrf.mxu0
      %v665 = vadd.f32 0.0, %v664
      %v666 = vpop.f32.mrf.mxu0
      %v667 = vadd.f32 0.0, %v666
      %668 = vmatmul.bf16.gmra.mxu0 %v435
      %v669 = vpop.f32.mrf.mxu0
      %v670 = vadd.f32 0.0, %v669
      %v671 = vpop.f32.mrf.mxu0
      %v672 = vadd.f32 0.0, %v671
      %673 = vmatmul.bf16.gmra.mxu0 %v436
      %v674 = vpop.f32.mrf.mxu0
      %v675 = vadd.f32 0.0, %v674
      %v676 = vpop.f32.mrf.mxu0
      %v677 = vadd.f32 0.0, %v676
      %678 = vmatmul.bf16.gmra.mxu0 %v437
      %v679 = vpop.f32.mrf.mxu0
      %v680 = vadd.f32 0.0, %v679
      %v681 = vpop.f32.mrf.mxu0
      %v682 = vadd.f32 0.0, %v681
      %683 = vmatmul.bf16.gmra.mxu0 %v438
      %v684 = vpop.f32.mrf.mxu0
      %v685 = vadd.f32 0.0, %v684
      %v686 = vpop.f32.mrf.mxu0
      %v687 = vadd.f32 0.0, %v686
      %688 = vmatmul.bf16.gmra.mxu0 %v439
      %v689 = vpop.f32.mrf.mxu0
      %v690 = vadd.f32 0.0, %v689
      %v691 = vpop.f32.mrf.mxu0
      %v692 = vadd.f32 0.0, %v691
      %693 = vmatmul.bf16.gmra.mxu0 %v440
      %v694 = vpop.f32.mrf.mxu0
      %v695 = vadd.f32 0.0, %v694
      %v696 = vpop.f32.mrf.mxu0
      %v697 = vadd.f32 0.0, %v696
      %698 = vmatmul.bf16.gmra.mxu0 %v441
      %v699 = vpop.f32.mrf.mxu0
      %v700 = vadd.f32 0.0, %v699
      %v701 = vpop.f32.mrf.mxu0
      %v702 = vadd.f32 0.0, %v701
      %703 = vmatmul.bf16.gmra.mxu0 %v442
      %v704 = vpop.f32.mrf.mxu0
      %v705 = vadd.f32 0.0, %v704
      %v706 = vpop.f32.mrf.mxu0
      %v707 = vadd.f32 0.0, %v706
      %708 = vmatmul.bf16.gmra.mxu0 %v443
      %v709 = vpop.f32.mrf.mxu0
      %v710 = vadd.f32 0.0, %v709
      %v711 = vpop.f32.mrf.mxu0
      %v712 = vadd.f32 0.0, %v711
      %713 = vmatmul.bf16.gmra.mxu0 %v444
      %v714 = vpop.f32.mrf.mxu0
      %v715 = vadd.f32 0.0, %v714
      %v716 = vpop.f32.mrf.mxu0
      %v717 = vadd.f32 0.0, %v716
      %718 = vdwg.mxu0
      %v719 = vld [vmem:[%s294] sm:$0x3]
      %v721 = vperm.slane %v719, 0
      %v722 = vperm.slane %v719, 1
      %v725 = vmul.f32 %v551, %v721
      %v726 = vmul.f32 %v640, %v722
      %v727 = vmul.f32 %v553, %v721
      %v728 = vmul.f32 %v642, %v722
      %v729 = vmul.f32 %v556, %v721
      %v730 = vmul.f32 %v645, %v722
      %v731 = vmul.f32 %v558, %v721
      %v732 = vmul.f32 %v647, %v722
      %v733 = vmul.f32 %v561, %v721
      %v734 = vmul.f32 %v650, %v722
      %v735 = vmul.f32 %v563, %v721
      %v736 = vmul.f32 %v652, %v722
      %v737 = vmul.f32 %v566, %v721
      %v738 = vmul.f32 %v655, %v722
      %v739 = vmul.f32 %v568, %v721
      %v740 = vmul.f32 %v657, %v722
      %v741 = vmul.f32 %v571, %v721
      %v742 = vmul.f32 %v660, %v722
      %v743 = vmul.f32 %v573, %v721
      %v744 = vmul.f32 %v662, %v722
      %v745 = vmul.f32 %v576, %v721
      %v746 = vmul.f32 %v665, %v722
      %v747 = vmul.f32 %v578, %v721
      %v748 = vmul.f32 %v667, %v722
      %v749 = vmul.f32 %v581, %v721
      %v750 = vmul.f32 %v670, %v722
      %v751 = vmul.f32 %v583, %v721
      %v752 = vmul.f32 %v672, %v722
      %v753 = vmul.f32 %v586, %v721
      %v754 = vmul.f32 %v675, %v722
      %v755 = vmul.f32 %v588, %v721
      %v756 = vmul.f32 %v677, %v722
      %v757 = vmul.f32 %v591, %v721
      %v758 = vmul.f32 %v680, %v722
      %v759 = vmul.f32 %v593, %v721
      %v760 = vmul.f32 %v682, %v722
      %v761 = vmul.f32 %v596, %v721
      %v762 = vmul.f32 %v685, %v722
      %v763 = vmul.f32 %v598, %v721
      %v764 = vmul.f32 %v687, %v722
      %v765 = vmul.f32 %v601, %v721
      %v766 = vmul.f32 %v690, %v722
      %v767 = vmul.f32 %v603, %v721
      %v768 = vmul.f32 %v692, %v722
      %v769 = vmul.f32 %v606, %v721
      %v770 = vmul.f32 %v695, %v722
      %v771 = vmul.f32 %v608, %v721
      %v772 = vmul.f32 %v697, %v722
      %v773 = vmul.f32 %v611, %v721
      %v774 = vmul.f32 %v700, %v722
      %v775 = vmul.f32 %v613, %v721
      %v776 = vmul.f32 %v702, %v722
      %v777 = vmul.f32 %v616, %v721
      %v778 = vmul.f32 %v705, %v722
      %v779 = vmul.f32 %v618, %v721
      %v780 = vmul.f32 %v707, %v722
      %v781 = vmul.f32 %v621, %v721
      %v782 = vmul.f32 %v710, %v722
      %v783 = vmul.f32 %v623, %v721
      %v784 = vmul.f32 %v712, %v722
      %v785 = vmul.f32 %v626, %v721
      %v786 = vmul.f32 %v715, %v722
      %v787 = vmul.f32 %v628, %v721
      %v788 = vmul.f32 %v717, %v722
      %v789 = vld [vmem:[%s299] sm:$0x3]
      %v791 = vperm.slane %v789, 0
      %v792 = vperm.slane %v789, 1
      %v795 = vadd.f32 %v725, %v791
      %v796 = vadd.f32 %v726, %v792
      %v797 = vadd.f32 %v727, %v791
      %v798 = vadd.f32 %v728, %v792
      %v799 = vadd.f32 %v729, %v791
      %v800 = vadd.f32 %v730, %v792
      %v801 = vadd.f32 %v731, %v791
      %v802 = vadd.f32 %v732, %v792
      %v803 = vadd.f32 %v733, %v791
      %v804 = vadd.f32 %v734, %v792
      %v805 = vadd.f32 %v735, %v791
      %v806 = vadd.f32 %v736, %v792
      %v807 = vadd.f32 %v737, %v791
      %v808 = vadd.f32 %v738, %v792
      %v809 = vadd.f32 %v739, %v791
      %v810 = vadd.f32 %v740, %v792
      %v811 = vadd.f32 %v741, %v791
      %v812 = vadd.f32 %v742, %v792
      %v813 = vadd.f32 %v743, %v791
      %v814 = vadd.f32 %v744, %v792
      %v815 = vadd.f32 %v745, %v791
      %v816 = vadd.f32 %v746, %v792
      %v817 = vadd.f32 %v747, %v791
      %v818 = vadd.f32 %v748, %v792
      %v819 = vadd.f32 %v749, %v791
      %v820 = vadd.f32 %v750, %v792
      %v821 = vadd.f32 %v751, %v791
      %v822 = vadd.f32 %v752, %v792
      %v823 = vadd.f32 %v753, %v791
      %v824 = vadd.f32 %v754, %v792
      %v825 = vadd.f32 %v755, %v791
      %v826 = vadd.f32 %v756, %v792
      %v827 = vadd.f32 %v757, %v791
      %v828 = vadd.f32 %v758, %v792
      %v829 = vadd.f32 %v759, %v791
      %v830 = vadd.f32 %v760, %v792
      %v831 = vadd.f32 %v761, %v791
      %v832 = vadd.f32 %v762, %v792
      %v833 = vadd.f32 %v763, %v791
      %v834 = vadd.f32 %v764, %v792
      %v835 = vadd.f32 %v765, %v791
      %v836 = vadd.f32 %v766, %v792
      %v837 = vadd.f32 %v767, %v791
      %v838 = vadd.f32 %v768, %v792
      %v839 = vadd.f32 %v769, %v791
      %v840 = vadd.f32 %v770, %v792
      %v841 = vadd.f32 %v771, %v791
      %v842 = vadd.f32 %v772, %v792
      %v843 = vadd.f32 %v773, %v791
      %v844 = vadd.f32 %v774, %v792
      %v845 = vadd.f32 %v775, %v791
      %v846 = vadd.f32 %v776, %v792
      %v847 = vadd.f32 %v777, %v791
      %v848 = vadd.f32 %v778, %v792
      %v849 = vadd.f32 %v779, %v791
      %v850 = vadd.f32 %v780, %v792
      %v851 = vadd.f32 %v781, %v791
      %v852 = vadd.f32 %v782, %v792
      %v853 = vadd.f32 %v783, %v791
      %v854 = vadd.f32 %v784, %v792
      %v855 = vadd.f32 %v785, %v791
      %v856 = vadd.f32 %v786, %v792
      %v857 = vadd.f32 %v787, %v791
      %v858 = vadd.f32 %v788, %v792
      %v859 = vmax.f32 %v795, 0.0
      %v860 = vmax.f32 %v796, 0.0
      %v861 = vmax.f32 %v797, 0.0
      %v862 = vmax.f32 %v798, 0.0
      %v863 = vmax.f32 %v799, 0.0
      %v864 = vmax.f32 %v800, 0.0
      %v865 = vmax.f32 %v801, 0.0
      %v866 = vmax.f32 %v802, 0.0
      %v867 = vmax.f32 %v803, 0.0
      %v868 = vmax.f32 %v804, 0.0
      %v869 = vmax.f32 %v805, 0.0
      %v870 = vmax.f32 %v806, 0.0
      %v871 = vmax.f32 %v807, 0.0
      %v872 = vmax.f32 %v808, 0.0
      %v873 = vmax.f32 %v809, 0.0
      %v874 = vmax.f32 %v810, 0.0
      %v875 = vmax.f32 %v811, 0.0
      %v876 = vmax.f32 %v812, 0.0
      %v877 = vmax.f32 %v813, 0.0
      %v878 = vmax.f32 %v814, 0.0
      %v879 = vmax.f32 %v815, 0.0
      %v880 = vmax.f32 %v816, 0.0
      %v881 = vmax.f32 %v817, 0.0
      %v882 = vmax.f32 %v818, 0.0
      %v883 = vmax.f32 %v819, 0.0
      %v884 = vmax.f32 %v820, 0.0
      %v885 = vmax.f32 %v821, 0.0
      %v886 = vmax.f32 %v822, 0.0
      %v887 = vmax.f32 %v823, 0.0
      %v888 = vmax.f32 %v824, 0.0
      %v889 = vmax.f32 %v825, 0.0
      %v890 = vmax.f32 %v826, 0.0
      %v891 = vmax.f32 %v827, 0.0
      %v892 = vmax.f32 %v828, 0.0
      %v893 = vmax.f32 %v829, 0.0
      %v894 = vmax.f32 %v830, 0.0
      %v895 = vmax.f32 %v831, 0.0
      %v896 = vmax.f32 %v832, 0.0
      %v897 = vmax.f32 %v833, 0.0
      %v898 = vmax.f32 %v834, 0.0
      %v899 = vmax.f32 %v835, 0.0
      %v900 = vmax.f32 %v836, 0.0
      %v901 = vmax.f32 %v837, 0.0
      %v902 = vmax.f32 %v838, 0.0
      %v903 = vmax.f32 %v839, 0.0
      %v904 = vmax.f32 %v840, 0.0
      %v905 = vmax.f32 %v841, 0.0
      %v906 = vmax.f32 %v842, 0.0
      %v907 = vmax.f32 %v843, 0.0
      %v908 = vmax.f32 %v844, 0.0
      %v909 = vmax.f32 %v845, 0.0
      %v910 = vmax.f32 %v846, 0.0
      %v911 = vmax.f32 %v847, 0.0
      %v912 = vmax.f32 %v848, 0.0
      %v913 = vmax.f32 %v849, 0.0
      %v914 = vmax.f32 %v850, 0.0
      %v915 = vmax.f32 %v851, 0.0
      %v916 = vmax.f32 %v852, 0.0
      %v917 = vmax.f32 %v853, 0.0
      %v918 = vmax.f32 %v854, 0.0
      %v919 = vmax.f32 %v855, 0.0
      %v920 = vmax.f32 %v856, 0.0
      %v921 = vmax.f32 %v857, 0.0
      %v922 = vmax.f32 %v858, 0.0
      %v923 = vpack.c.bf16 %v860, %v859
      %v924 = vpack.c.bf16 %v862, %v861
      %v925 = vpack.c.bf16 %v864, %v863
      %v926 = vpack.c.bf16 %v866, %v865
      %v927 = vpack.c.bf16 %v868, %v867
      %v928 = vpack.c.bf16 %v870, %v869
      %v929 = vpack.c.bf16 %v872, %v871
      %v930 = vpack.c.bf16 %v874, %v873
      %v931 = vpack.c.bf16 %v876, %v875
      %v932 = vpack.c.bf16 %v878, %v877
      %v933 = vpack.c.bf16 %v880, %v879
      %v934 = vpack.c.bf16 %v882, %v881
      %v935 = vpack.c.bf16 %v884, %v883
      %v936 = vpack.c.bf16 %v886, %v885
      %v937 = vpack.c.bf16 %v888, %v887
      %v938 = vpack.c.bf16 %v890, %v889
      %v939 = vpack.c.bf16 %v892, %v891
      %v940 = vpack.c.bf16 %v894, %v893
      %v941 = vpack.c.bf16 %v896, %v895
      %v942 = vpack.c.bf16 %v898, %v897
      %v943 = vpack.c.bf16 %v900, %v899
      %v944 = vpack.c.bf16 %v902, %v901
      %v945 = vpack.c.bf16 %v904, %v903
      %v946 = vpack.c.bf16 %v906, %v905
      %v947 = vpack.c.bf16 %v908, %v907
      %v948 = vpack.c.bf16 %v910, %v909
      %v949 = vpack.c.bf16 %v912, %v911
      %v950 = vpack.c.bf16 %v914, %v913
      %v951 = vpack.c.bf16 %v916, %v915
      %v952 = vpack.c.bf16 %v918, %v917
      %v953 = vpack.c.bf16 %v920, %v919
      %v954 = vpack.c.bf16 %v922, %v921
      %955 = vst [vmem:[%s314] sm:$0xff] %v923
      %956 = vst [vmem:[%s314 + $0x8] sm:$0xff] %v924
      %957 = vst [vmem:[%s314 + $0x10] sm:$0xff] %v925
      %958 = vst [vmem:[%s314 + $0x18] sm:$0xff] %v926
      %959 = vst [vmem:[%s314 + $0x20] sm:$0xff] %v927
      %960 = vst [vmem:[%s314 + $0x28] sm:$0xff] %v928
      %961 = vst [vmem:[%s314 + $0x30] sm:$0xff] %v929
      %962 = vst [vmem:[%s314 + $0x38] sm:$0xff] %v930
      %963 = vst [vmem:[%s314 + $0x40] sm:$0xff] %v931
      %964 = vst [vmem:[%s314 + $0x48] sm:$0xff] %v932
      %965 = vst [vmem:[%s314 + $0x50] sm:$0xff] %v933
      %966 = vst [vmem:[%s314 + $0x58] sm:$0xff] %v934
      %967 = vst [vmem:[%s314 + $0x60] sm:$0xff] %v935
      %968 = vst [vmem:[%s314 + $0x68] sm:$0xff] %v936
      %969 = vst [vmem:[%s314 + $0x70] sm:$0xff] %v937
      %970 = vst [vmem:[%s314 + $0x78] sm:$0xff] %v938
      %971 = vst [vmem:[%s314 + $0x80] sm:$0xff] %v939
      %972 = vst [vmem:[%s314 + $0x88] sm:$0xff] %v940
      %973 = vst [vmem:[%s314 + $0x90] sm:$0xff] %v941
      %974 = vst [vmem:[%s314 + $0x98] sm:$0xff] %v942
      %975 = vst [vmem:[%s314 + $0xa0] sm:$0xff] %v943
      %976 = vst [vmem:[%s314 + $0xa8] sm:$0xff] %v944
      %977 = vst [vmem:[%s314 + $0xb0] sm:$0xff] %v945
      %978 = vst [vmem:[%s314 + $0xb8] sm:$0xff] %v946
      %979 = vst [vmem:[%s314 + $0xc0] sm:$0xff] %v947
      %980 = vst [vmem:[%s314 + $0xc8] sm:$0xff] %v948
      %981 = vst [vmem:[%s314 + $0xd0] sm:$0xff] %v949
      %982 = vst [vmem:[%s314 + $0xd8] sm:$0xff] %v950
      %983 = vst [vmem:[%s314 + $0xe0] sm:$0xff] %v951
      %984 = vst [vmem:[%s314 + $0xe8] sm:$0xff] %v952
      %985 = vst [vmem:[%s314 + $0xf0] sm:$0xff] %v953
      %986 = vst [vmem:[%s314 + $0xf8] sm:$0xff] %v954
      %s987 = smul.u32 32, %s21
      %s988 = smul.u32 2, %s22
      %p989 = scmp.lt.s32.totalorder %s20, 1
      %s990 = scalar_select %p989, %s20, 1
      %p991 = scmp.lt.s32.totalorder %s987, 31
      %s992 = scalar_select %p991, %s987, 31
      %p993 = scmp.lt.s32.totalorder %s988, 1
      %s994 = scalar_select %p993, %s988, 1
      %s995 = smul.addr %s992, 2
      %s996 = sadd.s32 %s994, %s995
      %s997 = smul.addr %s990, 64
      %s998 = sadd.s32 %s996, %s997
      %s999 = smul.addr %s998, 4
      %s1000 = scalar_lea.vmem %s4, %s999
      // Predicated region
      $region37: #{aspp_forward.5} parent=35 // pred_check
        %p1001 = pneg %p162
      $region38: #{aspp_forward.5} parent=35 // pred_check_branch
        %1003 = sbr.rel (%p1001) target = $region40
      $region39: #{aspp_forward.5} parent=35 // pred_region
        %s1004 = smul.u32 32, %s21
        %s1005 = smul.u32 2, %s22
      $region40: #{aspp_forward.5} parent=35 // pred_fallthru
        _
    $region36: #{aspp_forward.5} parent=5 // pred_fallthru
      _
    %p1006 = scmp.le.s32.totalorder 2, %s10
    // Predicated region
    $region41: #{aspp_forward.5} parent=5 // pred_check
      %p1007 = pneg %p1006
    $region42: #{aspp_forward.5} parent=5 // pred_check_branch
      %1009 = sbr.rel (%p1007) target = $region44
    $region43: #{aspp_forward.5} parent=5 // pred_region
      %s1010 = ssub.s32 %s10, 2
      // Predicated region
      $region45: #{aspp_forward.5} parent=43 // pred_check
        %p1011 = pneg %p168
      $region46: #{aspp_forward.5} parent=43 // pred_check_branch
        %1013 = sbr.rel (%p1011) target = $region48
      $region47: #{aspp_forward.5} parent=43 // pred_region
        %s1014 = smul.u32 32, %s24
        %s1015 = smul.u32 2, %s25
        %p1016 = scmp.lt.s32.totalorder %s23, 1
        %s1017 = scalar_select %p1016, %s23, 1
        %p1018 = scmp.lt.s32.totalorder %s1014, 31
        %s1019 = scalar_select %p1018, %s1014, 31
        %p1020 = scmp.lt.s32.totalorder %s1015, 1
        %s1021 = scalar_select %p1020, %s1015, 1
        %s1022 = smul.addr %s1019, 2
        %s1023 = sadd.s32 %s1021, %s1022
        %s1024 = smul.addr %s1017, 64
        %s1025 = sadd.s32 %s1023, %s1024
        %s1026 = smul.addr %s1025, 4
        %s1027 = scalar_lea.vmem %s4, %s1026
      $region48: #{aspp_forward.5} parent=43 // pred_fallthru
        _
    $region44: #{aspp_forward.5} parent=5 // pred_fallthru
      _
  $region6: #{aspp_forward.5} parent=0 // loop_footer
    %s14 = sadd.s32 1, %s10
  $region7: #{aspp_forward.5} parent=0 // loop_footer_branch
    %9 = sbr.rel target = $region3
  $region8: #{aspp_forward.5} parent=0 // loop_exit
    _

// kernel: aspp_forward.6
$region0: #{aspp_forward.6}
  #allocation0 [shape = 'u32[]', space=smem, size = 0x4, offset = 0x4, fixed_abs, tag = 'smem constant byte address 0x4 - core index']
  #allocation1 [shape = 'u32[72,128]{1,0:T(1,128)}', space=vmem, size = 0x9000, scoped, tag = 'internal scratch']
  %s0 = inlined_call_operand.vmem [shape: bf16[2,256,256], index: 0, kind: input, shape index: {}]
  %s1 = inlined_call_operand.vmem [shape: bf16[256,256], index: 1, kind: input, shape index: {}]
  %s2 = inlined_call_operand.vmem [shape: f32[1,256], index: 2, kind: input, shape index: {}]
  %s3 = inlined_call_operand.vmem [shape: f32[1,256], index: 3, kind: input, shape index: {}]
  %s4 = inlined_call_operand.vmem [shape: bf16[2,256,256], index: 4, kind: output, shape index: {}]
  %s5 = sld [smem:[#allocation0]]
  $region49: #{aspp_forward.6} parent=0
    _
  %s7 = ssub.s32 1, %s5
  %s8 = scalar_select 0, %s7, %s5
  loop: start=0, step=1, limit=4
  $region2: #{aspp_forward.6} parent=0 // loop_pre_header
    _
  $region3: #{aspp_forward.6} parent=0 // loop_header
    %s10 = sphi 0, %s14
    %p11 = scmp.ge.s32.totalorder %s10, 4
    %s17 = sphi 0, %s36
    %s18 = sphi 0, %s32
    %s19 = sphi 0, %s28
    %s20 = sphi 0, %s17
    %s21 = sphi 0, %s18
    %s22 = sphi 0, %s19
    %s23 = sphi 0, %s20
    %s24 = sphi 0, %s21
    %s25 = sphi 0, %s22
    %s41 = sphi 0, %s43
    %s44 = sphi 0, %s41
    %s45 = sphi 0, %s44
    %s61 = sphi 0, %s45
    %s67 = sphi 0, %s69
    %s70 = sphi 0, %s67
    %s71 = sphi 0, %s70
    %s87 = sphi 0, %s71
    %s93 = sphi 0, %s95
    %s96 = sphi 0, %s93
    %s97 = sphi 0, %s96
    %s113 = sphi 0, %s97
    %s119 = sphi 0, %s121
    %s122 = sphi 0, %s119
    %s123 = sphi 0, %s122
    %s139 = sphi 0, %s123
    %s149 = sphi 0, %s151
    %s152 = sphi 0, %s149
    %s153 = sphi 0, %s152
    %s169 = sphi 0, %s153
  $region4: #{aspp_forward.6} parent=0 // loop_header_branch
    %13 = sbr.rel (%p11) target = $region8
  $region5: #{aspp_forward.6} parent=0 // loop_body
    %s15 = ssub.s32 %s10, 1
    %s16 = ssub.s32 %s10, 2
    %s26 = sadd.s32 1, %s19
    %p27 = scmp.ge.s32.totalorder %s26, 1
    %s28 = scalar_select %p27, 0, %s26
    %s29 = sadd.s32 1, %s18
    %s30 = scalar_select %p27, %s29, %s18
    %p31 = scmp.ge.s32.totalorder %s30, 1
    %s32 = scalar_select %p31, 0, %s30
    %s33 = sadd.s32 1, %s17
    %s34 = scalar_select %p31, %s33, %s17
    %p35 = scmp.ge.s32.totalorder %s34, 2
    %s36 = scalar_select %p35, 0, %s34
    %s37 = ssub.s32 %s17, %s36
    %s38 = ssub.s32 %s18, %s32
    %s39 = sor.u32 %s37, %s38
    %p40 = scmp.eq.s32.totalorder %s39, 0
    %s42 = sadd.s32 %s41, 1
    %s43 = scalar_select %p40, %s41, %s42
    %p46 = pneg %p40
    %p47 = scmp.eq.s32.totalorder %s10, 1
    %p48 = por %p46, %p47
    %p49 = scmp.ne.s32.totalorder %s41, %s44
    %p50 = scmp.eq.s32.totalorder %s10, 0
    %p51 = por %p49, %p50
    %p52 = scmp.ne.s32.totalorder %s41, %s44
    %p53 = scmp.eq.s32.totalorder %s15, 1
    %p54 = por %p52, %p53
    %p55 = scmp.ne.s32.totalorder %s44, %s45
    %p56 = scmp.eq.s32.totalorder %s15, 0
    %p57 = por %p55, %p56
    %p58 = scmp.ne.s32.totalorder %s44, %s45
    %p59 = scmp.eq.s32.totalorder %s16, 1
    %p60 = por %p58, %p59
    %p62 = scmp.ne.s32.totalorder %s45, %s61
    %p63 = scmp.eq.s32.totalorder %s16, 0
    %p64 = por %p62, %p63
    %s65 = ssub.s32 %s19, %s28
    %p66 = scmp.eq.s32.totalorder %s65, 0
    %s68 = sadd.s32 %s67, 1
    %s69 = scalar_select %p66, %s67, %s68
    %p72 = pneg %p66
    %p73 = scmp.eq.s32.totalorder %s10, 1
    %p74 = por %p72, %p73
    %p75 = scmp.ne.s32.totalorder %s67, %s70
    %p76 = scmp.eq.s32.totalorder %s10, 0
    %p77 = por %p75, %p76
    %p78 = scmp.ne.s32.totalorder %s67, %s70
    %p79 = scmp.eq.s32.totalorder %s15, 1
    %p80 = por %p78, %p79
    %p81 = scmp.ne.s32.totalorder %s70, %s71
    %p82 = scmp.eq.s32.totalorder %s15, 0
    %p83 = por %p81, %p82
    %p84 = scmp.ne.s32.totalorder %s70, %s71
    %p85 = scmp.eq.s32.totalorder %s16, 1
    %p86 = por %p84, %p85
    %p88 = scmp.ne.s32.totalorder %s71, %s87
    %p89 = scmp.eq.s32.totalorder %s16, 0
    %p90 = por %p88, %p89
    %s91 = ssub.s32 %s19, %s28
    %p92 = scmp.eq.s32.totalorder %s91, 0
    %s94 = sadd.s32 %s93, 1
    %s95 = scalar_select %p92, %s93, %s94
    %p98 = pneg %p92
    %p99 = scmp.eq.s32.totalorder %s10, 1
    %p100 = por %p98, %p99
    %p101 = scmp.ne.s32.totalorder %s93, %s96
    %p102 = scmp.eq.s32.totalorder %s10, 0
    %p103 = por %p101, %p102
    %p104 = scmp.ne.s32.totalorder %s93, %s96
    %p105 = scmp.eq.s32.totalorder %s15, 1
    %p106 = por %p104, %p105
    %p107 = scmp.ne.s32.totalorder %s96, %s97
    %p108 = scmp.eq.s32.totalorder %s15, 0
    %p109 = por %p107, %p108
    %p110 = scmp.ne.s32.totalorder %s96, %s97
    %p111 = scmp.eq.s32.totalorder %s16, 1
    %p112 = por %p110, %p111
    %p114 = scmp.ne.s32.totalorder %s97, %s113
    %p115 = scmp.eq.s32.totalorder %s16, 0
    %p116 = por %p114, %p115
    %s117 = ssub.s32 %s19, %s28
    %p118 = scmp.eq.s32.totalorder %s117, 0
    %s120 = sadd.s32 %s119, 1
    %s121 = scalar_select %p118, %s119, %s120
    %p124 = pneg %p118
    %p125 = scmp.eq.s32.totalorder %s10, 1
    %p126 = por %p124, %p125
    %p127 = scmp.ne.s32.totalorder %s119, %s122
    %p128 = scmp.eq.s32.totalorder %s10, 0
    %p129 = por %p127, %p128
    %p130 = scmp.ne.s32.totalorder %s119, %s122
    %p131 = scmp.eq.s32.totalorder %s15, 1
    %p132 = por %p130, %p131
    %p133 = scmp.ne.s32.totalorder %s122, %s123
    %p134 = scmp.eq.s32.totalorder %s15, 0
    %p135 = por %p133, %p134
    %p136 = scmp.ne.s32.totalorder %s122, %s123
    %p137 = scmp.eq.s32.totalorder %s16, 1
    %p138 = por %p136, %p137
    %p140 = scmp.ne.s32.totalorder %s123, %s139
    %p141 = scmp.eq.s32.totalorder %s16, 0
    %p142 = por %p140, %p141
    %s143 = ssub.s32 %s17, %s36
    %s144 = ssub.s32 %s18, %s32
    %s145 = sor.u32 %s143, %s144
    %s146 = ssub.s32 %s19, %s28
    %s147 = sor.u32 %s145, %s146
    %p148 = scmp.eq.s32.totalorder %s147, 0
    %s150 = sadd.s32 %s149, 1
    %s151 = scalar_select %p148, %s149, %s150
    %p154 = pneg %p148
    %p155 = scmp.eq.s32.totalorder %s10, 1
    %p156 = por %p154, %p155
    %p157 = scmp.ne.s32.totalorder %s149, %s152
    %p158 = scmp.eq.s32.totalorder %s10, 0
    %p159 = por %p157, %p158
    %p160 = scmp.ne.s32.totalorder %s149, %s152
    %p161 = scmp.eq.s32.totalorder %s15, 1
    %p162 = por %p160, %p161
    %p163 = scmp.ne.s32.totalorder %s152, %s153
    %p164 = scmp.eq.s32.totalorder %s15, 0
    %p165 = por %p163, %p164
    %p166 = scmp.ne.s32.totalorder %s152, %s153
    %p167 = scmp.eq.s32.totalorder %s16, 1
    %p168 = por %p166, %p167
    %p170 = scmp.ne.s32.totalorder %s153, %s169
    %p171 = scmp.eq.s32.totalorder %s16, 0
    %p172 = por %p170, %p171
    %p173 = scmp.le.s32.totalorder 1, %s10
    %p174 = scmp.lt.s32.totalorder %s10, 3
    %p175 = pnand %p173, %p174
    %p176 = pneg %p175
    // Predicated region
    $region9: #{aspp_forward.6} parent=5 // pred_check
      _
    $region10: #{aspp_forward.6} parent=5 // pred_check_branch
      %178 = sbr.rel (%p175) target = $region12
    $region11: #{aspp_forward.6} parent=5 // pred_region
      %s179 = ssub.s32 %s10, 1
      // Predicated region
      $region13: #{aspp_forward.6} parent=11 // pred_check
        %p180 = pneg %p83
      $region14: #{aspp_forward.6} parent=11 // pred_check_branch
        %182 = sbr.rel (%p180) target = $region16
      $region15: #{aspp_forward.6} parent=11 // pred_region
        %s183 = smul.u32 2, %s22
        %p184 = scmp.lt.s32.totalorder %s183, 1
        %s185 = scalar_select %p184, %s183, 1
        %s186 = smul.addr %s185, 4
        %s187 = scalar_lea.vmem %s1, %s186
        %s188 = smul.u32 2, %s22
      $region16: #{aspp_forward.6} parent=11 // pred_fallthru
        _
      // Predicated region
      $region17: #{aspp_forward.6} parent=11 // pred_check
        %p189 = pneg %p109
      $region18: #{aspp_forward.6} parent=11 // pred_check_branch
        %191 = sbr.rel (%p189) target = $region20
      $region19: #{aspp_forward.6} parent=11 // pred_region
        %s192 = smul.u32 2, %s22
        %p193 = scmp.lt.s32.totalorder %s192, 1
        %s194 = scalar_select %p193, %s192, 1
        %s195 = scalar_lea.vmem %s2, %s194
        %s196 = smul.u32 2, %s22
      $region20: #{aspp_forward.6} parent=11 // pred_fallthru
        _
      // Predicated region
      $region21: #{aspp_forward.6} parent=11 // pred_check
        %p197 = pneg %p135
      $region22: #{aspp_forward.6} parent=11 // pred_check_branch
        %199 = sbr.rel (%p197) target = $region24
      $region23: #{aspp_forward.6} parent=11 // pred_region
        %s200 = smul.u32 2, %s22
        %p201 = scmp.lt.s32.totalorder %s200, 1
        %s202 = scalar_select %p201, %s200, 1
        %s203 = scalar_lea.vmem %s3, %s202
        %s204 = smul.u32 2, %s22
      $region24: #{aspp_forward.6} parent=11 // pred_fallthru
        _
    $region12: #{aspp_forward.6} parent=5 // pred_fallthru
      _
    %p205 = scmp.lt.s32.totalorder %s10, 2
    // Predicated region
    $region25: #{aspp_forward.6} parent=5 // pred_check
      %p206 = pneg %p205
    $region26: #{aspp_forward.6} parent=5 // pred_check_branch
      %208 = sbr.rel (%p206) target = $region28
    $region27: #{aspp_forward.6} parent=5 // pred_region
      // Predicated region
      $region29: #{aspp_forward.6} parent=27 // pred_check
        %p209 = pneg %p51
      $region30: #{aspp_forward.6} parent=27 // pred_check_branch
        %211 = sbr.rel (%p209) target = $region32
      $region31: #{aspp_forward.6} parent=27 // pred_region
        %s212 = smul.u32 32, %s18
        %p213 = scmp.lt.s32.totalorder %s17, 1
        %s214 = scalar_select %p213, %s17, 1
        %p215 = scmp.lt.s32.totalorder %s212, 31
        %s216 = scalar_select %p215, %s212, 31
        %s217 = smul.addr %s216, 2
        %s218 = smul.addr %s214, 64
        %s219 = sadd.s32 %s217, %s218
        %s220 = smul.addr %s219, 4
        %s221 = scalar_lea.vmem %s0, %s220
        %s222 = smul.u32 32, %s18
      $region32: #{aspp_forward.6} parent=27 // pred_fallthru
        _
    $region28: #{aspp_forward.6} parent=5 // pred_fallthru
      _
    %p223 = scmp.le.s32.totalorder 1, %s10
    %p224 = scmp.lt.s32.totalorder %s10, 3
    %p225 = pnand %p223, %p224
    %p226 = pneg %p225
    // Predicated region
    $region33: #{aspp_forward.6} parent=5 // pred_check
      _
    $region34: #{aspp_forward.6} parent=5 // pred_check_branch
      %228 = sbr.rel (%p225) target = $region36
    $region35: #{aspp_forward.6} parent=5 // pred_region
      %s229 = ssub.s32 %s10, 1
      %s230 = smul.u32 32, %s21
      %p231 = scmp.lt.s32.totalorder %s20, 1
      %s232 = scalar_select %p231, %s20, 1
      %p233 = scmp.lt.s32.totalorder %s230, 31
      %s234 = scalar_select %p233, %s230, 31
      %s235 = smul.addr %s234, 2
      %s236 = smul.addr %s232, 64
      %s237 = sadd.s32 %s235, %s236
      %s238 = smul.addr %s237, 4
      %s239 = scalar_lea.vmem %s0, %s238
      %p240 = pneg %p57
      %p241 = pneg %p54
      %s242 = smul.u32 2, %s22
      %p243 = scmp.lt.s32.totalorder %s242, 1
      %s244 = scalar_select %p243, %s242, 1
      %s245 = smul.addr %s244, 4
      %s246 = scalar_lea.vmem %s1, %s245
      %p247 = pneg %p83
      %p248 = pneg %p80
      %s249 = smul.u32 2, %s22
      %p250 = scmp.lt.s32.totalorder %s249, 1
      %s251 = scalar_select %p250, %s249, 1
      %s252 = scalar_lea.vmem %s2, %s251
      %p253 = pneg %p109
      %p254 = pneg %p106
      %s255 = smul.u32 2, %s22
      %p256 = scmp.lt.s32.totalorder %s255, 1
      %s257 = scalar_select %p256, %s255, 1
      %s258 = scalar_lea.vmem %s3, %s257
      %p259 = pneg %p135
      %p260 = pneg %p132
      %p261 = pneg %p165
      %p262 = pneg %p162
      %s263 = smul.u32 32, %s21
      %s264 = smul.u32 2, %s22
      %p265 = scmp.lt.s32.totalorder %s20, 1
      %s266 = scalar_select %p265, %s20, 1
      %p267 = scmp.lt.s32.totalorder %s263, 31
      %s268 = scalar_select %p267, %s263, 31
      %p269 = scmp.lt.s32.totalorder %s264, 1
      %s270 = scalar_select %p269, %s264, 1
      %s271 = smul.addr %s268, 2
      %s272 = sadd.s32 %s270, %s271
      %s273 = smul.addr %s266, 64
      %s274 = sadd.s32 %s272, %s273
      %s275 = smul.addr %s274, 4
      %s276 = scalar_lea.vmem %s4, %s275
      %s277 = smul.u32 32, %s21
      %p278 = scmp.lt.s32.totalorder %s20, 1
      %s279 = scalar_select %p278, %s20, 1
      %p280 = scmp.lt.s32.totalorder %s277, 31
      %s281 = scalar_select %p280, %s277, 31
      %s282 = smul.addr %s281, 2
      %s283 = smul.addr %s279, 64
      %s284 = sadd.s32 %s282, %s283
      %s285 = smul.addr %s284, 4
      %s286 = scalar_lea.vmem %s0, %s285
      %s287 = smul.u32 32, %s21
      %s288 = smul.u32 2, %s22
      %p289 = scmp.lt.s32.totalorder %s288, 1
      %s290 = scalar_select %p289, %s288, 1
      %s291 = smul.addr %s290, 4
      %s292 = scalar_lea.vmem %s1, %s291
      %s293 = smul.u32 2, %s22
      %s294 = smul.u32 2, %s22
      %p295 = scmp.lt.s32.totalorder %s294, 1
      %s296 = scalar_select %p295, %s294, 1
      %s297 = scalar_lea.vmem %s2, %s296
      %s298 = smul.u32 2, %s22
      %s299 = smul.u32 2, %s22
      %p300 = scmp.lt.s32.totalorder %s299, 1
      %s301 = scalar_select %p300, %s299, 1
      %s302 = scalar_lea.vmem %s3, %s301
      %s303 = smul.u32 2, %s22
      %s304 = smul.u32 32, %s21
      %s305 = smul.u32 2, %s22
      %p306 = scmp.lt.s32.totalorder %s20, 1
      %s307 = scalar_select %p306, %s20, 1
      %p308 = scmp.lt.s32.totalorder %s304, 31
      %s309 = scalar_select %p308, %s304, 31
      %p310 = scmp.lt.s32.totalorder %s305, 1
      %s311 = scalar_select %p310, %s305, 1
      %s312 = smul.addr %s309, 2
      %s313 = sadd.s32 %s311, %s312
      %s314 = smul.addr %s307, 64
      %s315 = sadd.s32 %s313, %s314
      %s316 = smul.addr %s315, 4
      %s317 = scalar_lea.vmem %s4, %s316
      %s318 = smul.u32 32, %s21
      %s319 = smul.u32 2, %s22
      %v320 = vld [vmem:[%s286] sm:$0xff]
      %v321 = vld [vmem:[%s286 + $0x8] sm:$0xff]
      %v322 = vld [vmem:[%s286 + $0x10] sm:$0xff]
      %v323 = vld [vmem:[%s286 + $0x18] sm:$0xff]
      %v324 = vld [vmem:[%s286 + $0x20] sm:$0xff]
      %v325 = vld [vmem:[%s286 + $0x28] sm:$0xff]
      %v326 = vld [vmem:[%s286 + $0x30] sm:$0xff]
      %v327 = vld [vmem:[%s286 + $0x38] sm:$0xff]
      %v328 = vld [vmem:[%s286 + $0x40] sm:$0xff]
      %v329 = vld [vmem:[%s286 + $0x48] sm:$0xff]
      %v330 = vld [vmem:[%s286 + $0x50] sm:$0xff]
      %v331 = vld [vmem:[%s286 + $0x58] sm:$0xff]
      %v332 = vld [vmem:[%s286 + $0x60] sm:$0xff]
      %v333 = vld [vmem:[%s286 + $0x68] sm:$0xff]
      %v334 = vld [vmem:[%s286 + $0x70] sm:$0xff]
      %v335 = vld [vmem:[%s286 + $0x78] sm:$0xff]
      %v336 = vld [vmem:[%s286 + $0x80] sm:$0xff]
      %v337 = vld [vmem:[%s286 + $0x88] sm:$0xff]
      %v338 = vld [vmem:[%s286 + $0x90] sm:$0xff]
      %v339 = vld [vmem:[%s286 + $0x98] sm:$0xff]
      %v340 = vld [vmem:[%s286 + $0xa0] sm:$0xff]
      %v341 = vld [vmem:[%s286 + $0xa8] sm:$0xff]
      %v342 = vld [vmem:[%s286 + $0xb0] sm:$0xff]
      %v343 = vld [vmem:[%s286 + $0xb8] sm:$0xff]
      %v344 = vld [vmem:[%s286 + $0xc0] sm:$0xff]
      %v345 = vld [vmem:[%s286 + $0xc8] sm:$0xff]
      %v346 = vld [vmem:[%s286 + $0xd0] sm:$0xff]
      %v347 = vld [vmem:[%s286 + $0xd8] sm:$0xff]
      %v348 = vld [vmem:[%s286 + $0xe0] sm:$0xff]
      %v349 = vld [vmem:[%s286 + $0xe8] sm:$0xff]
      %v350 = vld [vmem:[%s286 + $0xf0] sm:$0xff]
      %v351 = vld [vmem:[%s286 + $0xf8] sm:$0xff]
      %v352 = vld [vmem:[%s292] sm:$0xff]
      %v353 = vld [vmem:[%s292 + $0x8] sm:$0xff]
      %v354 = vld [vmem:[%s292 + $0x10] sm:$0xff]
      %v355 = vld [vmem:[%s292 + $0x18] sm:$0xff]
      %v356 = vld [vmem:[%s292 + $0x20] sm:$0xff]
      %v357 = vld [vmem:[%s292 + $0x28] sm:$0xff]
      %v358 = vld [vmem:[%s292 + $0x30] sm:$0xff]
      %v359 = vld [vmem:[%s292 + $0x38] sm:$0xff]
      %v360 = vld [vmem:[%s292 + $0x40] sm:$0xff]
      %v361 = vld [vmem:[%s292 + $0x48] sm:$0xff]
      %v362 = vld [vmem:[%s292 + $0x50] sm:$0xff]
      %v363 = vld [vmem:[%s292 + $0x58] sm:$0xff]
      %v364 = vld [vmem:[%s292 + $0x60] sm:$0xff]
      %v365 = vld [vmem:[%s292 + $0x68] sm:$0xff]
      %v366 = vld [vmem:[%s292 + $0x70] sm:$0xff]
      %v367 = vld [vmem:[%s292 + $0x78] sm:$0xff]
      %v368 = vld [vmem:[%s292 + $0x80] sm:$0xff]
      %v369 = vld [vmem:[%s292 + $0x88] sm:$0xff]
      %v370 = vld [vmem:[%s292 + $0x90] sm:$0xff]
      %v371 = vld [vmem:[%s292 + $0x98] sm:$0xff]
      %v372 = vld [vmem:[%s292 + $0xa0] sm:$0xff]
      %v373 = vld [vmem:[%s292 + $0xa8] sm:$0xff]
      %v374 = vld [vmem:[%s292 + $0xb0] sm:$0xff]
      %v375 = vld [vmem:[%s292 + $0xb8] sm:$0xff]
      %v376 = vld [vmem:[%s292 + $0xc0] sm:$0xff]
      %v377 = vld [vmem:[%s292 + $0xc8] sm:$0xff]
      %v378 = vld [vmem:[%s292 + $0xd0] sm:$0xff]
      %v379 = vld [vmem:[%s292 + $0xd8] sm:$0xff]
      %v380 = vld [vmem:[%s292 + $0xe0] sm:$0xff]
      %v381 = vld [vmem:[%s292 + $0xe8] sm:$0xff]
      %v382 = vld [vmem:[%s292 + $0xf0] sm:$0xff]
      %v383 = vld [vmem:[%s292 + $0xf8] sm:$0xff]
      %v416 = vunpack.c.l.b16 %v320
      %v417 = vunpack.c.h.b16 %v320
      %v418 = vunpack.c.l.b16 %v321
      %v419 = vunpack.c.h.b16 %v321
      %v420 = vunpack.c.l.b16 %v322
      %v421 = vunpack.c.h.b16 %v322
      %v422 = vunpack.c.l.b16 %v323
      %v423 = vunpack.c.h.b16 %v323
      %v424 = vunpack.c.l.b16 %v324
      %v425 = vunpack.c.h.b16 %v324
      %v426 = vunpack.c.l.b16 %v325
      %v427 = vunpack.c.h.b16 %v325
      %v428 = vunpack.c.l.b16 %v326
      %v429 = vunpack.c.h.b16 %v326
      %v430 = vunpack.c.l.b16 %v327
      %v431 = vunpack.c.h.b16 %v327
      %v432 = vunpack.c.l.b16 %v328
      %v433 = vunpack.c.h.b16 %v328
      %v434 = vunpack.c.l.b16 %v329
      %v435 = vunpack.c.h.b16 %v329
      %v436 = vunpack.c.l.b16 %v330
      %v437 = vunpack.c.h.b16 %v330
      %v438 = vunpack.c.l.b16 %v331
      %v439 = vunpack.c.h.b16 %v331
      %v440 = vunpack.c.l.b16 %v332
      %v441 = vunpack.c.h.b16 %v332
      %v442 = vunpack.c.l.b16 %v333
      %v443 = vunpack.c.h.b16 %v333
      %v444 = vunpack.c.l.b16 %v334
      %v445 = vunpack.c.h.b16 %v334
      %v446 = vunpack.c.l.b16 %v335
      %v447 = vunpack.c.h.b16 %v335
      %v448 = vunpack.c.l.b16 %v336
      %v449 = vunpack.c.h.b16 %v336
      %v450 = vunpack.c.l.b16 %v337
      %v451 = vunpack.c.h.b16 %v337
      %v452 = vunpack.c.l.b16 %v338
      %v453 = vunpack.c.h.b16 %v338
      %v454 = vunpack.c.l.b16 %v339
      %v455 = vunpack.c.h.b16 %v339
      %v456 = vunpack.c.l.b16 %v340
      %v457 = vunpack.c.h.b16 %v340
      %v458 = vunpack.c.l.b16 %v341
      %v459 = vunpack.c.h.b16 %v341
      %v460 = vunpack.c.l.b16 %v342
      %v461 = vunpack.c.h.b16 %v342
      %v462 = vunpack.c.l.b16 %v343
      %v463 = vunpack.c.h.b16 %v343
      %v464 = vunpack.c.l.b16 %v344
      %v465 = vunpack.c.h.b16 %v344
      %v466 = vunpack.c.l.b16 %v345
      %v467 = vunpack.c.h.b16 %v345
      %v468 = vunpack.c.l.b16 %v346
      %v469 = vunpack.c.h.b16 %v346
      %v470 = vunpack.c.l.b16 %v347
      %v471 = vunpack.c.h.b16 %v347
      %v472 = vunpack.c.l.b16 %v348
      %v473 = vunpack.c.h.b16 %v348
      %v474 = vunpack.c.l.b16 %v349
      %v475 = vunpack.c.h.b16 %v349
      %v476 = vunpack.c.l.b16 %v350
      %v477 = vunpack.c.h.b16 %v350
      %v478 = vunpack.c.l.b16 %v351
      %v479 = vunpack.c.h.b16 %v351
      %v480 = vpack.c.b16 %v418, %v416
      %v481 = vpack.c.b16 %v419, %v417
      %v482 = vpack.c.b16 %v422, %v420
      %v483 = vpack.c.b16 %v423, %v421
      %v484 = vpack.c.b16 %v426, %v424
      %v485 = vpack.c.b16 %v427, %v425
      %v486 = vpack.c.b16 %v430, %v428
      %v487 = vpack.c.b16 %v431, %v429
      %v488 = vpack.c.b16 %v434, %v432
      %v489 = vpack.c.b16 %v435, %v433
      %v490 = vpack.c.b16 %v438, %v436
      %v491 = vpack.c.b16 %v439, %v437
      %v492 = vpack.c.b16 %v442, %v440
      %v493 = vpack.c.b16 %v443, %v441
      %v494 = vpack.c.b16 %v446, %v444
      %v495 = vpack.c.b16 %v447, %v445
      %v496 = vpack.c.b16 %v450, %v448
      %v497 = vpack.c.b16 %v451, %v449
      %v498 = vpack.c.b16 %v454, %v452
      %v499 = vpack.c.b16 %v455, %v453
      %v500 = vpack.c.b16 %v458, %v456
      %v501 = vpack.c.b16 %v459, %v457
      %v502 = vpack.c.b16 %v462, %v460
      %v503 = vpack.c.b16 %v463, %v461
      %v504 = vpack.c.b16 %v466, %v464
      %v505 = vpack.c.b16 %v467, %v465
      %v506 = vpack.c.b16 %v470, %v468
      %v507 = vpack.c.b16 %v471, %v469
      %v508 = vpack.c.b16 %v474, %v472
      %v509 = vpack.c.b16 %v475, %v473
      %v510 = vpack.c.b16 %v478, %v476
      %v511 = vpack.c.b16 %v479, %v477
      %v576 = vunpack.c.l.b16 %v352
      %v577 = vunpack.c.h.b16 %v352
      %v578 = vunpack.c.l.b16 %v353
      %v579 = vunpack.c.h.b16 %v353
      %v580 = vunpack.c.l.b16 %v354
      %v581 = vunpack.c.h.b16 %v354
      %v582 = vunpack.c.l.b16 %v355
      %v583 = vunpack.c.h.b16 %v355
      %v584 = vunpack.c.l.b16 %v356
      %v585 = vunpack.c.h.b16 %v356
      %v586 = vunpack.c.l.b16 %v357
      %v587 = vunpack.c.h.b16 %v357
      %v588 = vunpack.c.l.b16 %v358
      %v589 = vunpack.c.h.b16 %v358
      %v590 = vunpack.c.l.b16 %v359
      %v591 = vunpack.c.h.b16 %v359
      %v592 = vunpack.c.l.b16 %v360
      %v593 = vunpack.c.h.b16 %v360
      %v594 = vunpack.c.l.b16 %v361
      %v595 = vunpack.c.h.b16 %v361
      %v596 = vunpack.c.l.b16 %v362
      %v597 = vunpack.c.h.b16 %v362
      %v598 = vunpack.c.l.b16 %v363
      %v599 = vunpack.c.h.b16 %v363
      %v600 = vunpack.c.l.b16 %v364
      %v601 = vunpack.c.h.b16 %v364
      %v602 = vunpack.c.l.b16 %v365
      %v603 = vunpack.c.h.b16 %v365
      %v604 = vunpack.c.l.b16 %v366
      %v605 = vunpack.c.h.b16 %v366
      %v606 = vunpack.c.l.b16 %v367
      %v607 = vunpack.c.h.b16 %v367
      %v608 = vunpack.c.l.b16 %v368
      %v609 = vunpack.c.h.b16 %v368
      %v610 = vunpack.c.l.b16 %v369
      %v611 = vunpack.c.h.b16 %v369
      %v612 = vunpack.c.l.b16 %v370
      %v613 = vunpack.c.h.b16 %v370
      %v614 = vunpack.c.l.b16 %v371
      %v615 = vunpack.c.h.b16 %v371
      %v616 = vunpack.c.l.b16 %v372
      %v617 = vunpack.c.h.b16 %v372
      %v618 = vunpack.c.l.b16 %v373
      %v619 = vunpack.c.h.b16 %v373
      %v620 = vunpack.c.l.b16 %v374
      %v621 = vunpack.c.h.b16 %v374
      %v622 = vunpack.c.l.b16 %v375
      %v623 = vunpack.c.h.b16 %v375
      %v624 = vunpack.c.l.b16 %v376
      %v625 = vunpack.c.h.b16 %v376
      %v626 = vunpack.c.l.b16 %v377
      %v627 = vunpack.c.h.b16 %v377
      %v628 = vunpack.c.l.b16 %v378
      %v629 = vunpack.c.h.b16 %v378
      %v630 = vunpack.c.l.b16 %v379
      %v631 = vunpack.c.h.b16 %v379
      %v632 = vunpack.c.l.b16 %v380
      %v633 = vunpack.c.h.b16 %v380
      %v634 = vunpack.c.l.b16 %v381
      %v635 = vunpack.c.h.b16 %v381
      %v636 = vunpack.c.l.b16 %v382
      %v637 = vunpack.c.h.b16 %v382
      %v638 = vunpack.c.l.b16 %v383
      %v639 = vunpack.c.h.b16 %v383
      %v640 = vpack.c.b16 %v578, %v576
      %v641 = vpack.c.b16 %v579, %v577
      %v642 = vpack.c.b16 %v582, %v580
      %v643 = vpack.c.b16 %v583, %v581
      %v644 = vpack.c.b16 %v586, %v584
      %v645 = vpack.c.b16 %v587, %v585
      %v646 = vpack.c.b16 %v590, %v588
      %v647 = vpack.c.b16 %v591, %v589
      %v648 = vpack.c.b16 %v594, %v592
      %v649 = vpack.c.b16 %v595, %v593
      %v650 = vpack.c.b16 %v598, %v596
      %v651 = vpack.c.b16 %v599, %v597
      %v652 = vpack.c.b16 %v602, %v600
      %v653 = vpack.c.b16 %v603, %v601
      %v654 = vpack.c.b16 %v606, %v604
      %v655 = vpack.c.b16 %v607, %v605
      %v656 = vpack.c.b16 %v610, %v608
      %v657 = vpack.c.b16 %v611, %v609
      %v658 = vpack.c.b16 %v614, %v612
      %v659 = vpack.c.b16 %v615, %v613
      %v660 = vpack.c.b16 %v618, %v616
      %v661 = vpack.c.b16 %v619, %v617
      %v662 = vpack.c.b16 %v622, %v620
      %v663 = vpack.c.b16 %v623, %v621
      %v664 = vpack.c.b16 %v626, %v624
      %v665 = vpack.c.b16 %v627, %v625
      %v666 = vpack.c.b16 %v630, %v628
      %v667 = vpack.c.b16 %v631, %v629
      %v668 = vpack.c.b16 %v634, %v632
      %v669 = vpack.c.b16 %v635, %v633
      %v670 = vpack.c.b16 %v638, %v636
      %v671 = vpack.c.b16 %v639, %v637
      %704 = vmatpush.bf16.msra.mxu0 %v654
      %705 = vmatpush.bf16.msra.mxu0 %v652
      %706 = vmatpush.bf16.msra.mxu0 %v650
      %707 = vmatpush.bf16.msra.mxu0 %v648
      %708 = vmatpush.bf16.msra.mxu0 %v646
      %709 = vmatpush.bf16.msra.mxu0 %v644
      %710 = vmatpush.bf16.msra.mxu0 %v642
      %711 = vmatpush.bf16.msra.mxu0 %v640
      %712 = vmatmul.bf16.gmra.mxu0 %v480
      %v713 = vpop.f32.mrf.mxu0
      %v714 = vadd.f32 0.0, %v713
      %v715 = vpop.f32.mrf.mxu0
      %v716 = vadd.f32 0.0, %v715
      %717 = vmatmul.bf16.gmra.mxu0 %v482
      %v718 = vpop.f32.mrf.mxu0
      %v719 = vadd.f32 0.0, %v718
      %v720 = vpop.f32.mrf.mxu0
      %v721 = vadd.f32 0.0, %v720
      %722 = vmatmul.bf16.gmra.mxu0 %v484
      %v723 = vpop.f32.mrf.mxu0
      %v724 = vadd.f32 0.0, %v723
      %v725 = vpop.f32.mrf.mxu0
      %v726 = vadd.f32 0.0, %v725
      %727 = vmatmul.bf16.gmra.mxu0 %v486
      %v728 = vpop.f32.mrf.mxu0
      %v729 = vadd.f32 0.0, %v728
      %v730 = vpop.f32.mrf.mxu0
      %v731 = vadd.f32 0.0, %v730
      %732 = vmatmul.bf16.gmra.mxu0 %v488
      %v733 = vpop.f32.mrf.mxu0
      %v734 = vadd.f32 0.0, %v733
      %v735 = vpop.f32.mrf.mxu0
      %v736 = vadd.f32 0.0, %v735
      %737 = vmatmul.bf16.gmra.mxu0 %v490
      %v738 = vpop.f32.mrf.mxu0
      %v739 = vadd.f32 0.0, %v738
      %v740 = vpop.f32.mrf.mxu0
      %v741 = vadd.f32 0.0, %v740
      %742 = vmatmul.bf16.gmra.mxu0 %v492
      %v743 = vpop.f32.mrf.mxu0
      %v744 = vadd.f32 0.0, %v743
      %v745 = vpop.f32.mrf.mxu0
      %v746 = vadd.f32 0.0, %v745
      %747 = vmatmul.bf16.gmra.mxu0 %v494
      %v748 = vpop.f32.mrf.mxu0
      %v749 = vadd.f32 0.0, %v748
      %v750 = vpop.f32.mrf.mxu0
      %v751 = vadd.f32 0.0, %v750
      %752 = vmatmul.bf16.gmra.mxu0 %v496
      %v753 = vpop.f32.mrf.mxu0
      %v754 = vadd.f32 0.0, %v753
      %v755 = vpop.f32.mrf.mxu0
      %v756 = vadd.f32 0.0, %v755
      %757 = vmatmul.bf16.gmra.mxu0 %v498
      %v758 = vpop.f32.mrf.mxu0
      %v759 = vadd.f32 0.0, %v758
      %v760 = vpop.f32.mrf.mxu0
      %v761 = vadd.f32 0.0, %v760
      %762 = vmatmul.bf16.gmra.mxu0 %v500
      %v763 = vpop.f32.mrf.mxu0
      %v764 = vadd.f32 0.0, %v763
      %v765 = vpop.f32.mrf.mxu0
      %v766 = vadd.f32 0.0, %v765
      %767 = vmatmul.bf16.gmra.mxu0 %v502
      %v768 = vpop.f32.mrf.mxu0
      %v769 = vadd.f32 0.0, %v768
      %v770 = vpop.f32.mrf.mxu0
      %v771 = vadd.f32 0.0, %v770
      %772 = vmatmul.bf16.gmra.mxu0 %v504
      %v773 = vpop.f32.mrf.mxu0
      %v774 = vadd.f32 0.0, %v773
      %v775 = vpop.f32.mrf.mxu0
      %v776 = vadd.f32 0.0, %v775
      %777 = vmatmul.bf16.gmra.mxu0 %v506
      %v778 = vpop.f32.mrf.mxu0
      %v779 = vadd.f32 0.0, %v778
      %v780 = vpop.f32.mrf.mxu0
      %v781 = vadd.f32 0.0, %v780
      %782 = vmatmul.bf16.gmra.mxu0 %v508
      %v783 = vpop.f32.mrf.mxu0
      %v784 = vadd.f32 0.0, %v783
      %v785 = vpop.f32.mrf.mxu0
      %v786 = vadd.f32 0.0, %v785
      %787 = vmatmul.bf16.gmra.mxu0 %v510
      %v788 = vpop.f32.mrf.mxu0
      %v789 = vadd.f32 0.0, %v788
      %v790 = vpop.f32.mrf.mxu0
      %v791 = vadd.f32 0.0, %v790
      %792 = vdwg.mxu0
      %793 = vmatpush.bf16.msra.mxu0 %v670
      %794 = vmatpush.bf16.msra.mxu0 %v668
      %795 = vmatpush.bf16.msra.mxu0 %v666
      %796 = vmatpush.bf16.msra.mxu0 %v664
      %797 = vmatpush.bf16.msra.mxu0 %v662
      %798 = vmatpush.bf16.msra.mxu0 %v660
      %799 = vmatpush.bf16.msra.mxu0 %v658
      %800 = vmatpush.bf16.msra.mxu0 %v656
      %801 = vmatmul.bf16.gmra.mxu0 %v481
      %v802 = vpop.f32.mrf.mxu0
      %v803 = vadd.f32 %v714, %v802
      %v804 = vpop.f32.mrf.mxu0
      %v805 = vadd.f32 %v716, %v804
      %806 = vmatmul.bf16.gmra.mxu0 %v483
      %v807 = vpop.f32.mrf.mxu0
      %v808 = vadd.f32 %v719, %v807
      %v809 = vpop.f32.mrf.mxu0
      %v810 = vadd.f32 %v721, %v809
      %811 = vmatmul.bf16.gmra.mxu0 %v485
      %v812 = vpop.f32.mrf.mxu0
      %v813 = vadd.f32 %v724, %v812
      %v814 = vpop.f32.mrf.mxu0
      %v815 = vadd.f32 %v726, %v814
      %816 = vmatmul.bf16.gmra.mxu0 %v487
      %v817 = vpop.f32.mrf.mxu0
      %v818 = vadd.f32 %v729, %v817
      %v819 = vpop.f32.mrf.mxu0
      %v820 = vadd.f32 %v731, %v819
      %821 = vmatmul.bf16.gmra.mxu0 %v489
      %v822 = vpop.f32.mrf.mxu0
      %v823 = vadd.f32 %v734, %v822
      %v824 = vpop.f32.mrf.mxu0
      %v825 = vadd.f32 %v736, %v824
      %826 = vmatmul.bf16.gmra.mxu0 %v491
      %v827 = vpop.f32.mrf.mxu0
      %v828 = vadd.f32 %v739, %v827
      %v829 = vpop.f32.mrf.mxu0
      %v830 = vadd.f32 %v741, %v829
      %831 = vmatmul.bf16.gmra.mxu0 %v493
      %v832 = vpop.f32.mrf.mxu0
      %v833 = vadd.f32 %v744, %v832
      %v834 = vpop.f32.mrf.mxu0
      %v835 = vadd.f32 %v746, %v834
      %836 = vmatmul.bf16.gmra.mxu0 %v495
      %v837 = vpop.f32.mrf.mxu0
      %v838 = vadd.f32 %v749, %v837
      %v839 = vpop.f32.mrf.mxu0
      %v840 = vadd.f32 %v751, %v839
      %841 = vmatmul.bf16.gmra.mxu0 %v497
      %v842 = vpop.f32.mrf.mxu0
      %v843 = vadd.f32 %v754, %v842
      %v844 = vpop.f32.mrf.mxu0
      %v845 = vadd.f32 %v756, %v844
      %846 = vmatmul.bf16.gmra.mxu0 %v499
      %v847 = vpop.f32.mrf.mxu0
      %v848 = vadd.f32 %v759, %v847
      %v849 = vpop.f32.mrf.mxu0
      %v850 = vadd.f32 %v761, %v849
      %851 = vmatmul.bf16.gmra.mxu0 %v501
      %v852 = vpop.f32.mrf.mxu0
      %v853 = vadd.f32 %v764, %v852
      %v854 = vpop.f32.mrf.mxu0
      %v855 = vadd.f32 %v766, %v854
      %856 = vmatmul.bf16.gmra.mxu0 %v503
      %v857 = vpop.f32.mrf.mxu0
      %v858 = vadd.f32 %v769, %v857
      %v859 = vpop.f32.mrf.mxu0
      %v860 = vadd.f32 %v771, %v859
      %861 = vmatmul.bf16.gmra.mxu0 %v505
      %v862 = vpop.f32.mrf.mxu0
      %v863 = vadd.f32 %v774, %v862
      %v864 = vpop.f32.mrf.mxu0
      %v865 = vadd.f32 %v776, %v864
      %866 = vmatmul.bf16.gmra.mxu0 %v507
      %v867 = vpop.f32.mrf.mxu0
      %v868 = vadd.f32 %v779, %v867
      %v869 = vpop.f32.mrf.mxu0
      %v870 = vadd.f32 %v781, %v869
      %871 = vmatmul.bf16.gmra.mxu0 %v509
      %v872 = vpop.f32.mrf.mxu0
      %v873 = vadd.f32 %v784, %v872
      %v874 = vpop.f32.mrf.mxu0
      %v875 = vadd.f32 %v786, %v874
      %876 = vmatmul.bf16.gmra.mxu0 %v511
      %v877 = vpop.f32.mrf.mxu0
      %v878 = vadd.f32 %v789, %v877
      %v879 = vpop.f32.mrf.mxu0
      %v880 = vadd.f32 %v791, %v879
      %881 = vdwg.mxu0
      %882 = vmatpush.bf16.msra.mxu0 %v655
      %883 = vmatpush.bf16.msra.mxu0 %v653
      %884 = vmatpush.bf16.msra.mxu0 %v651
      %885 = vmatpush.bf16.msra.mxu0 %v649
      %886 = vmatpush.bf16.msra.mxu0 %v647
      %887 = vmatpush.bf16.msra.mxu0 %v645
      %888 = vmatpush.bf16.msra.mxu0 %v643
      %889 = vmatpush.bf16.msra.mxu0 %v641
      %890 = vmatmul.bf16.gmra.mxu0 %v480
      %v891 = vpop.f32.mrf.mxu0
      %v892 = vadd.f32 0.0, %v891
      %v893 = vpop.f32.mrf.mxu0
      %v894 = vadd.f32 0.0, %v893
      %895 = vmatmul.bf16.gmra.mxu0 %v482
      %v896 = vpop.f32.mrf.mxu0
      %v897 = vadd.f32 0.0, %v896
      %v898 = vpop.f32.mrf.mxu0
      %v899 = vadd.f32 0.0, %v898
      %900 = vmatmul.bf16.gmra.mxu0 %v484
      %v901 = vpop.f32.mrf.mxu0
      %v902 = vadd.f32 0.0, %v901
      %v903 = vpop.f32.mrf.mxu0
      %v904 = vadd.f32 0.0, %v903
      %905 = vmatmul.bf16.gmra.mxu0 %v486
      %v906 = vpop.f32.mrf.mxu0
      %v907 = vadd.f32 0.0, %v906
      %v908 = vpop.f32.mrf.mxu0
      %v909 = vadd.f32 0.0, %v908
      %910 = vmatmul.bf16.gmra.mxu0 %v488
      %v911 = vpop.f32.mrf.mxu0
      %v912 = vadd.f32 0.0, %v911
      %v913 = vpop.f32.mrf.mxu0
      %v914 = vadd.f32 0.0, %v913
      %915 = vmatmul.bf16.gmra.mxu0 %v490
      %v916 = vpop.f32.mrf.mxu0
      %v917 = vadd.f32 0.0, %v916
      %v918 = vpop.f32.mrf.mxu0
      %v919 = vadd.f32 0.0, %v918
      %920 = vmatmul.bf16.gmra.mxu0 %v492
      %v921 = vpop.f32.mrf.mxu0
      %v922 = vadd.f32 0.0, %v921
      %v923 = vpop.f32.mrf.mxu0
      %v924 = vadd.f32 0.0, %v923
      %925 = vmatmul.bf16.gmra.mxu0 %v494
      %v926 = vpop.f32.mrf.mxu0
      %v927 = vadd.f32 0.0, %v926
      %v928 = vpop.f32.mrf.mxu0
      %v929 = vadd.f32 0.0, %v928
      %930 = vmatmul.bf16.gmra.mxu0 %v496
      %v931 = vpop.f32.mrf.mxu0
      %v932 = vadd.f32 0.0, %v931
      %v933 = vpop.f32.mrf.mxu0
      %v934 = vadd.f32 0.0, %v933
      %935 = vmatmul.bf16.gmra.mxu0 %v498
      %v936 = vpop.f32.mrf.mxu0
      %v937 = vadd.f32 0.0, %v936
      %v938 = vpop.f32.mrf.mxu0
      %v939 = vadd.f32 0.0, %v938
      %940 = vmatmul.bf16.gmra.mxu0 %v500
      %v941 = vpop.f32.mrf.mxu0
      %v942 = vadd.f32 0.0, %v941
      %v943 = vpop.f32.mrf.mxu0
      %v944 = vadd.f32 0.0, %v943
      %945 = vmatmul.bf16.gmra.mxu0 %v502
      %v946 = vpop.f32.mrf.mxu0
      %v947 = vadd.f32 0.0, %v946
      %v948 = vpop.f32.mrf.mxu0
      %v949 = vadd.f32 0.0, %v948
      %950 = vmatmul.bf16.gmra.mxu0 %v504
      %v951 = vpop.f32.mrf.mxu0
      %v952 = vadd.f32 0.0, %v951
      %v953 = vpop.f32.mrf.mxu0
      %v954 = vadd.f32 0.0, %v953
      %955 = vmatmul.bf16.gmra.mxu0 %v506
      %v956 = vpop.f32.mrf.mxu0
      %v957 = vadd.f32 0.0, %v956
      %v958 = vpop.f32.mrf.mxu0
      %v959 = vadd.f32 0.0, %v958
      %960 = vmatmul.bf16.gmra.mxu0 %v508
      %v961 = vpop.f32.mrf.mxu0
      %v962 = vadd.f32 0.0, %v961
      %v963 = vpop.f32.mrf.mxu0
      %v964 = vadd.f32 0.0, %v963
      %965 = vmatmul.bf16.gmra.mxu0 %v510
      %v966 = vpop.f32.mrf.mxu0
      %v967 = vadd.f32 0.0, %v966
      %v968 = vpop.f32.mrf.mxu0
      %v969 = vadd.f32 0.0, %v968
      %970 = vdwg.mxu0
      %971 = vmatpush.bf16.msra.mxu0 %v671
      %972 = vmatpush.bf16.msra.mxu0 %v669
      %973 = vmatpush.bf16.msra.mxu0 %v667
      %974 = vmatpush.bf16.msra.mxu0 %v665
      %975 = vmatpush.bf16.msra.mxu0 %v663
      %976 = vmatpush.bf16.msra.mxu0 %v661
      %977 = vmatpush.bf16.msra.mxu0 %v659
      %978 = vmatpush.bf16.msra.mxu0 %v657
      %979 = vmatmul.bf16.gmra.mxu0 %v481
      %v980 = vpop.f32.mrf.mxu0
      %v981 = vadd.f32 %v892, %v980
      %v982 = vpop.f32.mrf.mxu0
      %v983 = vadd.f32 %v894, %v982
      %984 = vmatmul.bf16.gmra.mxu0 %v483
      %v985 = vpop.f32.mrf.mxu0
      %v986 = vadd.f32 %v897, %v985
      %v987 = vpop.f32.mrf.mxu0
      %v988 = vadd.f32 %v899, %v987
      %989 = vmatmul.bf16.gmra.mxu0 %v485
      %v990 = vpop.f32.mrf.mxu0
      %v991 = vadd.f32 %v902, %v990
      %v992 = vpop.f32.mrf.mxu0
      %v993 = vadd.f32 %v904, %v992
      %994 = vmatmul.bf16.gmra.mxu0 %v487
      %v995 = vpop.f32.mrf.mxu0
      %v996 = vadd.f32 %v907, %v995
      %v997 = vpop.f32.mrf.mxu0
      %v998 = vadd.f32 %v909, %v997
      %999 = vmatmul.bf16.gmra.mxu0 %v489
      %v1000 = vpop.f32.mrf.mxu0
      %v1001 = vadd.f32 %v912, %v1000
      %v1002 = vpop.f32.mrf.mxu0
      %v1003 = vadd.f32 %v914, %v1002
      %1004 = vmatmul.bf16.gmra.mxu0 %v491
      %v1005 = vpop.f32.mrf.mxu0
      %v1006 = vadd.f32 %v917, %v1005
      %v1007 = vpop.f32.mrf.mxu0
      %v1008 = vadd.f32 %v919, %v1007
      %1009 = vmatmul.bf16.gmra.mxu0 %v493
      %v1010 = vpop.f32.mrf.mxu0
      %v1011 = vadd.f32 %v922, %v1010
      %v1012 = vpop.f32.mrf.mxu0
      %v1013 = vadd.f32 %v924, %v1012
      %1014 = vmatmul.bf16.gmra.mxu0 %v495
      %v1015 = vpop.f32.mrf.mxu0
      %v1016 = vadd.f32 %v927, %v1015
      %v1017 = vpop.f32.mrf.mxu0
      %v1018 = vadd.f32 %v929, %v1017
      %1019 = vmatmul.bf16.gmra.mxu0 %v497
      %v1020 = vpop.f32.mrf.mxu0
      %v1021 = vadd.f32 %v932, %v1020
      %v1022 = vpop.f32.mrf.mxu0
      %v1023 = vadd.f32 %v934, %v1022
      %1024 = vmatmul.bf16.gmra.mxu0 %v499
      %v1025 = vpop.f32.mrf.mxu0
      %v1026 = vadd.f32 %v937, %v1025
      %v1027 = vpop.f32.mrf.mxu0
      %v1028 = vadd.f32 %v939, %v1027
      %1029 = vmatmul.bf16.gmra.mxu0 %v501
      %v1030 = vpop.f32.mrf.mxu0
      %v1031 = vadd.f32 %v942, %v1030
      %v1032 = vpop.f32.mrf.mxu0
      %v1033 = vadd.f32 %v944, %v1032
      %1034 = vmatmul.bf16.gmra.mxu0 %v503
      %v1035 = vpop.f32.mrf.mxu0
      %v1036 = vadd.f32 %v947, %v1035
      %v1037 = vpop.f32.mrf.mxu0
      %v1038 = vadd.f32 %v949, %v1037
      %1039 = vmatmul.bf16.gmra.mxu0 %v505
      %v1040 = vpop.f32.mrf.mxu0
      %v1041 = vadd.f32 %v952, %v1040
      %v1042 = vpop.f32.mrf.mxu0
      %v1043 = vadd.f32 %v954, %v1042
      %1044 = vmatmul.bf16.gmra.mxu0 %v507
      %v1045 = vpop.f32.mrf.mxu0
      %v1046 = vadd.f32 %v957, %v1045
      %v1047 = vpop.f32.mrf.mxu0
      %v1048 = vadd.f32 %v959, %v1047
      %1049 = vmatmul.bf16.gmra.mxu0 %v509
      %v1050 = vpop.f32.mrf.mxu0
      %v1051 = vadd.f32 %v962, %v1050
      %v1052 = vpop.f32.mrf.mxu0
      %v1053 = vadd.f32 %v964, %v1052
      %1054 = vmatmul.bf16.gmra.mxu0 %v511
      %v1055 = vpop.f32.mrf.mxu0
      %v1056 = vadd.f32 %v967, %v1055
      %v1057 = vpop.f32.mrf.mxu0
      %v1058 = vadd.f32 %v969, %v1057
      %1059 = vdwg.mxu0
      %v1060 = vld [vmem:[%s297] sm:$0x3]
      %v1062 = vperm.slane %v1060, 0
      %v1063 = vperm.slane %v1060, 1
      %v1066 = vmul.f32 %v803, %v1062
      %v1067 = vmul.f32 %v981, %v1063
      %v1068 = vmul.f32 %v805, %v1062
      %v1069 = vmul.f32 %v983, %v1063
      %v1070 = vmul.f32 %v808, %v1062
      %v1071 = vmul.f32 %v986, %v1063
      %v1072 = vmul.f32 %v810, %v1062
      %v1073 = vmul.f32 %v988, %v1063
      %v1074 = vmul.f32 %v813, %v1062
      %v1075 = vmul.f32 %v991, %v1063
      %v1076 = vmul.f32 %v815, %v1062
      %v1077 = vmul.f32 %v993, %v1063
      %v1078 = vmul.f32 %v818, %v1062
      %v1079 = vmul.f32 %v996, %v1063
      %v1080 = vmul.f32 %v820, %v1062
      %v1081 = vmul.f32 %v998, %v1063
      %v1082 = vmul.f32 %v823, %v1062
      %v1083 = vmul.f32 %v1001, %v1063
      %v1084 = vmul.f32 %v825, %v1062
      %v1085 = vmul.f32 %v1003, %v1063
      %v1086 = vmul.f32 %v828, %v1062
      %v1087 = vmul.f32 %v1006, %v1063
      %v1088 = vmul.f32 %v830, %v1062
      %v1089 = vmul.f32 %v1008, %v1063
      %v1090 = vmul.f32 %v833, %v1062
      %v1091 = vmul.f32 %v1011, %v1063
      %v1092 = vmul.f32 %v835, %v1062
      %v1093 = vmul.f32 %v1013, %v1063
      %v1094 = vmul.f32 %v838, %v1062
      %v1095 = vmul.f32 %v1016, %v1063
      %v1096 = vmul.f32 %v840, %v1062
      %v1097 = vmul.f32 %v1018, %v1063
      %v1098 = vmul.f32 %v843, %v1062
      %v1099 = vmul.f32 %v1021, %v1063
      %v1100 = vmul.f32 %v845, %v1062
      %v1101 = vmul.f32 %v1023, %v1063
      %v1102 = vmul.f32 %v848, %v1062
      %v1103 = vmul.f32 %v1026, %v1063
      %v1104 = vmul.f32 %v850, %v1062
      %v1105 = vmul.f32 %v1028, %v1063
      %v1106 = vmul.f32 %v853, %v1062
      %v1107 = vmul.f32 %v1031, %v1063
      %v1108 = vmul.f32 %v855, %v1062
      %v1109 = vmul.f32 %v1033, %v1063
      %v1110 = vmul.f32 %v858, %v1062
      %v1111 = vmul.f32 %v1036, %v1063
      %v1112 = vmul.f32 %v860, %v1062
      %v1113 = vmul.f32 %v1038, %v1063
      %v1114 = vmul.f32 %v863, %v1062
      %v1115 = vmul.f32 %v1041, %v1063
      %v1116 = vmul.f32 %v865, %v1062
      %v1117 = vmul.f32 %v1043, %v1063
      %v1118 = vmul.f32 %v868, %v1062
      %v1119 = vmul.f32 %v1046, %v1063
      %v1120 = vmul.f32 %v870, %v1062
      %v1121 = vmul.f32 %v1048, %v1063
      %v1122 = vmul.f32 %v873, %v1062
      %v1123 = vmul.f32 %v1051, %v1063
      %v1124 = vmul.f32 %v875, %v1062
      %v1125 = vmul.f32 %v1053, %v1063
      %v1126 = vmul.f32 %v878, %v1062
      %v1127 = vmul.f32 %v1056, %v1063
      %v1128 = vmul.f32 %v880, %v1062
      %v1129 = vmul.f32 %v1058, %v1063
      %v1130 = vld [vmem:[%s302] sm:$0x3]
      %v1132 = vperm.slane %v1130, 0
      %v1133 = vperm.slane %v1130, 1
      %v1136 = vadd.f32 %v1066, %v1132
      %v1137 = vadd.f32 %v1067, %v1133
      %v1138 = vadd.f32 %v1068, %v1132
      %v1139 = vadd.f32 %v1069, %v1133
      %v1140 = vadd.f32 %v1070, %v1132
      %v1141 = vadd.f32 %v1071, %v1133
      %v1142 = vadd.f32 %v1072, %v1132
      %v1143 = vadd.f32 %v1073, %v1133
      %v1144 = vadd.f32 %v1074, %v1132
      %v1145 = vadd.f32 %v1075, %v1133
      %v1146 = vadd.f32 %v1076, %v1132
      %v1147 = vadd.f32 %v1077, %v1133
      %v1148 = vadd.f32 %v1078, %v1132
      %v1149 = vadd.f32 %v1079, %v1133
      %v1150 = vadd.f32 %v1080, %v1132
      %v1151 = vadd.f32 %v1081, %v1133
      %v1152 = vadd.f32 %v1082, %v1132
      %v1153 = vadd.f32 %v1083, %v1133
      %v1154 = vadd.f32 %v1084, %v1132
      %v1155 = vadd.f32 %v1085, %v1133
      %v1156 = vadd.f32 %v1086, %v1132
      %v1157 = vadd.f32 %v1087, %v1133
      %v1158 = vadd.f32 %v1088, %v1132
      %v1159 = vadd.f32 %v1089, %v1133
      %v1160 = vadd.f32 %v1090, %v1132
      %v1161 = vadd.f32 %v1091, %v1133
      %v1162 = vadd.f32 %v1092, %v1132
      %v1163 = vadd.f32 %v1093, %v1133
      %v1164 = vadd.f32 %v1094, %v1132
      %v1165 = vadd.f32 %v1095, %v1133
      %v1166 = vadd.f32 %v1096, %v1132
      %v1167 = vadd.f32 %v1097, %v1133
      %v1168 = vadd.f32 %v1098, %v1132
      %v1169 = vadd.f32 %v1099, %v1133
      %v1170 = vadd.f32 %v1100, %v1132
      %v1171 = vadd.f32 %v1101, %v1133
      %v1172 = vadd.f32 %v1102, %v1132
      %v1173 = vadd.f32 %v1103, %v1133
      %v1174 = vadd.f32 %v1104, %v1132
      %v1175 = vadd.f32 %v1105, %v1133
      %v1176 = vadd.f32 %v1106, %v1132
      %v1177 = vadd.f32 %v1107, %v1133
      %v1178 = vadd.f32 %v1108, %v1132
      %v1179 = vadd.f32 %v1109, %v1133
      %v1180 = vadd.f32 %v1110, %v1132
      %v1181 = vadd.f32 %v1111, %v1133
      %v1182 = vadd.f32 %v1112, %v1132
      %v1183 = vadd.f32 %v1113, %v1133
      %v1184 = vadd.f32 %v1114, %v1132
      %v1185 = vadd.f32 %v1115, %v1133
      %v1186 = vadd.f32 %v1116, %v1132
      %v1187 = vadd.f32 %v1117, %v1133
      %v1188 = vadd.f32 %v1118, %v1132
      %v1189 = vadd.f32 %v1119, %v1133
      %v1190 = vadd.f32 %v1120, %v1132
      %v1191 = vadd.f32 %v1121, %v1133
      %v1192 = vadd.f32 %v1122, %v1132
      %v1193 = vadd.f32 %v1123, %v1133
      %v1194 = vadd.f32 %v1124, %v1132
      %v1195 = vadd.f32 %v1125, %v1133
      %v1196 = vadd.f32 %v1126, %v1132
      %v1197 = vadd.f32 %v1127, %v1133
      %v1198 = vadd.f32 %v1128, %v1132
      %v1199 = vadd.f32 %v1129, %v1133
      %v1200 = vmax.f32 %v1136, 0.0
      %v1201 = vmax.f32 %v1137, 0.0
      %v1202 = vmax.f32 %v1138, 0.0
      %v1203 = vmax.f32 %v1139, 0.0
      %v1204 = vmax.f32 %v1140, 0.0
      %v1205 = vmax.f32 %v1141, 0.0
      %v1206 = vmax.f32 %v1142, 0.0
      %v1207 = vmax.f32 %v1143, 0.0
      %v1208 = vmax.f32 %v1144, 0.0
      %v1209 = vmax.f32 %v1145, 0.0
      %v1210 = vmax.f32 %v1146, 0.0
      %v1211 = vmax.f32 %v1147, 0.0
      %v1212 = vmax.f32 %v1148, 0.0
      %v1213 = vmax.f32 %v1149, 0.0
      %v1214 = vmax.f32 %v1150, 0.0
      %v1215 = vmax.f32 %v1151, 0.0
      %v1216 = vmax.f32 %v1152, 0.0
      %v1217 = vmax.f32 %v1153, 0.0
      %v1218 = vmax.f32 %v1154, 0.0
      %v1219 = vmax.f32 %v1155, 0.0
      %v1220 = vmax.f32 %v1156, 0.0
      %v1221 = vmax.f32 %v1157, 0.0
      %v1222 = vmax.f32 %v1158, 0.0
      %v1223 = vmax.f32 %v1159, 0.0
      %v1224 = vmax.f32 %v1160, 0.0
      %v1225 = vmax.f32 %v1161, 0.0
      %v1226 = vmax.f32 %v1162, 0.0
      %v1227 = vmax.f32 %v1163, 0.0
      %v1228 = vmax.f32 %v1164, 0.0
      %v1229 = vmax.f32 %v1165, 0.0
      %v1230 = vmax.f32 %v1166, 0.0
      %v1231 = vmax.f32 %v1167, 0.0
      %v1232 = vmax.f32 %v1168, 0.0
      %v1233 = vmax.f32 %v1169, 0.0
      %v1234 = vmax.f32 %v1170, 0.0
      %v1235 = vmax.f32 %v1171, 0.0
      %v1236 = vmax.f32 %v1172, 0.0
      %v1237 = vmax.f32 %v1173, 0.0
      %v1238 = vmax.f32 %v1174, 0.0
      %v1239 = vmax.f32 %v1175, 0.0
      %v1240 = vmax.f32 %v1176, 0.0
      %v1241 = vmax.f32 %v1177, 0.0
      %v1242 = vmax.f32 %v1178, 0.0
      %v1243 = vmax.f32 %v1179, 0.0
      %v1244 = vmax.f32 %v1180, 0.0
      %v1245 = vmax.f32 %v1181, 0.0
      %v1246 = vmax.f32 %v1182, 0.0
      %v1247 = vmax.f32 %v1183, 0.0
      %v1248 = vmax.f32 %v1184, 0.0
      %v1249 = vmax.f32 %v1185, 0.0
      %v1250 = vmax.f32 %v1186, 0.0
      %v1251 = vmax.f32 %v1187, 0.0
      %v1252 = vmax.f32 %v1188, 0.0
      %v1253 = vmax.f32 %v1189, 0.0
      %v1254 = vmax.f32 %v1190, 0.0
      %v1255 = vmax.f32 %v1191, 0.0
      %v1256 = vmax.f32 %v1192, 0.0
      %v1257 = vmax.f32 %v1193, 0.0
      %v1258 = vmax.f32 %v1194, 0.0
      %v1259 = vmax.f32 %v1195, 0.0
      %v1260 = vmax.f32 %v1196, 0.0
      %v1261 = vmax.f32 %v1197, 0.0
      %v1262 = vmax.f32 %v1198, 0.0
      %v1263 = vmax.f32 %v1199, 0.0
      %v1264 = vpack.c.bf16 %v1201, %v1200
      %v1265 = vpack.c.bf16 %v1203, %v1202
      %v1266 = vpack.c.bf16 %v1205, %v1204
      %v1267 = vpack.c.bf16 %v1207, %v1206
      %v1268 = vpack.c.bf16 %v1209, %v1208
      %v1269 = vpack.c.bf16 %v1211, %v1210
      %v1270 = vpack.c.bf16 %v1213, %v1212
      %v1271 = vpack.c.bf16 %v1215, %v1214
      %v1272 = vpack.c.bf16 %v1217, %v1216
      %v1273 = vpack.c.bf16 %v1219, %v1218
      %v1274 = vpack.c.bf16 %v1221, %v1220
      %v1275 = vpack.c.bf16 %v1223, %v1222
      %v1276 = vpack.c.bf16 %v1225, %v1224
      %v1277 = vpack.c.bf16 %v1227, %v1226
      %v1278 = vpack.c.bf16 %v1229, %v1228
      %v1279 = vpack.c.bf16 %v1231, %v1230
      %v1280 = vpack.c.bf16 %v1233, %v1232
      %v1281 = vpack.c.bf16 %v1235, %v1234
      %v1282 = vpack.c.bf16 %v1237, %v1236
      %v1283 = vpack.c.bf16 %v1239, %v1238
      %v1284 = vpack.c.bf16 %v1241, %v1240
      %v1285 = vpack.c.bf16 %v1243, %v1242
      %v1286 = vpack.c.bf16 %v1245, %v1244
      %v1287 = vpack.c.bf16 %v1247, %v1246
      %v1288 = vpack.c.bf16 %v1249, %v1248
      %v1289 = vpack.c.bf16 %v1251, %v1250
      %v1290 = vpack.c.bf16 %v1253, %v1252
      %v1291 = vpack.c.bf16 %v1255, %v1254
      %v1292 = vpack.c.bf16 %v1257, %v1256
      %v1293 = vpack.c.bf16 %v1259, %v1258
      %v1294 = vpack.c.bf16 %v1261, %v1260
      %v1295 = vpack.c.bf16 %v1263, %v1262
      %1296 = vst [vmem:[%s317] sm:$0xff] %v1264
      %1297 = vst [vmem:[%s317 + $0x8] sm:$0xff] %v1265
      %1298 = vst [vmem:[%s317 + $0x10] sm:$0xff] %v1266
      %1299 = vst [vmem:[%s317 + $0x18] sm:$0xff] %v1267
      %1300 = vst [vmem:[%s317 + $0x20] sm:$0xff] %v1268
      %1301 = vst [vmem:[%s317 + $0x28] sm:$0xff] %v1269
      %1302 = vst [vmem:[%s317 + $0x30] sm:$0xff] %v1270
      %1303 = vst [vmem:[%s317 + $0x38] sm:$0xff] %v1271
      %1304 = vst [vmem:[%s317 + $0x40] sm:$0xff] %v1272
      %1305 = vst [vmem:[%s317 + $0x48] sm:$0xff] %v1273
      %1306 = vst [vmem:[%s317 + $0x50] sm:$0xff] %v1274
      %1307 = vst [vmem:[%s317 + $0x58] sm:$0xff] %v1275
      %1308 = vst [vmem:[%s317 + $0x60] sm:$0xff] %v1276
      %1309 = vst [vmem:[%s317 + $0x68] sm:$0xff] %v1277
      %1310 = vst [vmem:[%s317 + $0x70] sm:$0xff] %v1278
      %1311 = vst [vmem:[%s317 + $0x78] sm:$0xff] %v1279
      %1312 = vst [vmem:[%s317 + $0x80] sm:$0xff] %v1280
      %1313 = vst [vmem:[%s317 + $0x88] sm:$0xff] %v1281
      %1314 = vst [vmem:[%s317 + $0x90] sm:$0xff] %v1282
      %1315 = vst [vmem:[%s317 + $0x98] sm:$0xff] %v1283
      %1316 = vst [vmem:[%s317 + $0xa0] sm:$0xff] %v1284
      %1317 = vst [vmem:[%s317 + $0xa8] sm:$0xff] %v1285
      %1318 = vst [vmem:[%s317 + $0xb0] sm:$0xff] %v1286
      %1319 = vst [vmem:[%s317 + $0xb8] sm:$0xff] %v1287
      %1320 = vst [vmem:[%s317 + $0xc0] sm:$0xff] %v1288
      %1321 = vst [vmem:[%s317 + $0xc8] sm:$0xff] %v1289
      %1322 = vst [vmem:[%s317 + $0xd0] sm:$0xff] %v1290
      %1323 = vst [vmem:[%s317 + $0xd8] sm:$0xff] %v1291
      %1324 = vst [vmem:[%s317 + $0xe0] sm:$0xff] %v1292
      %1325 = vst [vmem:[%s317 + $0xe8] sm:$0xff] %v1293
      %1326 = vst [vmem:[%s317 + $0xf0] sm:$0xff] %v1294
      %1327 = vst [vmem:[%s317 + $0xf8] sm:$0xff] %v1295
      %s1328 = smul.u32 32, %s21
      %s1329 = smul.u32 2, %s22
      %p1330 = scmp.lt.s32.totalorder %s20, 1
      %s1331 = scalar_select %p1330, %s20, 1
      %p1332 = scmp.lt.s32.totalorder %s1328, 31
      %s1333 = scalar_select %p1332, %s1328, 31
      %p1334 = scmp.lt.s32.totalorder %s1329, 1
      %s1335 = scalar_select %p1334, %s1329, 1
      %s1336 = smul.addr %s1333, 2
      %s1337 = sadd.s32 %s1335, %s1336
      %s1338 = smul.addr %s1331, 64
      %s1339 = sadd.s32 %s1337, %s1338
      %s1340 = smul.addr %s1339, 4
      %s1341 = scalar_lea.vmem %s4, %s1340
      // Predicated region
      $region37: #{aspp_forward.6} parent=35 // pred_check
        %p1342 = pneg %p162
      $region38: #{aspp_forward.6} parent=35 // pred_check_branch
        %1344 = sbr.rel (%p1342) target = $region40
      $region39: #{aspp_forward.6} parent=35 // pred_region
        %s1345 = smul.u32 32, %s21
        %s1346 = smul.u32 2, %s22
      $region40: #{aspp_forward.6} parent=35 // pred_fallthru
        _
    $region36: #{aspp_forward.6} parent=5 // pred_fallthru
      _
    %p1347 = scmp.le.s32.totalorder 2, %s10
    // Predicated region
    $region41: #{aspp_forward.6} parent=5 // pred_check
      %p1348 = pneg %p1347
    $region42: #{aspp_forward.6} parent=5 // pred_check_branch
      %1350 = sbr.rel (%p1348) target = $region44
    $region43: #{aspp_forward.6} parent=5 // pred_region
      %s1351 = ssub.s32 %s10, 2
      // Predicated region
      $region45: #{aspp_forward.6} parent=43 // pred_check
        %p1352 = pneg %p168
      $region46: #{aspp_forward.6} parent=43 // pred_check_branch
        %1354 = sbr.rel (%p1352) target = $region48
      $region47: #{aspp_forward.6} parent=43 // pred_region
        %s1355 = smul.u32 32, %s24
        %s1356 = smul.u32 2, %s25
        %p1357 = scmp.lt.s32.totalorder %s23, 1
        %s1358 = scalar_select %p1357, %s23, 1
        %p1359 = scmp.lt.s32.totalorder %s1355, 31
        %s1360 = scalar_select %p1359, %s1355, 31
        %p1361 = scmp.lt.s32.totalorder %s1356, 1
        %s1362 = scalar_select %p1361, %s1356, 1
        %s1363 = smul.addr %s1360, 2
        %s1364 = sadd.s32 %s1362, %s1363
        %s1365 = smul.addr %s1358, 64
        %s1366 = sadd.s32 %s1364, %s1365
        %s1367 = smul.addr %s1366, 4
        %s1368 = scalar_lea.vmem %s4, %s1367
      $region48: #{aspp_forward.6} parent=43 // pred_fallthru
        _
    $region44: #{aspp_forward.6} parent=5 // pred_fallthru
      _
  $region6: #{aspp_forward.6} parent=0 // loop_footer
    %s14 = sadd.s32 1, %s10
  $region7: #{aspp_forward.6} parent=0 // loop_footer_branch
    %9 = sbr.rel target = $region3
  $region8: #{aspp_forward.6} parent=0 // loop_exit
    _

// kernel: aspp_forward.9
$region0: #{aspp_forward.9}
  #allocation0 [shape = 'u32[]', space=smem, size = 0x4, offset = 0x4, fixed_abs, tag = 'smem constant byte address 0x4 - core index']
  #allocation1 [shape = 'u32[72,128]{1,0:T(1,128)}', space=vmem, size = 0x9000, scoped, tag = 'internal scratch']
  %s0 = inlined_call_operand.vmem [shape: bf16[2,256,256], index: 0, kind: input, shape index: {}]
  %s1 = inlined_call_operand.vmem [shape: bf16[2,256,256], index: 1, kind: input, shape index: {}]
  %s2 = inlined_call_operand.vmem [shape: bf16[2,256,256], index: 2, kind: input, shape index: {}]
  %s3 = inlined_call_operand.vmem [shape: bf16[2,256,256], index: 3, kind: input, shape index: {}]
  %s4 = inlined_call_operand.vmem [shape: bf16[1024,256], index: 4, kind: input, shape index: {}]
  %s5 = inlined_call_operand.vmem [shape: f32[1,256], index: 5, kind: input, shape index: {}]
  %s6 = inlined_call_operand.vmem [shape: f32[1,256], index: 6, kind: input, shape index: {}]
  %s7 = inlined_call_operand.vmem [shape: f32[2,1,256], index: 7, kind: input, shape index: {}]
  %s8 = inlined_call_operand.hbm [shape: f32[2,256,256], index: 8, kind: output, shape index: {}]
  %s9 = sld [smem:[#allocation0]]
  $region65: #{aspp_forward.9} parent=0
    _
  %s11 = ssub.s32 1, %s9
  %s12 = scalar_select 0, %s11, %s9
  $region1: #{aspp_forward.9} parent=0
    #allocation2 [shape = 'u8[524288]{0}', space=vmem, size = 0x80000, scoped, tag = 'output window, operand 0']
    #allocation3 [shape = 's32[2]{0}', space=sflag, size = 0x8, scoped, tag = 'scoped memory for aspp_forward.9']
    %13 = vsyncpa [#allocation3], 0
    %s14 = scalar_lea.sflag [#allocation3], 1
    %15 = vsyncpa %s14, 0
    loop: start=0, step=1, limit=4
    $region2: #{aspp_forward.9} parent=1 // loop_pre_header
      _
    $region3: #{aspp_forward.9} parent=1 // loop_header
      %s17 = sphi 0, %s21
      %p18 = scmp.ge.s32.totalorder %s17, 4
      %s24 = sphi 0, %s43
      %s25 = sphi 0, %s39
      %s26 = sphi 0, %s35
      %s27 = sphi 0, %s24
      %s28 = sphi 0, %s25
      %s29 = sphi 0, %s26
      %s30 = sphi 0, %s27
      %s31 = sphi 0, %s28
      %s32 = sphi 0, %s29
      %s48 = sphi 0, %s50
      %s51 = sphi 0, %s48
      %s52 = sphi 0, %s51
      %s68 = sphi 0, %s52
      %s76 = sphi 0, %s78
      %s79 = sphi 0, %s76
      %s80 = sphi 0, %s79
      %s96 = sphi 0, %s80
      %s104 = sphi 0, %s106
      %s107 = sphi 0, %s104
      %s108 = sphi 0, %s107
      %s124 = sphi 0, %s108
      %s132 = sphi 0, %s134
      %s135 = sphi 0, %s132
      %s136 = sphi 0, %s135
      %s152 = sphi 0, %s136
      %s158 = sphi 0, %s160
      %s161 = sphi 0, %s158
      %s162 = sphi 0, %s161
      %s178 = sphi 0, %s162
      %s184 = sphi 0, %s186
      %s187 = sphi 0, %s184
      %s188 = sphi 0, %s187
      %s204 = sphi 0, %s188
      %s210 = sphi 0, %s212
      %s213 = sphi 0, %s210
      %s214 = sphi 0, %s213
      %s230 = sphi 0, %s214
      %s238 = sphi 0, %s240
      %s241 = sphi 0, %s238
      %s242 = sphi 0, %s241
      %s258 = sphi 0, %s242
      %s268 = sphi 0, %s270
      %s271 = sphi 0, %s268
      %s272 = sphi 0, %s271
      %s288 = sphi 0, %s272
    $region4: #{aspp_forward.9} parent=1 // loop_header_branch
      %20 = sbr.rel (%p18) target = $region8
    $region5: #{aspp_forward.9} parent=1 // loop_body
      %s22 = ssub.s32 %s17, 1
      %s23 = ssub.s32 %s17, 2
      %s33 = sadd.s32 1, %s26
      %p34 = scmp.ge.s32.totalorder %s33, 1
      %s35 = scalar_select %p34, 0, %s33
      %s36 = sadd.s32 1, %s25
      %s37 = scalar_select %p34, %s36, %s25
      %p38 = scmp.ge.s32.totalorder %s37, 1
      %s39 = scalar_select %p38, 0, %s37
      %s40 = sadd.s32 1, %s24
      %s41 = scalar_select %p38, %s40, %s24
      %p42 = scmp.ge.s32.totalorder %s41, 2
      %s43 = scalar_select %p42, 0, %s41
      %s44 = ssub.s32 %s24, %s43
      %s45 = ssub.s32 %s25, %s39
      %s46 = sor.u32 %s44, %s45
      %p47 = scmp.eq.s32.totalorder %s46, 0
      %s49 = sadd.s32 %s48, 1
      %s50 = scalar_select %p47, %s48, %s49
      %p53 = pneg %p47
      %p54 = scmp.eq.s32.totalorder %s17, 1
      %p55 = por %p53, %p54
      %p56 = scmp.ne.s32.totalorder %s48, %s51
      %p57 = scmp.eq.s32.totalorder %s17, 0
      %p58 = por %p56, %p57
      %p59 = scmp.ne.s32.totalorder %s48, %s51
      %p60 = scmp.eq.s32.totalorder %s22, 1
      %p61 = por %p59, %p60
      %p62 = scmp.ne.s32.totalorder %s51, %s52
      %p63 = scmp.eq.s32.totalorder %s22, 0
      %p64 = por %p62, %p63
      %p65 = scmp.ne.s32.totalorder %s51, %s52
      %p66 = scmp.eq.s32.totalorder %s23, 1
      %p67 = por %p65, %p66
      %p69 = scmp.ne.s32.totalorder %s52, %s68
      %p70 = scmp.eq.s32.totalorder %s23, 0
      %p71 = por %p69, %p70
      %s72 = ssub.s32 %s24, %s43
      %s73 = ssub.s32 %s25, %s39
      %s74 = sor.u32 %s72, %s73
      %p75 = scmp.eq.s32.totalorder %s74, 0
      %s77 = sadd.s32 %s76, 1
      %s78 = scalar_select %p75, %s76, %s77
      %p81 = pneg %p75
      %p82 = scmp.eq.s32.totalorder %s17, 1
      %p83 = por %p81, %p82
      %p84 = scmp.ne.s32.totalorder %s76, %s79
      %p85 = scmp.eq.s32.totalorder %s17, 0
      %p86 = por %p84, %p85
      %p87 = scmp.ne.s32.totalorder %s76, %s79
      %p88 = scmp.eq.s32.totalorder %s22, 1
      %p89 = por %p87, %p88
      %p90 = scmp.ne.s32.totalorder %s79, %s80
      %p91 = scmp.eq.s32.totalorder %s22, 0
      %p92 = por %p90, %p91
      %p93 = scmp.ne.s32.totalorder %s79, %s80
      %p94 = scmp.eq.s32.totalorder %s23, 1
      %p95 = por %p93, %p94
      %p97 = scmp.ne.s32.totalorder %s80, %s96
      %p98 = scmp.eq.s32.totalorder %s23, 0
      %p99 = por %p97, %p98
      %s100 = ssub.s32 %s24, %s43
      %s101 = ssub.s32 %s25, %s39
      %s102 = sor.u32 %s100, %s101
      %p103 = scmp.eq.s32.totalorder %s102, 0
      %s105 = sadd.s32 %s104, 1
      %s106 = scalar_select %p103, %s104, %s105
      %p109 = pneg %p103
      %p110 = scmp.eq.s32.totalorder %s17, 1
      %p111 = por %p109, %p110
      %p112 = scmp.ne.s32.totalorder %s104, %s107
      %p113 = scmp.eq.s32.totalorder %s17, 0
      %p114 = por %p112, %p113
      %p115 = scmp.ne.s32.totalorder %s104, %s107
      %p116 = scmp.eq.s32.totalorder %s22, 1
      %p117 = por %p115, %p116
      %p118 = scmp.ne.s32.totalorder %s107, %s108
      %p119 = scmp.eq.s32.totalorder %s22, 0
      %p120 = por %p118, %p119
      %p121 = scmp.ne.s32.totalorder %s107, %s108
      %p122 = scmp.eq.s32.totalorder %s23, 1
      %p123 = por %p121, %p122
      %p125 = scmp.ne.s32.totalorder %s108, %s124
      %p126 = scmp.eq.s32.totalorder %s23, 0
      %p127 = por %p125, %p126
      %s128 = ssub.s32 %s24, %s43
      %s129 = ssub.s32 %s25, %s39
      %s130 = sor.u32 %s128, %s129
      %p131 = scmp.eq.s32.totalorder %s130, 0
      %s133 = sadd.s32 %s132, 1
      %s134 = scalar_select %p131, %s132, %s133
      %p137 = pneg %p131
      %p138 = scmp.eq.s32.totalorder %s17, 1
      %p139 = por %p137, %p138
      %p140 = scmp.ne.s32.totalorder %s132, %s135
      %p141 = scmp.eq.s32.totalorder %s17, 0
      %p142 = por %p140, %p141
      %p143 = scmp.ne.s32.totalorder %s132, %s135
      %p144 = scmp.eq.s32.totalorder %s22, 1
      %p145 = por %p143, %p144
      %p146 = scmp.ne.s32.totalorder %s135, %s136
      %p147 = scmp.eq.s32.totalorder %s22, 0
      %p148 = por %p146, %p147
      %p149 = scmp.ne.s32.totalorder %s135, %s136
      %p150 = scmp.eq.s32.totalorder %s23, 1
      %p151 = por %p149, %p150
      %p153 = scmp.ne.s32.totalorder %s136, %s152
      %p154 = scmp.eq.s32.totalorder %s23, 0
      %p155 = por %p153, %p154
      %s156 = ssub.s32 %s26, %s35
      %p157 = scmp.eq.s32.totalorder %s156, 0
      %s159 = sadd.s32 %s158, 1
      %s160 = scalar_select %p157, %s158, %s159
      %p163 = pneg %p157
      %p164 = scmp.eq.s32.totalorder %s17, 1
      %p165 = por %p163, %p164
      %p166 = scmp.ne.s32.totalorder %s158, %s161
      %p167 = scmp.eq.s32.totalorder %s17, 0
      %p168 = por %p166, %p167
      %p169 = scmp.ne.s32.totalorder %s158, %s161
      %p170 = scmp.eq.s32.totalorder %s22, 1
      %p171 = por %p169, %p170
      %p172 = scmp.ne.s32.totalorder %s161, %s162
      %p173 = scmp.eq.s32.totalorder %s22, 0
      %p174 = por %p172, %p173
      %p175 = scmp.ne.s32.totalorder %s161, %s162
      %p176 = scmp.eq.s32.totalorder %s23, 1
      %p177 = por %p175, %p176
      %p179 = scmp.ne.s32.totalorder %s162, %s178
      %p180 = scmp.eq.s32.totalorder %s23, 0
      %p181 = por %p179, %p180
      %s182 = ssub.s32 %s26, %s35
      %p183 = scmp.eq.s32.totalorder %s182, 0
      %s185 = sadd.s32 %s184, 1
      %s186 = scalar_select %p183, %s184, %s185
      %p189 = pneg %p183
      %p190 = scmp.eq.s32.totalorder %s17, 1
      %p191 = por %p189, %p190
      %p192 = scmp.ne.s32.totalorder %s184, %s187
      %p193 = scmp.eq.s32.totalorder %s17, 0
      %p194 = por %p192, %p193
      %p195 = scmp.ne.s32.totalorder %s184, %s187
      %p196 = scmp.eq.s32.totalorder %s22, 1
      %p197 = por %p195, %p196
      %p198 = scmp.ne.s32.totalorder %s187, %s188
      %p199 = scmp.eq.s32.totalorder %s22, 0
      %p200 = por %p198, %p199
      %p201 = scmp.ne.s32.totalorder %s187, %s188
      %p202 = scmp.eq.s32.totalorder %s23, 1
      %p203 = por %p201, %p202
      %p205 = scmp.ne.s32.totalorder %s188, %s204
      %p206 = scmp.eq.s32.totalorder %s23, 0
      %p207 = por %p205, %p206
      %s208 = ssub.s32 %s26, %s35
      %p209 = scmp.eq.s32.totalorder %s208, 0
      %s211 = sadd.s32 %s210, 1
      %s212 = scalar_select %p209, %s210, %s211
      %p215 = pneg %p209
      %p216 = scmp.eq.s32.totalorder %s17, 1
      %p217 = por %p215, %p216
      %p218 = scmp.ne.s32.totalorder %s210, %s213
      %p219 = scmp.eq.s32.totalorder %s17, 0
      %p220 = por %p218, %p219
      %p221 = scmp.ne.s32.totalorder %s210, %s213
      %p222 = scmp.eq.s32.totalorder %s22, 1
      %p223 = por %p221, %p222
      %p224 = scmp.ne.s32.totalorder %s213, %s214
      %p225 = scmp.eq.s32.totalorder %s22, 0
      %p226 = por %p224, %p225
      %p227 = scmp.ne.s32.totalorder %s213, %s214
      %p228 = scmp.eq.s32.totalorder %s23, 1
      %p229 = por %p227, %p228
      %p231 = scmp.ne.s32.totalorder %s214, %s230
      %p232 = scmp.eq.s32.totalorder %s23, 0
      %p233 = por %p231, %p232
      %s234 = ssub.s32 %s24, %s43
      %s235 = ssub.s32 %s26, %s35
      %s236 = sor.u32 %s234, %s235
      %p237 = scmp.eq.s32.totalorder %s236, 0
      %s239 = sadd.s32 %s238, 1
      %s240 = scalar_select %p237, %s238, %s239
      %p243 = pneg %p237
      %p244 = scmp.eq.s32.totalorder %s17, 1
      %p245 = por %p243, %p244
      %p246 = scmp.ne.s32.totalorder %s238, %s241
      %p247 = scmp.eq.s32.totalorder %s17, 0
      %p248 = por %p246, %p247
      %p249 = scmp.ne.s32.totalorder %s238, %s241
      %p250 = scmp.eq.s32.totalorder %s22, 1
      %p251 = por %p249, %p250
      %p252 = scmp.ne.s32.totalorder %s241, %s242
      %p253 = scmp.eq.s32.totalorder %s22, 0
      %p254 = por %p252, %p253
      %p255 = scmp.ne.s32.totalorder %s241, %s242
      %p256 = scmp.eq.s32.totalorder %s23, 1
      %p257 = por %p255, %p256
      %p259 = scmp.ne.s32.totalorder %s242, %s258
      %p260 = scmp.eq.s32.totalorder %s23, 0
      %p261 = por %p259, %p260
      %s262 = ssub.s32 %s24, %s43
      %s263 = ssub.s32 %s25, %s39
      %s264 = sor.u32 %s262, %s263
      %s265 = ssub.s32 %s26, %s35
      %s266 = sor.u32 %s264, %s265
      %p267 = scmp.eq.s32.totalorder %s266, 0
      %s269 = sadd.s32 %s268, 1
      %s270 = scalar_select %p267, %s268, %s269
      %p273 = pneg %p267
      %p274 = scmp.eq.s32.totalorder %s17, 1
      %p275 = por %p273, %p274
      %p276 = scmp.ne.s32.totalorder %s268, %s271
      %p277 = scmp.eq.s32.totalorder %s17, 0
      %p278 = por %p276, %p277
      %p279 = scmp.ne.s32.totalorder %s268, %s271
      %p280 = scmp.eq.s32.totalorder %s22, 1
      %p281 = por %p279, %p280
      %p282 = scmp.ne.s32.totalorder %s271, %s272
      %p283 = scmp.eq.s32.totalorder %s22, 0
      %p284 = por %p282, %p283
      %p285 = scmp.ne.s32.totalorder %s271, %s272
      %p286 = scmp.eq.s32.totalorder %s23, 1
      %p287 = por %p285, %p286
      %p289 = scmp.ne.s32.totalorder %s272, %s288
      %p290 = scmp.eq.s32.totalorder %s23, 0
      %p291 = por %p289, %p290
      %p292 = scmp.le.s32.totalorder 1, %s17
      %p293 = scmp.lt.s32.totalorder %s17, 3
      %p294 = pnand %p292, %p293
      %p295 = pneg %p294
      // Predicated region
      $region9: #{aspp_forward.9} parent=5 // pred_check
        _
      $region10: #{aspp_forward.9} parent=5 // pred_check_branch
        %297 = sbr.rel (%p294) target = $region12
      $region11: #{aspp_forward.9} parent=5 // pred_region
        %s298 = ssub.s32 %s17, 1
        // Predicated region
        $region13: #{aspp_forward.9} parent=11 // pred_check
          %p299 = pneg %p174
        $region14: #{aspp_forward.9} parent=11 // pred_check_branch
          %301 = sbr.rel (%p299) target = $region16
        $region15: #{aspp_forward.9} parent=11 // pred_region
          %s302 = smul.u32 2, %s29
          %p303 = scmp.lt.s32.totalorder %s302, 1
          %s304 = scalar_select %p303, %s302, 1
          %s305 = smul.addr %s304, 4
          %s306 = scalar_lea.vmem %s4, %s305
          %s307 = smul.u32 2, %s29
        $region16: #{aspp_forward.9} parent=11 // pred_fallthru
          _
        // Predicated region
        $region17: #{aspp_forward.9} parent=11 // pred_check
          %p308 = pneg %p200
        $region18: #{aspp_forward.9} parent=11 // pred_check_branch
          %310 = sbr.rel (%p308) target = $region20
        $region19: #{aspp_forward.9} parent=11 // pred_region
          %s311 = smul.u32 2, %s29
          %p312 = scmp.lt.s32.totalorder %s311, 1
          %s313 = scalar_select %p312, %s311, 1
          %s314 = scalar_lea.vmem %s5, %s313
          %s315 = smul.u32 2, %s29
        $region20: #{aspp_forward.9} parent=11 // pred_fallthru
          _
        // Predicated region
        $region21: #{aspp_forward.9} parent=11 // pred_check
          %p316 = pneg %p226
        $region22: #{aspp_forward.9} parent=11 // pred_check_branch
          %318 = sbr.rel (%p316) target = $region24
        $region23: #{aspp_forward.9} parent=11 // pred_region
          %s319 = smul.u32 2, %s29
          %p320 = scmp.lt.s32.totalorder %s319, 1
          %s321 = scalar_select %p320, %s319, 1
          %s322 = scalar_lea.vmem %s6, %s321
          %s323 = smul.u32 2, %s29
        $region24: #{aspp_forward.9} parent=11 // pred_fallthru
          _
      $region12: #{aspp_forward.9} parent=5 // pred_fallthru
        _
      %p324 = scmp.lt.s32.totalorder %s17, 2
      // Predicated region
      $region25: #{aspp_forward.9} parent=5 // pred_check
        %p325 = pneg %p324
      $region26: #{aspp_forward.9} parent=5 // pred_check_branch
        %327 = sbr.rel (%p325) target = $region28
      $region27: #{aspp_forward.9} parent=5 // pred_region
        // Predicated region
        $region29: #{aspp_forward.9} parent=27 // pred_check
          %p328 = pneg %p58
        $region30: #{aspp_forward.9} parent=27 // pred_check_branch
          %330 = sbr.rel (%p328) target = $region32
        $region31: #{aspp_forward.9} parent=27 // pred_region
          %s331 = smul.u32 32, %s25
          %p332 = scmp.lt.s32.totalorder %s24, 1
          %s333 = scalar_select %p332, %s24, 1
          %p334 = scmp.lt.s32.totalorder %s331, 31
          %s335 = scalar_select %p334, %s331, 31
          %s336 = smul.addr %s335, 2
          %s337 = smul.addr %s333, 64
          %s338 = sadd.s32 %s336, %s337
          %s339 = smul.addr %s338, 4
          %s340 = scalar_lea.vmem %s0, %s339
          %s341 = smul.u32 32, %s25
        $region32: #{aspp_forward.9} parent=27 // pred_fallthru
          _
        // Predicated region
        $region33: #{aspp_forward.9} parent=27 // pred_check
          %p342 = pneg %p86
        $region34: #{aspp_forward.9} parent=27 // pred_check_branch
          %344 = sbr.rel (%p342) target = $region36
        $region35: #{aspp_forward.9} parent=27 // pred_region
          %s345 = smul.u32 32, %s25
          %p346 = scmp.lt.s32.totalorder %s24, 1
          %s347 = scalar_select %p346, %s24, 1
          %p348 = scmp.lt.s32.totalorder %s345, 31
          %s349 = scalar_select %p348, %s345, 31
          %s350 = smul.addr %s349, 2
          %s351 = smul.addr %s347, 64
          %s352 = sadd.s32 %s350, %s351
          %s353 = smul.addr %s352, 4
          %s354 = scalar_lea.vmem %s1, %s353
          %s355 = smul.u32 32, %s25
        $region36: #{aspp_forward.9} parent=27 // pred_fallthru
          _
        // Predicated region
        $region37: #{aspp_forward.9} parent=27 // pred_check
          %p356 = pneg %p114
        $region38: #{aspp_forward.9} parent=27 // pred_check_branch
          %358 = sbr.rel (%p356) target = $region40
        $region39: #{aspp_forward.9} parent=27 // pred_region
          %s359 = smul.u32 32, %s25
          %p360 = scmp.lt.s32.totalorder %s24, 1
          %s361 = scalar_select %p360, %s24, 1
          %p362 = scmp.lt.s32.totalorder %s359, 31
          %s363 = scalar_select %p362, %s359, 31
          %s364 = smul.addr %s363, 2
          %s365 = smul.addr %s361, 64
          %s366 = sadd.s32 %s364, %s365
          %s367 = smul.addr %s366, 4
          %s368 = scalar_lea.vmem %s2, %s367
          %s369 = smul.u32 32, %s25
        $region40: #{aspp_forward.9} parent=27 // pred_fallthru
          _
        // Predicated region
        $region41: #{aspp_forward.9} parent=27 // pred_check
          %p370 = pneg %p142
        $region42: #{aspp_forward.9} parent=27 // pred_check_branch
          %372 = sbr.rel (%p370) target = $region44
        $region43: #{aspp_forward.9} parent=27 // pred_region
          %s373 = smul.u32 32, %s25
          %p374 = scmp.lt.s32.totalorder %s24, 1
          %s375 = scalar_select %p374, %s24, 1
          %p376 = scmp.lt.s32.totalorder %s373, 31
          %s377 = scalar_select %p376, %s373, 31
          %s378 = smul.addr %s377, 2
          %s379 = smul.addr %s375, 64
          %s380 = sadd.s32 %s378, %s379
          %s381 = smul.addr %s380, 4
          %s382 = scalar_lea.vmem %s3, %s381
          %s383 = smul.u32 32, %s25
        $region44: #{aspp_forward.9} parent=27 // pred_fallthru
          _
        // Predicated region
        $region45: #{aspp_forward.9} parent=27 // pred_check
          %p384 = pneg %p248
        $region46: #{aspp_forward.9} parent=27 // pred_check_branch
          %386 = sbr.rel (%p384) target = $region48
        $region47: #{aspp_forward.9} parent=27 // pred_region
          %s387 = smul.u32 2, %s26
          %p388 = scmp.lt.s32.totalorder %s24, 1
          %s389 = scalar_select %p388, %s24, 1
          %p390 = scmp.lt.s32.totalorder %s387, 1
          %s391 = scalar_select %p390, %s387, 1
          %s392 = smul.addr %s389, 2
          %s393 = sadd.s32 %s391, %s392
          %s394 = scalar_lea.vmem %s7, %s393
          %s395 = smul.u32 2, %s26
        $region48: #{aspp_forward.9} parent=27 // pred_fallthru
          _
      $region28: #{aspp_forward.9} parent=5 // pred_fallthru
        _
      %p396 = scmp.le.s32.totalorder 1, %s17
      %p397 = scmp.lt.s32.totalorder %s17, 3
      %p398 = pnand %p396, %p397
      %p399 = pneg %p398
      // Predicated region
      $region49: #{aspp_forward.9} parent=5 // pred_check
        _
      $region50: #{aspp_forward.9} parent=5 // pred_check_branch
        %401 = sbr.rel (%p398) target = $region52
      $region51: #{aspp_forward.9} parent=5 // pred_region
        %s402 = ssub.s32 %s17, 1
        %s403 = smul.u32 32, %s28
        %p404 = scmp.lt.s32.totalorder %s27, 1
        %s405 = scalar_select %p404, %s27, 1
        %p406 = scmp.lt.s32.totalorder %s403, 31
        %s407 = scalar_select %p406, %s403, 31
        %s408 = smul.addr %s407, 2
        %s409 = smul.addr %s405, 64
        %s410 = sadd.s32 %s408, %s409
        %s411 = smul.addr %s410, 4
        %s412 = scalar_lea.vmem %s0, %s411
        %p413 = pneg %p64
        %p414 = pneg %p61
        %s415 = smul.u32 32, %s28
        %p416 = scmp.lt.s32.totalorder %s27, 1
        %s417 = scalar_select %p416, %s27, 1
        %p418 = scmp.lt.s32.totalorder %s415, 31
        %s419 = scalar_select %p418, %s415, 31
        %s420 = smul.addr %s419, 2
        %s421 = smul.addr %s417, 64
        %s422 = sadd.s32 %s420, %s421
        %s423 = smul.addr %s422, 4
        %s424 = scalar_lea.vmem %s1, %s423
        %p425 = pneg %p92
        %p426 = pneg %p89
        %s427 = smul.u32 32, %s28
        %p428 = scmp.lt.s32.totalorder %s27, 1
        %s429 = scalar_select %p428, %s27, 1
        %p430 = scmp.lt.s32.totalorder %s427, 31
        %s431 = scalar_select %p430, %s427, 31
        %s432 = smul.addr %s431, 2
        %s433 = smul.addr %s429, 64
        %s434 = sadd.s32 %s432, %s433
        %s435 = smul.addr %s434, 4
        %s436 = scalar_lea.vmem %s2, %s435
        %p437 = pneg %p120
        %p438 = pneg %p117
        %s439 = smul.u32 32, %s28
        %p440 = scmp.lt.s32.totalorder %s27, 1
        %s441 = scalar_select %p440, %s27, 1
        %p442 = scmp.lt.s32.totalorder %s439, 31
        %s443 = scalar_select %p442, %s439, 31
        %s444 = smul.addr %s443, 2
        %s445 = smul.addr %s441, 64
        %s446 = sadd.s32 %s444, %s445
        %s447 = smul.addr %s446, 4
        %s448 = scalar_lea.vmem %s3, %s447
        %p449 = pneg %p148
        %p450 = pneg %p145
        %s451 = smul.u32 2, %s29
        %p452 = scmp.lt.s32.totalorder %s451, 1
        %s453 = scalar_select %p452, %s451, 1
        %s454 = smul.addr %s453, 4
        %s455 = scalar_lea.vmem %s4, %s454
        %p456 = pneg %p174
        %p457 = pneg %p171
        %s458 = smul.u32 2, %s29
        %p459 = scmp.lt.s32.totalorder %s458, 1
        %s460 = scalar_select %p459, %s458, 1
        %s461 = scalar_lea.vmem %s5, %s460
        %p462 = pneg %p200
        %p463 = pneg %p197
        %s464 = smul.u32 2, %s29
        %p465 = scmp.lt.s32.totalorder %s464, 1
        %s466 = scalar_select %p465, %s464, 1
        %s467 = scalar_lea.vmem %s6, %s466
        %p468 = pneg %p226
        %p469 = pneg %p223
        %s470 = smul.u32 2, %s29
        %p471 = scmp.lt.s32.totalorder %s27, 1
        %s472 = scalar_select %p471, %s27, 1
        %p473 = scmp.lt.s32.totalorder %s470, 1
        %s474 = scalar_select %p473, %s470, 1
        %s475 = smul.addr %s472, 2
        %s476 = sadd.s32 %s474, %s475
        %s477 = scalar_lea.vmem %s7, %s476
        %p478 = pneg %p254
        %p479 = pneg %p251
        %p480 = pneg %p284
        %p481 = pneg %p281
        %s482 = sand.u32 %s271, 1
        %s483 = scalar_lea.sflag [#allocation3], %s482
        %s484 = sand.u32 %s271, 1
        %s485 = smul.addr %s484, 512
        %s486 = scalar_lea.vmem [#allocation2], %s485
        %s487 = smul.u32 32, %s28
        %p488 = scmp.lt.s32.totalorder %s27, 1
        %s489 = scalar_select %p488, %s27, 1
        %p490 = scmp.lt.s32.totalorder %s487, 31
        %s491 = scalar_select %p490, %s487, 31
        %s492 = smul.addr %s491, 2
        %s493 = smul.addr %s489, 64
        %s494 = sadd.s32 %s492, %s493
        %s495 = smul.addr %s494, 4
        %s496 = scalar_lea.vmem %s0, %s495
        %s497 = smul.u32 32, %s28
        %s498 = smul.u32 32, %s28
        %p499 = scmp.lt.s32.totalorder %s27, 1
        %s500 = scalar_select %p499, %s27, 1
        %p501 = scmp.lt.s32.totalorder %s498, 31
        %s502 = scalar_select %p501, %s498, 31
        %s503 = smul.addr %s502, 2
        %s504 = smul.addr %s500, 64
        %s505 = sadd.s32 %s503, %s504
        %s506 = smul.addr %s505, 4
        %s507 = scalar_lea.vmem %s1, %s506
        %s508 = smul.u32 32, %s28
        %s509 = smul.u32 32, %s28
        %p510 = scmp.lt.s32.totalorder %s27, 1
        %s511 = scalar_select %p510, %s27, 1
        %p512 = scmp.lt.s32.totalorder %s509, 31
        %s513 = scalar_select %p512, %s509, 31
        %s514 = smul.addr %s513, 2
        %s515 = smul.addr %s511, 64
        %s516 = sadd.s32 %s514, %s515
        %s517 = smul.addr %s516, 4
        %s518 = scalar_lea.vmem %s2, %s517
        %s519 = smul.u32 32, %s28
        %s520 = smul.u32 32, %s28
        %p521 = scmp.lt.s32.totalorder %s27, 1
        %s522 = scalar_select %p521, %s27, 1
        %p523 = scmp.lt.s32.totalorder %s520, 31
        %s524 = scalar_select %p523, %s520, 31
        %s525 = smul.addr %s524, 2
        %s526 = smul.addr %s522, 64
        %s527 = sadd.s32 %s525, %s526
        %s528 = smul.addr %s527, 4
        %s529 = scalar_lea.vmem %s3, %s528
        %s530 = smul.u32 32, %s28
        %s531 = smul.u32 2, %s29
        %p532 = scmp.lt.s32.totalorder %s531, 1
        %s533 = scalar_select %p532, %s531, 1
        %s534 = smul.addr %s533, 4
        %s535 = scalar_lea.vmem %s4, %s534
        %s536 = smul.u32 2, %s29
        %s537 = smul.u32 2, %s29
        %p538 = scmp.lt.s32.totalorder %s537, 1
        %s539 = scalar_select %p538, %s537, 1
        %s540 = scalar_lea.vmem %s5, %s539
        %s541 = smul.u32 2, %s29
        %s542 = smul.u32 2, %s29
        %p543 = scmp.lt.s32.totalorder %s542, 1
        %s544 = scalar_select %p543, %s542, 1
        %s545 = scalar_lea.vmem %s6, %s544
        %s546 = smul.u32 2, %s29
        %s547 = smul.u32 2, %s29
        %p548 = scmp.lt.s32.totalorder %s27, 1
        %s549 = scalar_select %p548, %s27, 1
        %p550 = scmp.lt.s32.totalorder %s547, 1
        %s551 = scalar_select %p550, %s547, 1
        %s552 = smul.addr %s549, 2
        %s553 = sadd.s32 %s551, %s552
        %s554 = scalar_lea.vmem %s7, %s553
        %s555 = smul.u32 2, %s29
        %s556 = smul.u32 32, %s28
        %s557 = smul.u32 2, %s29
        %v558 = vld [vmem:[%s496] sm:$0xff]
        %v559 = vld [vmem:[%s496 + $0x8] sm:$0xff]
        %v560 = vld [vmem:[%s496 + $0x10] sm:$0xff]
        %v561 = vld [vmem:[%s496 + $0x18] sm:$0xff]
        %v562 = vld [vmem:[%s496 + $0x20] sm:$0xff]
        %v563 = vld [vmem:[%s496 + $0x28] sm:$0xff]
        %v564 = vld [vmem:[%s496 + $0x30] sm:$0xff]
        %v565 = vld [vmem:[%s496 + $0x38] sm:$0xff]
        %v566 = vld [vmem:[%s496 + $0x40] sm:$0xff]
        %v567 = vld [vmem:[%s496 + $0x48] sm:$0xff]
        %v568 = vld [vmem:[%s496 + $0x50] sm:$0xff]
        %v569 = vld [vmem:[%s496 + $0x58] sm:$0xff]
        %v570 = vld [vmem:[%s496 + $0x60] sm:$0xff]
        %v571 = vld [vmem:[%s496 + $0x68] sm:$0xff]
        %v572 = vld [vmem:[%s496 + $0x70] sm:$0xff]
        %v573 = vld [vmem:[%s496 + $0x78] sm:$0xff]
        %v574 = vld [vmem:[%s496 + $0x80] sm:$0xff]
        %v575 = vld [vmem:[%s496 + $0x88] sm:$0xff]
        %v576 = vld [vmem:[%s496 + $0x90] sm:$0xff]
        %v577 = vld [vmem:[%s496 + $0x98] sm:$0xff]
        %v578 = vld [vmem:[%s496 + $0xa0] sm:$0xff]
        %v579 = vld [vmem:[%s496 + $0xa8] sm:$0xff]
        %v580 = vld [vmem:[%s496 + $0xb0] sm:$0xff]
        %v581 = vld [vmem:[%s496 + $0xb8] sm:$0xff]
        %v582 = vld [vmem:[%s496 + $0xc0] sm:$0xff]
        %v583 = vld [vmem:[%s496 + $0xc8] sm:$0xff]
        %v584 = vld [vmem:[%s496 + $0xd0] sm:$0xff]
        %v585 = vld [vmem:[%s496 + $0xd8] sm:$0xff]
        %v586 = vld [vmem:[%s496 + $0xe0] sm:$0xff]
        %v587 = vld [vmem:[%s496 + $0xe8] sm:$0xff]
        %v588 = vld [vmem:[%s496 + $0xf0] sm:$0xff]
        %v589 = vld [vmem:[%s496 + $0xf8] sm:$0xff]
        %v590 = vld [vmem:[%s535] sm:$0xff]
        %v591 = vld [vmem:[%s535 + $0x8] sm:$0xff]
        %v592 = vld [vmem:[%s535 + $0x10] sm:$0xff]
        %v593 = vld [vmem:[%s535 + $0x18] sm:$0xff]
        %v594 = vld [vmem:[%s535 + $0x20] sm:$0xff]
        %v595 = vld [vmem:[%s535 + $0x28] sm:$0xff]
        %v596 = vld [vmem:[%s535 + $0x30] sm:$0xff]
        %v597 = vld [vmem:[%s535 + $0x38] sm:$0xff]
        %v598 = vld [vmem:[%s535 + $0x40] sm:$0xff]
        %v599 = vld [vmem:[%s535 + $0x48] sm:$0xff]
        %v600 = vld [vmem:[%s535 + $0x50] sm:$0xff]
        %v601 = vld [vmem:[%s535 + $0x58] sm:$0xff]
        %v602 = vld [vmem:[%s535 + $0x60] sm:$0xff]
        %v603 = vld [vmem:[%s535 + $0x68] sm:$0xff]
        %v604 = vld [vmem:[%s535 + $0x70] sm:$0xff]
        %v605 = vld [vmem:[%s535 + $0x78] sm:$0xff]
        %v606 = vld [vmem:[%s535 + $0x80] sm:$0xff]
        %v607 = vld [vmem:[%s535 + $0x88] sm:$0xff]
        %v608 = vld [vmem:[%s535 + $0x90] sm:$0xff]
        %v609 = vld [vmem:[%s535 + $0x98] sm:$0xff]
        %v610 = vld [vmem:[%s535 + $0xa0] sm:$0xff]
        %v611 = vld [vmem:[%s535 + $0xa8] sm:$0xff]
        %v612 = vld [vmem:[%s535 + $0xb0] sm:$0xff]
        %v613 = vld [vmem:[%s535 + $0xb8] sm:$0xff]
        %v614 = vld [vmem:[%s535 + $0xc0] sm:$0xff]
        %v615 = vld [vmem:[%s535 + $0xc8] sm:$0xff]
        %v616 = vld [vmem:[%s535 + $0xd0] sm:$0xff]
        %v617 = vld [vmem:[%s535 + $0xd8] sm:$0xff]
        %v618 = vld [vmem:[%s535 + $0xe0] sm:$0xff]
        %v619 = vld [vmem:[%s535 + $0xe8] sm:$0xff]
        %v620 = vld [vmem:[%s535 + $0xf0] sm:$0xff]
        %v621 = vld [vmem:[%s535 + $0xf8] sm:$0xff]
        %v622 = vld [vmem:[%s507] sm:$0xff]
        %v623 = vld [vmem:[%s507 + $0x8] sm:$0xff]
        %v624 = vld [vmem:[%s507 + $0x10] sm:$0xff]
        %v625 = vld [vmem:[%s507 + $0x18] sm:$0xff]
        %v626 = vld [vmem:[%s507 + $0x20] sm:$0xff]
        %v627 = vld [vmem:[%s507 + $0x28] sm:$0xff]
        %v628 = vld [vmem:[%s507 + $0x30] sm:$0xff]
        %v629 = vld [vmem:[%s507 + $0x38] sm:$0xff]
        %v630 = vld [vmem:[%s507 + $0x40] sm:$0xff]
        %v631 = vld [vmem:[%s507 + $0x48] sm:$0xff]
        %v632 = vld [vmem:[%s507 + $0x50] sm:$0xff]
        %v633 = vld [vmem:[%s507 + $0x58] sm:$0xff]
        %v634 = vld [vmem:[%s507 + $0x60] sm:$0xff]
        %v635 = vld [vmem:[%s507 + $0x68] sm:$0xff]
        %v636 = vld [vmem:[%s507 + $0x70] sm:$0xff]
        %v637 = vld [vmem:[%s507 + $0x78] sm:$0xff]
        %v638 = vld [vmem:[%s507 + $0x80] sm:$0xff]
        %v639 = vld [vmem:[%s507 + $0x88] sm:$0xff]
        %v640 = vld [vmem:[%s507 + $0x90] sm:$0xff]
        %v641 = vld [vmem:[%s507 + $0x98] sm:$0xff]
        %v642 = vld [vmem:[%s507 + $0xa0] sm:$0xff]
        %v643 = vld [vmem:[%s507 + $0xa8] sm:$0xff]
        %v644 = vld [vmem:[%s507 + $0xb0] sm:$0xff]
        %v645 = vld [vmem:[%s507 + $0xb8] sm:$0xff]
        %v646 = vld [vmem:[%s507 + $0xc0] sm:$0xff]
        %v647 = vld [vmem:[%s507 + $0xc8] sm:$0xff]
        %v648 = vld [vmem:[%s507 + $0xd0] sm:$0xff]
        %v649 = vld [vmem:[%s507 + $0xd8] sm:$0xff]
        %v650 = vld [vmem:[%s507 + $0xe0] sm:$0xff]
        %v651 = vld [vmem:[%s507 + $0xe8] sm:$0xff]
        %v652 = vld [vmem:[%s507 + $0xf0] sm:$0xff]
        %v653 = vld [vmem:[%s507 + $0xf8] sm:$0xff]
        %v654 = vld [vmem:[%s535 + $0x100] sm:$0xff]
        %v655 = vld [vmem:[%s535 + $0x108] sm:$0xff]
        %v656 = vld [vmem:[%s535 + $0x110] sm:$0xff]
        %v657 = vld [vmem:[%s535 + $0x118] sm:$0xff]
        %v658 = vld [vmem:[%s535 + $0x120] sm:$0xff]
        %v659 = vld [vmem:[%s535 + $0x128] sm:$0xff]
        %v660 = vld [vmem:[%s535 + $0x130] sm:$0xff]
        %v661 = vld [vmem:[%s535 + $0x138] sm:$0xff]
        %v662 = vld [vmem:[%s535 + $0x140] sm:$0xff]
        %v663 = vld [vmem:[%s535 + $0x148] sm:$0xff]
        %v664 = vld [vmem:[%s535 + $0x150] sm:$0xff]
        %v665 = vld [vmem:[%s535 + $0x158] sm:$0xff]
        %v666 = vld [vmem:[%s535 + $0x160] sm:$0xff]
        %v667 = vld [vmem:[%s535 + $0x168] sm:$0xff]
        %v668 = vld [vmem:[%s535 + $0x170] sm:$0xff]
        %v669 = vld [vmem:[%s535 + $0x178] sm:$0xff]
        %v670 = vld [vmem:[%s535 + $0x180] sm:$0xff]
        %v671 = vld [vmem:[%s535 + $0x188] sm:$0xff]
        %v672 = vld [vmem:[%s535 + $0x190] sm:$0xff]
        %v673 = vld [vmem:[%s535 + $0x198] sm:$0xff]
        %v674 = vld [vmem:[%s535 + $0x1a0] sm:$0xff]
        %v675 = vld [vmem:[%s535 + $0x1a8] sm:$0xff]
        %v676 = vld [vmem:[%s535 + $0x1b0] sm:$0xff]
        %v677 = vld [vmem:[%s535 + $0x1b8] sm:$0xff]
        %v678 = vld [vmem:[%s535 + $0x1c0] sm:$0xff]
        %v679 = vld [vmem:[%s535 + $0x1c8] sm:$0xff]
        %v680 = vld [vmem:[%s535 + $0x1d0] sm:$0xff]
        %v681 = vld [vmem:[%s535 + $0x1d8] sm:$0xff]
        %v682 = vld [vmem:[%s535 + $0x1e0] sm:$0xff]
        %v683 = vld [vmem:[%s535 + $0x1e8] sm:$0xff]
        %v684 = vld [vmem:[%s535 + $0x1f0] sm:$0xff]
        %v685 = vld [vmem:[%s535 + $0x1f8] sm:$0xff]
        %v718 = vunpack.c.l.b16 %v622
        %v719 = vunpack.c.h.b16 %v622
        %v720 = vunpack.c.l.b16 %v623
        %v721 = vunpack.c.h.b16 %v623
        %v722 = vunpack.c.l.b16 %v624
        %v723 = vunpack.c.h.b16 %v624
        %v724 = vunpack.c.l.b16 %v625
        %v725 = vunpack.c.h.b16 %v625
        %v726 = vunpack.c.l.b16 %v626
        %v727 = vunpack.c.h.b16 %v626
        %v728 = vunpack.c.l.b16 %v627
        %v729 = vunpack.c.h.b16 %v627
        %v730 = vunpack.c.l.b16 %v628
        %v731 = vunpack.c.h.b16 %v628
        %v732 = vunpack.c.l.b16 %v629
        %v733 = vunpack.c.h.b16 %v629
        %v734 = vunpack.c.l.b16 %v630
        %v735 = vunpack.c.h.b16 %v630
        %v736 = vunpack.c.l.b16 %v631
        %v737 = vunpack.c.h.b16 %v631
        %v738 = vunpack.c.l.b16 %v632
        %v739 = vunpack.c.h.b16 %v632
        %v740 = vunpack.c.l.b16 %v633
        %v741 = vunpack.c.h.b16 %v633
        %v742 = vunpack.c.l.b16 %v634
        %v743 = vunpack.c.h.b16 %v634
        %v744 = vunpack.c.l.b16 %v635
        %v745 = vunpack.c.h.b16 %v635
        %v746 = vunpack.c.l.b16 %v636
        %v747 = vunpack.c.h.b16 %v636
        %v748 = vunpack.c.l.b16 %v637
        %v749 = vunpack.c.h.b16 %v637
        %v750 = vunpack.c.l.b16 %v638
        %v751 = vunpack.c.h.b16 %v638
        %v752 = vunpack.c.l.b16 %v639
        %v753 = vunpack.c.h.b16 %v639
        %v754 = vunpack.c.l.b16 %v640
        %v755 = vunpack.c.h.b16 %v640
        %v756 = vunpack.c.l.b16 %v641
        %v757 = vunpack.c.h.b16 %v641
        %v758 = vunpack.c.l.b16 %v642
        %v759 = vunpack.c.h.b16 %v642
        %v760 = vunpack.c.l.b16 %v643
        %v761 = vunpack.c.h.b16 %v643
        %v762 = vunpack.c.l.b16 %v644
        %v763 = vunpack.c.h.b16 %v644
        %v764 = vunpack.c.l.b16 %v645
        %v765 = vunpack.c.h.b16 %v645
        %v766 = vunpack.c.l.b16 %v646
        %v767 = vunpack.c.h.b16 %v646
        %v768 = vunpack.c.l.b16 %v647
        %v769 = vunpack.c.h.b16 %v647
        %v770 = vunpack.c.l.b16 %v648
        %v771 = vunpack.c.h.b16 %v648
        %v772 = vunpack.c.l.b16 %v649
        %v773 = vunpack.c.h.b16 %v649
        %v774 = vunpack.c.l.b16 %v650
        %v775 = vunpack.c.h.b16 %v650
        %v776 = vunpack.c.l.b16 %v651
        %v777 = vunpack.c.h.b16 %v651
        %v778 = vunpack.c.l.b16 %v652
        %v779 = vunpack.c.h.b16 %v652
        %v780 = vunpack.c.l.b16 %v653
        %v781 = vunpack.c.h.b16 %v653
        %v782 = vpack.c.b16 %v720, %v718
        %v783 = vpack.c.b16 %v721, %v719
        %v784 = vpack.c.b16 %v724, %v722
        %v785 = vpack.c.b16 %v725, %v723
        %v786 = vpack.c.b16 %v728, %v726
        %v787 = vpack.c.b16 %v729, %v727
        %v788 = vpack.c.b16 %v732, %v730
        %v789 = vpack.c.b16 %v733, %v731
        %v790 = vpack.c.b16 %v736, %v734
        %v791 = vpack.c.b16 %v737, %v735
        %v792 = vpack.c.b16 %v740, %v738
        %v793 = vpack.c.b16 %v741, %v739
        %v794 = vpack.c.b16 %v744, %v742
        %v795 = vpack.c.b16 %v745, %v743
        %v796 = vpack.c.b16 %v748, %v746
        %v797 = vpack.c.b16 %v749, %v747
        %v798 = vpack.c.b16 %v752, %v750
        %v799 = vpack.c.b16 %v753, %v751
        %v800 = vpack.c.b16 %v756, %v754
        %v801 = vpack.c.b16 %v757, %v755
        %v802 = vpack.c.b16 %v760, %v758
        %v803 = vpack.c.b16 %v761, %v759
        %v804 = vpack.c.b16 %v764, %v762
        %v805 = vpack.c.b16 %v765, %v763
        %v806 = vpack.c.b16 %v768, %v766
        %v807 = vpack.c.b16 %v769, %v767
        %v808 = vpack.c.b16 %v772, %v770
        %v809 = vpack.c.b16 %v773, %v771
        %v810 = vpack.c.b16 %v776, %v774
        %v811 = vpack.c.b16 %v777, %v775
        %v812 = vpack.c.b16 %v780, %v778
        %v813 = vpack.c.b16 %v781, %v779
        %v878 = vunpack.c.l.b16 %v654
        %v879 = vunpack.c.h.b16 %v654
        %v880 = vunpack.c.l.b16 %v655
        %v881 = vunpack.c.h.b16 %v655
        %v882 = vunpack.c.l.b16 %v656
        %v883 = vunpack.c.h.b16 %v656
        %v884 = vunpack.c.l.b16 %v657
        %v885 = vunpack.c.h.b16 %v657
        %v886 = vunpack.c.l.b16 %v658
        %v887 = vunpack.c.h.b16 %v658
        %v888 = vunpack.c.l.b16 %v659
        %v889 = vunpack.c.h.b16 %v659
        %v890 = vunpack.c.l.b16 %v660
        %v891 = vunpack.c.h.b16 %v660
        %v892 = vunpack.c.l.b16 %v661
        %v893 = vunpack.c.h.b16 %v661
        %v894 = vunpack.c.l.b16 %v662
        %v895 = vunpack.c.h.b16 %v662
        %v896 = vunpack.c.l.b16 %v663
        %v897 = vunpack.c.h.b16 %v663
        %v898 = vunpack.c.l.b16 %v664
        %v899 = vunpack.c.h.b16 %v664
        %v900 = vunpack.c.l.b16 %v665
        %v901 = vunpack.c.h.b16 %v665
        %v902 = vunpack.c.l.b16 %v666
        %v903 = vunpack.c.h.b16 %v666
        %v904 = vunpack.c.l.b16 %v667
        %v905 = vunpack.c.h.b16 %v667
        %v906 = vunpack.c.l.b16 %v668
        %v907 = vunpack.c.h.b16 %v668
        %v908 = vunpack.c.l.b16 %v669
        %v909 = vunpack.c.h.b16 %v669
        %v910 = vunpack.c.l.b16 %v670
        %v911 = vunpack.c.h.b16 %v670
        %v912 = vunpack.c.l.b16 %v671
        %v913 = vunpack.c.h.b16 %v671
        %v914 = vunpack.c.l.b16 %v672
        %v915 = vunpack.c.h.b16 %v672
        %v916 = vunpack.c.l.b16 %v673
        %v917 = vunpack.c.h.b16 %v673
        %v918 = vunpack.c.l.b16 %v674
        %v919 = vunpack.c.h.b16 %v674
        %v920 = vunpack.c.l.b16 %v675
        %v921 = vunpack.c.h.b16 %v675
        %v922 = vunpack.c.l.b16 %v676
        %v923 = vunpack.c.h.b16 %v676
        %v924 = vunpack.c.l.b16 %v677
        %v925 = vunpack.c.h.b16 %v677
        %v926 = vunpack.c.l.b16 %v678
        %v927 = vunpack.c.h.b16 %v678
        %v928 = vunpack.c.l.b16 %v679
        %v929 = vunpack.c.h.b16 %v679
        %v930 = vunpack.c.l.b16 %v680
        %v931 = vunpack.c.h.b16 %v680
        %v932 = vunpack.c.l.b16 %v681
        %v933 = vunpack.c.h.b16 %v681
        %v934 = vunpack.c.l.b16 %v682
        %v935 = vunpack.c.h.b16 %v682
        %v936 = vunpack.c.l.b16 %v683
        %v937 = vunpack.c.h.b16 %v683
        %v938 = vunpack.c.l.b16 %v684
        %v939 = vunpack.c.h.b16 %v684
        %v940 = vunpack.c.l.b16 %v685
        %v941 = vunpack.c.h.b16 %v685
        %v942 = vpack.c.b16 %v880, %v878
        %v943 = vpack.c.b16 %v881, %v879
        %v944 = vpack.c.b16 %v884, %v882
        %v945 = vpack.c.b16 %v885, %v883
        %v946 = vpack.c.b16 %v888, %v886
        %v947 = vpack.c.b16 %v889, %v887
        %v948 = vpack.c.b16 %v892, %v890
        %v949 = vpack.c.b16 %v893, %v891
        %v950 = vpack.c.b16 %v896, %v894
        %v951 = vpack.c.b16 %v897, %v895
        %v952 = vpack.c.b16 %v900, %v898
        %v953 = vpack.c.b16 %v901, %v899
        %v954 = vpack.c.b16 %v904, %v902
        %v955 = vpack.c.b16 %v905, %v903
        %v956 = vpack.c.b16 %v908, %v906
        %v957 = vpack.c.b16 %v909, %v907
        %v958 = vpack.c.b16 %v912, %v910
        %v959 = vpack.c.b16 %v913, %v911
        %v960 = vpack.c.b16 %v916, %v914
        %v961 = vpack.c.b16 %v917, %v915
        %v962 = vpack.c.b16 %v920, %v918
        %v963 = vpack.c.b16 %v921, %v919
        %v964 = vpack.c.b16 %v924, %v922
        %v965 = vpack.c.b16 %v925, %v923
        %v966 = vpack.c.b16 %v928, %v926
        %v967 = vpack.c.b16 %v929, %v927
        %v968 = vpack.c.b16 %v932, %v930
        %v969 = vpack.c.b16 %v933, %v931
        %v970 = vpack.c.b16 %v936, %v934
        %v971 = vpack.c.b16 %v937, %v935
        %v972 = vpack.c.b16 %v940, %v938
        %v973 = vpack.c.b16 %v941, %v939
        %1006 = vmatpush.bf16.msra.mxu0 %v956
        %1007 = vmatpush.bf16.msra.mxu0 %v954
        %1008 = vmatpush.bf16.msra.mxu0 %v952
        %1009 = vmatpush.bf16.msra.mxu0 %v950
        %1010 = vmatpush.bf16.msra.mxu0 %v948
        %1011 = vmatpush.bf16.msra.mxu0 %v946
        %1012 = vmatpush.bf16.msra.mxu0 %v944
        %1013 = vmatpush.bf16.msra.mxu0 %v942
        %1014 = vmatmul.bf16.gmra.mxu0 %v782
        %v1015 = vpop.f32.mrf.mxu0
        %v1016 = vadd.f32 0.0, %v1015
        %v1017 = vpop.f32.mrf.mxu0
        %v1018 = vadd.f32 0.0, %v1017
        %1019 = vmatmul.bf16.gmra.mxu0 %v784
        %v1020 = vpop.f32.mrf.mxu0
        %v1021 = vadd.f32 0.0, %v1020
        %v1022 = vpop.f32.mrf.mxu0
        %v1023 = vadd.f32 0.0, %v1022
        %1024 = vmatmul.bf16.gmra.mxu0 %v786
        %v1025 = vpop.f32.mrf.mxu0
        %v1026 = vadd.f32 0.0, %v1025
        %v1027 = vpop.f32.mrf.mxu0
        %v1028 = vadd.f32 0.0, %v1027
        %1029 = vmatmul.bf16.gmra.mxu0 %v788
        %v1030 = vpop.f32.mrf.mxu0
        %v1031 = vadd.f32 0.0, %v1030
        %v1032 = vpop.f32.mrf.mxu0
        %v1033 = vadd.f32 0.0, %v1032
        %1034 = vmatmul.bf16.gmra.mxu0 %v790
        %v1035 = vpop.f32.mrf.mxu0
        %v1036 = vadd.f32 0.0, %v1035
        %v1037 = vpop.f32.mrf.mxu0
        %v1038 = vadd.f32 0.0, %v1037
        %1039 = vmatmul.bf16.gmra.mxu0 %v792
        %v1040 = vpop.f32.mrf.mxu0
        %v1041 = vadd.f32 0.0, %v1040
        %v1042 = vpop.f32.mrf.mxu0
        %v1043 = vadd.f32 0.0, %v1042
        %1044 = vmatmul.bf16.gmra.mxu0 %v794
        %v1045 = vpop.f32.mrf.mxu0
        %v1046 = vadd.f32 0.0, %v1045
        %v1047 = vpop.f32.mrf.mxu0
        %v1048 = vadd.f32 0.0, %v1047
        %1049 = vmatmul.bf16.gmra.mxu0 %v796
        %v1050 = vpop.f32.mrf.mxu0
        %v1051 = vadd.f32 0.0, %v1050
        %v1052 = vpop.f32.mrf.mxu0
        %v1053 = vadd.f32 0.0, %v1052
        %1054 = vmatmul.bf16.gmra.mxu0 %v798
        %v1055 = vpop.f32.mrf.mxu0
        %v1056 = vadd.f32 0.0, %v1055
        %v1057 = vpop.f32.mrf.mxu0
        %v1058 = vadd.f32 0.0, %v1057
        %1059 = vmatmul.bf16.gmra.mxu0 %v800
        %v1060 = vpop.f32.mrf.mxu0
        %v1061 = vadd.f32 0.0, %v1060
        %v1062 = vpop.f32.mrf.mxu0
        %v1063 = vadd.f32 0.0, %v1062
        %1064 = vmatmul.bf16.gmra.mxu0 %v802
        %v1065 = vpop.f32.mrf.mxu0
        %v1066 = vadd.f32 0.0, %v1065
        %v1067 = vpop.f32.mrf.mxu0
        %v1068 = vadd.f32 0.0, %v1067
        %1069 = vmatmul.bf16.gmra.mxu0 %v804
        %v1070 = vpop.f32.mrf.mxu0
        %v1071 = vadd.f32 0.0, %v1070
        %v1072 = vpop.f32.mrf.mxu0
        %v1073 = vadd.f32 0.0, %v1072
        %1074 = vmatmul.bf16.gmra.mxu0 %v806
        %v1075 = vpop.f32.mrf.mxu0
        %v1076 = vadd.f32 0.0, %v1075
        %v1077 = vpop.f32.mrf.mxu0
        %v1078 = vadd.f32 0.0, %v1077
        %1079 = vmatmul.bf16.gmra.mxu0 %v808
        %v1080 = vpop.f32.mrf.mxu0
        %v1081 = vadd.f32 0.0, %v1080
        %v1082 = vpop.f32.mrf.mxu0
        %v1083 = vadd.f32 0.0, %v1082
        %1084 = vmatmul.bf16.gmra.mxu0 %v810
        %v1085 = vpop.f32.mrf.mxu0
        %v1086 = vadd.f32 0.0, %v1085
        %v1087 = vpop.f32.mrf.mxu0
        %v1088 = vadd.f32 0.0, %v1087
        %1089 = vmatmul.bf16.gmra.mxu0 %v812
        %v1090 = vpop.f32.mrf.mxu0
        %v1091 = vadd.f32 0.0, %v1090
        %v1092 = vpop.f32.mrf.mxu0
        %v1093 = vadd.f32 0.0, %v1092
        %1094 = vdwg.mxu0
        %1095 = vmatpush.bf16.msra.mxu0 %v972
        %1096 = vmatpush.bf16.msra.mxu0 %v970
        %1097 = vmatpush.bf16.msra.mxu0 %v968
        %1098 = vmatpush.bf16.msra.mxu0 %v966
        %1099 = vmatpush.bf16.msra.mxu0 %v964
        %1100 = vmatpush.bf16.msra.mxu0 %v962
        %1101 = vmatpush.bf16.msra.mxu0 %v960
        %1102 = vmatpush.bf16.msra.mxu0 %v958
        %1103 = vmatmul.bf16.gmra.mxu0 %v783
        %v1104 = vpop.f32.mrf.mxu0
        %v1105 = vadd.f32 %v1016, %v1104
        %v1106 = vpop.f32.mrf.mxu0
        %v1107 = vadd.f32 %v1018, %v1106
        %1108 = vmatmul.bf16.gmra.mxu0 %v785
        %v1109 = vpop.f32.mrf.mxu0
        %v1110 = vadd.f32 %v1021, %v1109
        %v1111 = vpop.f32.mrf.mxu0
        %v1112 = vadd.f32 %v1023, %v1111
        %1113 = vmatmul.bf16.gmra.mxu0 %v787
        %v1114 = vpop.f32.mrf.mxu0
        %v1115 = vadd.f32 %v1026, %v1114
        %v1116 = vpop.f32.mrf.mxu0
        %v1117 = vadd.f32 %v1028, %v1116
        %1118 = vmatmul.bf16.gmra.mxu0 %v789
        %v1119 = vpop.f32.mrf.mxu0
        %v1120 = vadd.f32 %v1031, %v1119
        %v1121 = vpop.f32.mrf.mxu0
        %v1122 = vadd.f32 %v1033, %v1121
        %1123 = vmatmul.bf16.gmra.mxu0 %v791
        %v1124 = vpop.f32.mrf.mxu0
        %v1125 = vadd.f32 %v1036, %v1124
        %v1126 = vpop.f32.mrf.mxu0
        %v1127 = vadd.f32 %v1038, %v1126
        %1128 = vmatmul.bf16.gmra.mxu0 %v793
        %v1129 = vpop.f32.mrf.mxu0
        %v1130 = vadd.f32 %v1041, %v1129
        %v1131 = vpop.f32.mrf.mxu0
        %v1132 = vadd.f32 %v1043, %v1131
        %1133 = vmatmul.bf16.gmra.mxu0 %v795
        %v1134 = vpop.f32.mrf.mxu0
        %v1135 = vadd.f32 %v1046, %v1134
        %v1136 = vpop.f32.mrf.mxu0
        %v1137 = vadd.f32 %v1048, %v1136
        %1138 = vmatmul.bf16.gmra.mxu0 %v797
        %v1139 = vpop.f32.mrf.mxu0
        %v1140 = vadd.f32 %v1051, %v1139
        %v1141 = vpop.f32.mrf.mxu0
        %v1142 = vadd.f32 %v1053, %v1141
        %1143 = vmatmul.bf16.gmra.mxu0 %v799
        %v1144 = vpop.f32.mrf.mxu0
        %v1145 = vadd.f32 %v1056, %v1144
        %v1146 = vpop.f32.mrf.mxu0
        %v1147 = vadd.f32 %v1058, %v1146
        %1148 = vmatmul.bf16.gmra.mxu0 %v801
        %v1149 = vpop.f32.mrf.mxu0
        %v1150 = vadd.f32 %v1061, %v1149
        %v1151 = vpop.f32.mrf.mxu0
        %v1152 = vadd.f32 %v1063, %v1151
        %1153 = vmatmul.bf16.gmra.mxu0 %v803
        %v1154 = vpop.f32.mrf.mxu0
        %v1155 = vadd.f32 %v1066, %v1154
        %v1156 = vpop.f32.mrf.mxu0
        %v1157 = vadd.f32 %v1068, %v1156
        %1158 = vmatmul.bf16.gmra.mxu0 %v805
        %v1159 = vpop.f32.mrf.mxu0
        %v1160 = vadd.f32 %v1071, %v1159
        %v1161 = vpop.f32.mrf.mxu0
        %v1162 = vadd.f32 %v1073, %v1161
        %1163 = vmatmul.bf16.gmra.mxu0 %v807
        %v1164 = vpop.f32.mrf.mxu0
        %v1165 = vadd.f32 %v1076, %v1164
        %v1166 = vpop.f32.mrf.mxu0
        %v1167 = vadd.f32 %v1078, %v1166
        %1168 = vmatmul.bf16.gmra.mxu0 %v809
        %v1169 = vpop.f32.mrf.mxu0
        %v1170 = vadd.f32 %v1081, %v1169
        %v1171 = vpop.f32.mrf.mxu0
        %v1172 = vadd.f32 %v1083, %v1171
        %1173 = vmatmul.bf16.gmra.mxu0 %v811
        %v1174 = vpop.f32.mrf.mxu0
        %v1175 = vadd.f32 %v1086, %v1174
        %v1176 = vpop.f32.mrf.mxu0
        %v1177 = vadd.f32 %v1088, %v1176
        %1178 = vmatmul.bf16.gmra.mxu0 %v813
        %v1179 = vpop.f32.mrf.mxu0
        %v1180 = vadd.f32 %v1091, %v1179
        %v1181 = vpop.f32.mrf.mxu0
        %v1182 = vadd.f32 %v1093, %v1181
        %1183 = vdwg.mxu0
        %1184 = vmatpush.bf16.msra.mxu0 %v957
        %1185 = vmatpush.bf16.msra.mxu0 %v955
        %1186 = vmatpush.bf16.msra.mxu0 %v953
        %1187 = vmatpush.bf16.msra.mxu0 %v951
        %1188 = vmatpush.bf16.msra.mxu0 %v949
        %1189 = vmatpush.bf16.msra.mxu0 %v947
        %1190 = vmatpush.bf16.msra.mxu0 %v945
        %1191 = vmatpush.bf16.msra.mxu0 %v943
        %1192 = vmatmul.bf16.gmra.mxu0 %v782
        %v1193 = vpop.f32.mrf.mxu0
        %v1194 = vadd.f32 0.0, %v1193
        %v1195 = vpop.f32.mrf.mxu0
        %v1196 = vadd.f32 0.0, %v1195
        %1197 = vmatmul.bf16.gmra.mxu0 %v784
        %v1198 = vpop.f32.mrf.mxu0
        %v1199 = vadd.f32 0.0, %v1198
        %v1200 = vpop.f32.mrf.mxu0
        %v1201 = vadd.f32 0.0, %v1200
        %1202 = vmatmul.bf16.gmra.mxu0 %v786
        %v1203 = vpop.f32.mrf.mxu0
        %v1204 = vadd.f32 0.0, %v1203
        %v1205 = vpop.f32.mrf.mxu0
        %v1206 = vadd.f32 0.0, %v1205
        %1207 = vmatmul.bf16.gmra.mxu0 %v788
        %v1208 = vpop.f32.mrf.mxu0
        %v1209 = vadd.f32 0.0, %v1208
        %v1210 = vpop.f32.mrf.mxu0
        %v1211 = vadd.f32 0.0, %v1210
        %1212 = vmatmul.bf16.gmra.mxu0 %v790
        %v1213 = vpop.f32.mrf.mxu0
        %v1214 = vadd.f32 0.0, %v1213
        %v1215 = vpop.f32.mrf.mxu0
        %v1216 = vadd.f32 0.0, %v1215
        %1217 = vmatmul.bf16.gmra.mxu0 %v792
        %v1218 = vpop.f32.mrf.mxu0
        %v1219 = vadd.f32 0.0, %v1218
        %v1220 = vpop.f32.mrf.mxu0
        %v1221 = vadd.f32 0.0, %v1220
        %1222 = vmatmul.bf16.gmra.mxu0 %v794
        %v1223 = vpop.f32.mrf.mxu0
        %v1224 = vadd.f32 0.0, %v1223
        %v1225 = vpop.f32.mrf.mxu0
        %v1226 = vadd.f32 0.0, %v1225
        %1227 = vmatmul.bf16.gmra.mxu0 %v796
        %v1228 = vpop.f32.mrf.mxu0
        %v1229 = vadd.f32 0.0, %v1228
        %v1230 = vpop.f32.mrf.mxu0
        %v1231 = vadd.f32 0.0, %v1230
        %1232 = vmatmul.bf16.gmra.mxu0 %v798
        %v1233 = vpop.f32.mrf.mxu0
        %v1234 = vadd.f32 0.0, %v1233
        %v1235 = vpop.f32.mrf.mxu0
        %v1236 = vadd.f32 0.0, %v1235
        %1237 = vmatmul.bf16.gmra.mxu0 %v800
        %v1238 = vpop.f32.mrf.mxu0
        %v1239 = vadd.f32 0.0, %v1238
        %v1240 = vpop.f32.mrf.mxu0
        %v1241 = vadd.f32 0.0, %v1240
        %1242 = vmatmul.bf16.gmra.mxu0 %v802
        %v1243 = vpop.f32.mrf.mxu0
        %v1244 = vadd.f32 0.0, %v1243
        %v1245 = vpop.f32.mrf.mxu0
        %v1246 = vadd.f32 0.0, %v1245
        %1247 = vmatmul.bf16.gmra.mxu0 %v804
        %v1248 = vpop.f32.mrf.mxu0
        %v1249 = vadd.f32 0.0, %v1248
        %v1250 = vpop.f32.mrf.mxu0
        %v1251 = vadd.f32 0.0, %v1250
        %1252 = vmatmul.bf16.gmra.mxu0 %v806
        %v1253 = vpop.f32.mrf.mxu0
        %v1254 = vadd.f32 0.0, %v1253
        %v1255 = vpop.f32.mrf.mxu0
        %v1256 = vadd.f32 0.0, %v1255
        %1257 = vmatmul.bf16.gmra.mxu0 %v808
        %v1258 = vpop.f32.mrf.mxu0
        %v1259 = vadd.f32 0.0, %v1258
        %v1260 = vpop.f32.mrf.mxu0
        %v1261 = vadd.f32 0.0, %v1260
        %1262 = vmatmul.bf16.gmra.mxu0 %v810
        %v1263 = vpop.f32.mrf.mxu0
        %v1264 = vadd.f32 0.0, %v1263
        %v1265 = vpop.f32.mrf.mxu0
        %v1266 = vadd.f32 0.0, %v1265
        %1267 = vmatmul.bf16.gmra.mxu0 %v812
        %v1268 = vpop.f32.mrf.mxu0
        %v1269 = vadd.f32 0.0, %v1268
        %v1270 = vpop.f32.mrf.mxu0
        %v1271 = vadd.f32 0.0, %v1270
        %1272 = vdwg.mxu0
        %1273 = vmatpush.bf16.msra.mxu0 %v973
        %1274 = vmatpush.bf16.msra.mxu0 %v971
        %1275 = vmatpush.bf16.msra.mxu0 %v969
        %1276 = vmatpush.bf16.msra.mxu0 %v967
        %1277 = vmatpush.bf16.msra.mxu0 %v965
        %1278 = vmatpush.bf16.msra.mxu0 %v963
        %1279 = vmatpush.bf16.msra.mxu0 %v961
        %1280 = vmatpush.bf16.msra.mxu0 %v959
        %1281 = vmatmul.bf16.gmra.mxu0 %v783
        %v1282 = vpop.f32.mrf.mxu0
        %v1283 = vadd.f32 %v1194, %v1282
        %v1284 = vpop.f32.mrf.mxu0
        %v1285 = vadd.f32 %v1196, %v1284
        %1286 = vmatmul.bf16.gmra.mxu0 %v785
        %v1287 = vpop.f32.mrf.mxu0
        %v1288 = vadd.f32 %v1199, %v1287
        %v1289 = vpop.f32.mrf.mxu0
        %v1290 = vadd.f32 %v1201, %v1289
        %1291 = vmatmul.bf16.gmra.mxu0 %v787
        %v1292 = vpop.f32.mrf.mxu0
        %v1293 = vadd.f32 %v1204, %v1292
        %v1294 = vpop.f32.mrf.mxu0
        %v1295 = vadd.f32 %v1206, %v1294
        %1296 = vmatmul.bf16.gmra.mxu0 %v789
        %v1297 = vpop.f32.mrf.mxu0
        %v1298 = vadd.f32 %v1209, %v1297
        %v1299 = vpop.f32.mrf.mxu0
        %v1300 = vadd.f32 %v1211, %v1299
        %1301 = vmatmul.bf16.gmra.mxu0 %v791
        %v1302 = vpop.f32.mrf.mxu0
        %v1303 = vadd.f32 %v1214, %v1302
        %v1304 = vpop.f32.mrf.mxu0
        %v1305 = vadd.f32 %v1216, %v1304
        %1306 = vmatmul.bf16.gmra.mxu0 %v793
        %v1307 = vpop.f32.mrf.mxu0
        %v1308 = vadd.f32 %v1219, %v1307
        %v1309 = vpop.f32.mrf.mxu0
        %v1310 = vadd.f32 %v1221, %v1309
        %1311 = vmatmul.bf16.gmra.mxu0 %v795
        %v1312 = vpop.f32.mrf.mxu0
        %v1313 = vadd.f32 %v1224, %v1312
        %v1314 = vpop.f32.mrf.mxu0
        %v1315 = vadd.f32 %v1226, %v1314
        %1316 = vmatmul.bf16.gmra.mxu0 %v797
        %v1317 = vpop.f32.mrf.mxu0
        %v1318 = vadd.f32 %v1229, %v1317
        %v1319 = vpop.f32.mrf.mxu0
        %v1320 = vadd.f32 %v1231, %v1319
        %1321 = vmatmul.bf16.gmra.mxu0 %v799
        %v1322 = vpop.f32.mrf.mxu0
        %v1323 = vadd.f32 %v1234, %v1322
        %v1324 = vpop.f32.mrf.mxu0
        %v1325 = vadd.f32 %v1236, %v1324
        %1326 = vmatmul.bf16.gmra.mxu0 %v801
        %v1327 = vpop.f32.mrf.mxu0
        %v1328 = vadd.f32 %v1239, %v1327
        %v1329 = vpop.f32.mrf.mxu0
        %v1330 = vadd.f32 %v1241, %v1329
        %1331 = vmatmul.bf16.gmra.mxu0 %v803
        %v1332 = vpop.f32.mrf.mxu0
        %v1333 = vadd.f32 %v1244, %v1332
        %v1334 = vpop.f32.mrf.mxu0
        %v1335 = vadd.f32 %v1246, %v1334
        %1336 = vmatmul.bf16.gmra.mxu0 %v805
        %v1337 = vpop.f32.mrf.mxu0
        %v1338 = vadd.f32 %v1249, %v1337
        %v1339 = vpop.f32.mrf.mxu0
        %v1340 = vadd.f32 %v1251, %v1339
        %1341 = vmatmul.bf16.gmra.mxu0 %v807
        %v1342 = vpop.f32.mrf.mxu0
        %v1343 = vadd.f32 %v1254, %v1342
        %v1344 = vpop.f32.mrf.mxu0
        %v1345 = vadd.f32 %v1256, %v1344
        %1346 = vmatmul.bf16.gmra.mxu0 %v809
        %v1347 = vpop.f32.mrf.mxu0
        %v1348 = vadd.f32 %v1259, %v1347
        %v1349 = vpop.f32.mrf.mxu0
        %v1350 = vadd.f32 %v1261, %v1349
        %1351 = vmatmul.bf16.gmra.mxu0 %v811
        %v1352 = vpop.f32.mrf.mxu0
        %v1353 = vadd.f32 %v1264, %v1352
        %v1354 = vpop.f32.mrf.mxu0
        %v1355 = vadd.f32 %v1266, %v1354
        %1356 = vmatmul.bf16.gmra.mxu0 %v813
        %v1357 = vpop.f32.mrf.mxu0
        %v1358 = vadd.f32 %v1269, %v1357
        %v1359 = vpop.f32.mrf.mxu0
        %v1360 = vadd.f32 %v1271, %v1359
        %1361 = vdwg.mxu0
        %v1394 = vunpack.c.l.b16 %v558
        %v1395 = vunpack.c.h.b16 %v558
        %v1396 = vunpack.c.l.b16 %v559
        %v1397 = vunpack.c.h.b16 %v559
        %v1398 = vunpack.c.l.b16 %v560
        %v1399 = vunpack.c.h.b16 %v560
        %v1400 = vunpack.c.l.b16 %v561
        %v1401 = vunpack.c.h.b16 %v561
        %v1402 = vunpack.c.l.b16 %v562
        %v1403 = vunpack.c.h.b16 %v562
        %v1404 = vunpack.c.l.b16 %v563
        %v1405 = vunpack.c.h.b16 %v563
        %v1406 = vunpack.c.l.b16 %v564
        %v1407 = vunpack.c.h.b16 %v564
        %v1408 = vunpack.c.l.b16 %v565
        %v1409 = vunpack.c.h.b16 %v565
        %v1410 = vunpack.c.l.b16 %v566
        %v1411 = vunpack.c.h.b16 %v566
        %v1412 = vunpack.c.l.b16 %v567
        %v1413 = vunpack.c.h.b16 %v567
        %v1414 = vunpack.c.l.b16 %v568
        %v1415 = vunpack.c.h.b16 %v568
        %v1416 = vunpack.c.l.b16 %v569
        %v1417 = vunpack.c.h.b16 %v569
        %v1418 = vunpack.c.l.b16 %v570
        %v1419 = vunpack.c.h.b16 %v570
        %v1420 = vunpack.c.l.b16 %v571
        %v1421 = vunpack.c.h.b16 %v571
        %v1422 = vunpack.c.l.b16 %v572
        %v1423 = vunpack.c.h.b16 %v572
        %v1424 = vunpack.c.l.b16 %v573
        %v1425 = vunpack.c.h.b16 %v573
        %v1426 = vunpack.c.l.b16 %v574
        %v1427 = vunpack.c.h.b16 %v574
        %v1428 = vunpack.c.l.b16 %v575
        %v1429 = vunpack.c.h.b16 %v575
        %v1430 = vunpack.c.l.b16 %v576
        %v1431 = vunpack.c.h.b16 %v576
        %v1432 = vunpack.c.l.b16 %v577
        %v1433 = vunpack.c.h.b16 %v577
        %v1434 = vunpack.c.l.b16 %v578
        %v1435 = vunpack.c.h.b16 %v578
        %v1436 = vunpack.c.l.b16 %v579
        %v1437 = vunpack.c.h.b16 %v579
        %v1438 = vunpack.c.l.b16 %v580
        %v1439 = vunpack.c.h.b16 %v580
        %v1440 = vunpack.c.l.b16 %v581
        %v1441 = vunpack.c.h.b16 %v581
        %v1442 = vunpack.c.l.b16 %v582
        %v1443 = vunpack.c.h.b16 %v582
        %v1444 = vunpack.c.l.b16 %v583
        %v1445 = vunpack.c.h.b16 %v583
        %v1446 = vunpack.c.l.b16 %v584
        %v1447 = vunpack.c.h.b16 %v584
        %v1448 = vunpack.c.l.b16 %v585
        %v1449 = vunpack.c.h.b16 %v585
        %v1450 = vunpack.c.l.b16 %v586
        %v1451 = vunpack.c.h.b16 %v586
        %v1452 = vunpack.c.l.b16 %v587
        %v1453 = vunpack.c.h.b16 %v587
        %v1454 = vunpack.c.l.b16 %v588
        %v1455 = vunpack.c.h.b16 %v588
        %v1456 = vunpack.c.l.b16 %v589
        %v1457 = vunpack.c.h.b16 %v589
        %v1458 = vpack.c.b16 %v1396, %v1394
        %v1459 = vpack.c.b16 %v1397, %v1395
        %v1460 = vpack.c.b16 %v1400, %v1398
        %v1461 = vpack.c.b16 %v1401, %v1399
        %v1462 = vpack.c.b16 %v1404, %v1402
        %v1463 = vpack.c.b16 %v1405, %v1403
        %v1464 = vpack.c.b16 %v1408, %v1406
        %v1465 = vpack.c.b16 %v1409, %v1407
        %v1466 = vpack.c.b16 %v1412, %v1410
        %v1467 = vpack.c.b16 %v1413, %v1411
        %v1468 = vpack.c.b16 %v1416, %v1414
        %v1469 = vpack.c.b16 %v1417, %v1415
        %v1470 = vpack.c.b16 %v1420, %v1418
        %v1471 = vpack.c.b16 %v1421, %v1419
        %v1472 = vpack.c.b16 %v1424, %v1422
        %v1473 = vpack.c.b16 %v1425, %v1423
        %v1474 = vpack.c.b16 %v1428, %v1426
        %v1475 = vpack.c.b16 %v1429, %v1427
        %v1476 = vpack.c.b16 %v1432, %v1430
        %v1477 = vpack.c.b16 %v1433, %v1431
        %v1478 = vpack.c.b16 %v1436, %v1434
        %v1479 = vpack.c.b16 %v1437, %v1435
        %v1480 = vpack.c.b16 %v1440, %v1438
        %v1481 = vpack.c.b16 %v1441, %v1439
        %v1482 = vpack.c.b16 %v1444, %v1442
        %v1483 = vpack.c.b16 %v1445, %v1443
        %v1484 = vpack.c.b16 %v1448, %v1446
        %v1485 = vpack.c.b16 %v1449, %v1447
        %v1486 = vpack.c.b16 %v1452, %v1450
        %v1487 = vpack.c.b16 %v1453, %v1451
        %v1488 = vpack.c.b16 %v1456, %v1454
        %v1489 = vpack.c.b16 %v1457, %v1455
        %v1554 = vunpack.c.l.b16 %v590
        %v1555 = vunpack.c.h.b16 %v590
        %v1556 = vunpack.c.l.b16 %v591
        %v1557 = vunpack.c.h.b16 %v591
        %v1558 = vunpack.c.l.b16 %v592
        %v1559 = vunpack.c.h.b16 %v592
        %v1560 = vunpack.c.l.b16 %v593
        %v1561 = vunpack.c.h.b16 %v593
        %v1562 = vunpack.c.l.b16 %v594
        %v1563 = vunpack.c.h.b16 %v594
        %v1564 = vunpack.c.l.b16 %v595
        %v1565 = vunpack.c.h.b16 %v595
        %v1566 = vunpack.c.l.b16 %v596
        %v1567 = vunpack.c.h.b16 %v596
        %v1568 = vunpack.c.l.b16 %v597
        %v1569 = vunpack.c.h.b16 %v597
        %v1570 = vunpack.c.l.b16 %v598
        %v1571 = vunpack.c.h.b16 %v598
        %v1572 = vunpack.c.l.b16 %v599
        %v1573 = vunpack.c.h.b16 %v599
        %v1574 = vunpack.c.l.b16 %v600
        %v1575 = vunpack.c.h.b16 %v600
        %v1576 = vunpack.c.l.b16 %v601
        %v1577 = vunpack.c.h.b16 %v601
        %v1578 = vunpack.c.l.b16 %v602
        %v1579 = vunpack.c.h.b16 %v602
        %v1580 = vunpack.c.l.b16 %v603
        %v1581 = vunpack.c.h.b16 %v603
        %v1582 = vunpack.c.l.b16 %v604
        %v1583 = vunpack.c.h.b16 %v604
        %v1584 = vunpack.c.l.b16 %v605
        %v1585 = vunpack.c.h.b16 %v605
        %v1586 = vunpack.c.l.b16 %v606
        %v1587 = vunpack.c.h.b16 %v606
        %v1588 = vunpack.c.l.b16 %v607
        %v1589 = vunpack.c.h.b16 %v607
        %v1590 = vunpack.c.l.b16 %v608
        %v1591 = vunpack.c.h.b16 %v608
        %v1592 = vunpack.c.l.b16 %v609
        %v1593 = vunpack.c.h.b16 %v609
        %v1594 = vunpack.c.l.b16 %v610
        %v1595 = vunpack.c.h.b16 %v610
        %v1596 = vunpack.c.l.b16 %v611
        %v1597 = vunpack.c.h.b16 %v611
        %v1598 = vunpack.c.l.b16 %v612
        %v1599 = vunpack.c.h.b16 %v612
        %v1600 = vunpack.c.l.b16 %v613
        %v1601 = vunpack.c.h.b16 %v613
        %v1602 = vunpack.c.l.b16 %v614
        %v1603 = vunpack.c.h.b16 %v614
        %v1604 = vunpack.c.l.b16 %v615
        %v1605 = vunpack.c.h.b16 %v615
        %v1606 = vunpack.c.l.b16 %v616
        %v1607 = vunpack.c.h.b16 %v616
        %v1608 = vunpack.c.l.b16 %v617
        %v1609 = vunpack.c.h.b16 %v617
        %v1610 = vunpack.c.l.b16 %v618
        %v1611 = vunpack.c.h.b16 %v618
        %v1612 = vunpack.c.l.b16 %v619
        %v1613 = vunpack.c.h.b16 %v619
        %v1614 = vunpack.c.l.b16 %v620
        %v1615 = vunpack.c.h.b16 %v620
        %v1616 = vunpack.c.l.b16 %v621
        %v1617 = vunpack.c.h.b16 %v621
        %v1618 = vpack.c.b16 %v1556, %v1554
        %v1619 = vpack.c.b16 %v1557, %v1555
        %v1620 = vpack.c.b16 %v1560, %v1558
        %v1621 = vpack.c.b16 %v1561, %v1559
        %v1622 = vpack.c.b16 %v1564, %v1562
        %v1623 = vpack.c.b16 %v1565, %v1563
        %v1624 = vpack.c.b16 %v1568, %v1566
        %v1625 = vpack.c.b16 %v1569, %v1567
        %v1626 = vpack.c.b16 %v1572, %v1570
        %v1627 = vpack.c.b16 %v1573, %v1571
        %v1628 = vpack.c.b16 %v1576, %v1574
        %v1629 = vpack.c.b16 %v1577, %v1575
        %v1630 = vpack.c.b16 %v1580, %v1578
        %v1631 = vpack.c.b16 %v1581, %v1579
        %v1632 = vpack.c.b16 %v1584, %v1582
        %v1633 = vpack.c.b16 %v1585, %v1583
        %v1634 = vpack.c.b16 %v1588, %v1586
        %v1635 = vpack.c.b16 %v1589, %v1587
        %v1636 = vpack.c.b16 %v1592, %v1590
        %v1637 = vpack.c.b16 %v1593, %v1591
        %v1638 = vpack.c.b16 %v1596, %v1594
        %v1639 = vpack.c.b16 %v1597, %v1595
        %v1640 = vpack.c.b16 %v1600, %v1598
        %v1641 = vpack.c.b16 %v1601, %v1599
        %v1642 = vpack.c.b16 %v1604, %v1602
        %v1643 = vpack.c.b16 %v1605, %v1603
        %v1644 = vpack.c.b16 %v1608, %v1606
        %v1645 = vpack.c.b16 %v1609, %v1607
        %v1646 = vpack.c.b16 %v1612, %v1610
        %v1647 = vpack.c.b16 %v1613, %v1611
        %v1648 = vpack.c.b16 %v1616, %v1614
        %v1649 = vpack.c.b16 %v1617, %v1615
        %1682 = vmatpush.bf16.msra.mxu0 %v1632
        %1683 = vmatpush.bf16.msra.mxu0 %v1630
        %1684 = vmatpush.bf16.msra.mxu0 %v1628
        %1685 = vmatpush.bf16.msra.mxu0 %v1626
        %1686 = vmatpush.bf16.msra.mxu0 %v1624
        %1687 = vmatpush.bf16.msra.mxu0 %v1622
        %1688 = vmatpush.bf16.msra.mxu0 %v1620
        %1689 = vmatpush.bf16.msra.mxu0 %v1618
        %1690 = vmatmul.bf16.gmra.mxu0 %v1458
        %v1691 = vpop.f32.mrf.mxu0
        %v1692 = vadd.f32 %v1105, %v1691
        %v1693 = vpop.f32.mrf.mxu0
        %v1694 = vadd.f32 %v1107, %v1693
        %1695 = vmatmul.bf16.gmra.mxu0 %v1460
        %v1696 = vpop.f32.mrf.mxu0
        %v1697 = vadd.f32 %v1110, %v1696
        %v1698 = vpop.f32.mrf.mxu0
        %v1699 = vadd.f32 %v1112, %v1698
        %1700 = vmatmul.bf16.gmra.mxu0 %v1462
        %v1701 = vpop.f32.mrf.mxu0
        %v1702 = vadd.f32 %v1115, %v1701
        %v1703 = vpop.f32.mrf.mxu0
        %v1704 = vadd.f32 %v1117, %v1703
        %1705 = vmatmul.bf16.gmra.mxu0 %v1464
        %v1706 = vpop.f32.mrf.mxu0
        %v1707 = vadd.f32 %v1120, %v1706
        %v1708 = vpop.f32.mrf.mxu0
        %v1709 = vadd.f32 %v1122, %v1708
        %1710 = vmatmul.bf16.gmra.mxu0 %v1466
        %v1711 = vpop.f32.mrf.mxu0
        %v1712 = vadd.f32 %v1125, %v1711
        %v1713 = vpop.f32.mrf.mxu0
        %v1714 = vadd.f32 %v1127, %v1713
        %1715 = vmatmul.bf16.gmra.mxu0 %v1468
        %v1716 = vpop.f32.mrf.mxu0
        %v1717 = vadd.f32 %v1130, %v1716
        %v1718 = vpop.f32.mrf.mxu0
        %v1719 = vadd.f32 %v1132, %v1718
        %1720 = vmatmul.bf16.gmra.mxu0 %v1470
        %v1721 = vpop.f32.mrf.mxu0
        %v1722 = vadd.f32 %v1135, %v1721
        %v1723 = vpop.f32.mrf.mxu0
        %v1724 = vadd.f32 %v1137, %v1723
        %1725 = vmatmul.bf16.gmra.mxu0 %v1472
        %v1726 = vpop.f32.mrf.mxu0
        %v1727 = vadd.f32 %v1140, %v1726
        %v1728 = vpop.f32.mrf.mxu0
        %v1729 = vadd.f32 %v1142, %v1728
        %1730 = vmatmul.bf16.gmra.mxu0 %v1474
        %v1731 = vpop.f32.mrf.mxu0
        %v1732 = vadd.f32 %v1145, %v1731
        %v1733 = vpop.f32.mrf.mxu0
        %v1734 = vadd.f32 %v1147, %v1733
        %1735 = vmatmul.bf16.gmra.mxu0 %v1476
        %v1736 = vpop.f32.mrf.mxu0
        %v1737 = vadd.f32 %v1150, %v1736
        %v1738 = vpop.f32.mrf.mxu0
        %v1739 = vadd.f32 %v1152, %v1738
        %1740 = vmatmul.bf16.gmra.mxu0 %v1478
        %v1741 = vpop.f32.mrf.mxu0
        %v1742 = vadd.f32 %v1155, %v1741
        %v1743 = vpop.f32.mrf.mxu0
        %v1744 = vadd.f32 %v1157, %v1743
        %1745 = vmatmul.bf16.gmra.mxu0 %v1480
        %v1746 = vpop.f32.mrf.mxu0
        %v1747 = vadd.f32 %v1160, %v1746
        %v1748 = vpop.f32.mrf.mxu0
        %v1749 = vadd.f32 %v1162, %v1748
        %1750 = vmatmul.bf16.gmra.mxu0 %v1482
        %v1751 = vpop.f32.mrf.mxu0
        %v1752 = vadd.f32 %v1165, %v1751
        %v1753 = vpop.f32.mrf.mxu0
        %v1754 = vadd.f32 %v1167, %v1753
        %1755 = vmatmul.bf16.gmra.mxu0 %v1484
        %v1756 = vpop.f32.mrf.mxu0
        %v1757 = vadd.f32 %v1170, %v1756
        %v1758 = vpop.f32.mrf.mxu0
        %v1759 = vadd.f32 %v1172, %v1758
        %1760 = vmatmul.bf16.gmra.mxu0 %v1486
        %v1761 = vpop.f32.mrf.mxu0
        %v1762 = vadd.f32 %v1175, %v1761
        %v1763 = vpop.f32.mrf.mxu0
        %v1764 = vadd.f32 %v1177, %v1763
        %1765 = vmatmul.bf16.gmra.mxu0 %v1488
        %v1766 = vpop.f32.mrf.mxu0
        %v1767 = vadd.f32 %v1180, %v1766
        %v1768 = vpop.f32.mrf.mxu0
        %v1769 = vadd.f32 %v1182, %v1768
        %1770 = vdwg.mxu0
        %1771 = vmatpush.bf16.msra.mxu0 %v1648
        %1772 = vmatpush.bf16.msra.mxu0 %v1646
        %1773 = vmatpush.bf16.msra.mxu0 %v1644
        %1774 = vmatpush.bf16.msra.mxu0 %v1642
        %1775 = vmatpush.bf16.msra.mxu0 %v1640
        %1776 = vmatpush.bf16.msra.mxu0 %v1638
        %1777 = vmatpush.bf16.msra.mxu0 %v1636
        %1778 = vmatpush.bf16.msra.mxu0 %v1634
        %1779 = vmatmul.bf16.gmra.mxu0 %v1459
        %v1780 = vpop.f32.mrf.mxu0
        %v1781 = vadd.f32 %v1692, %v1780
        %v1782 = vpop.f32.mrf.mxu0
        %v1783 = vadd.f32 %v1694, %v1782
        %1784 = vmatmul.bf16.gmra.mxu0 %v1461
        %v1785 = vpop.f32.mrf.mxu0
        %v1786 = vadd.f32 %v1697, %v1785
        %v1787 = vpop.f32.mrf.mxu0
        %v1788 = vadd.f32 %v1699, %v1787
        %1789 = vmatmul.bf16.gmra.mxu0 %v1463
        %v1790 = vpop.f32.mrf.mxu0
        %v1791 = vadd.f32 %v1702, %v1790
        %v1792 = vpop.f32.mrf.mxu0
        %v1793 = vadd.f32 %v1704, %v1792
        %1794 = vmatmul.bf16.gmra.mxu0 %v1465
        %v1795 = vpop.f32.mrf.mxu0
        %v1796 = vadd.f32 %v1707, %v1795
        %v1797 = vpop.f32.mrf.mxu0
        %v1798 = vadd.f32 %v1709, %v1797
        %1799 = vmatmul.bf16.gmra.mxu0 %v1467
        %v1800 = vpop.f32.mrf.mxu0
        %v1801 = vadd.f32 %v1712, %v1800
        %v1802 = vpop.f32.mrf.mxu0
        %v1803 = vadd.f32 %v1714, %v1802
        %1804 = vmatmul.bf16.gmra.mxu0 %v1469
        %v1805 = vpop.f32.mrf.mxu0
        %v1806 = vadd.f32 %v1717, %v1805
        %v1807 = vpop.f32.mrf.mxu0
        %v1808 = vadd.f32 %v1719, %v1807
        %1809 = vmatmul.bf16.gmra.mxu0 %v1471
        %v1810 = vpop.f32.mrf.mxu0
        %v1811 = vadd.f32 %v1722, %v1810
        %v1812 = vpop.f32.mrf.mxu0
        %v1813 = vadd.f32 %v1724, %v1812
        %1814 = vmatmul.bf16.gmra.mxu0 %v1473
        %v1815 = vpop.f32.mrf.mxu0
        %v1816 = vadd.f32 %v1727, %v1815
        %v1817 = vpop.f32.mrf.mxu0
        %v1818 = vadd.f32 %v1729, %v1817
        %1819 = vmatmul.bf16.gmra.mxu0 %v1475
        %v1820 = vpop.f32.mrf.mxu0
        %v1821 = vadd.f32 %v1732, %v1820
        %v1822 = vpop.f32.mrf.mxu0
        %v1823 = vadd.f32 %v1734, %v1822
        %1824 = vmatmul.bf16.gmra.mxu0 %v1477
        %v1825 = vpop.f32.mrf.mxu0
        %v1826 = vadd.f32 %v1737, %v1825
        %v1827 = vpop.f32.mrf.mxu0
        %v1828 = vadd.f32 %v1739, %v1827
        %1829 = vmatmul.bf16.gmra.mxu0 %v1479
        %v1830 = vpop.f32.mrf.mxu0
        %v1831 = vadd.f32 %v1742, %v1830
        %v1832 = vpop.f32.mrf.mxu0
        %v1833 = vadd.f32 %v1744, %v1832
        %1834 = vmatmul.bf16.gmra.mxu0 %v1481
        %v1835 = vpop.f32.mrf.mxu0
        %v1836 = vadd.f32 %v1747, %v1835
        %v1837 = vpop.f32.mrf.mxu0
        %v1838 = vadd.f32 %v1749, %v1837
        %1839 = vmatmul.bf16.gmra.mxu0 %v1483
        %v1840 = vpop.f32.mrf.mxu0
        %v1841 = vadd.f32 %v1752, %v1840
        %v1842 = vpop.f32.mrf.mxu0
        %v1843 = vadd.f32 %v1754, %v1842
        %1844 = vmatmul.bf16.gmra.mxu0 %v1485
        %v1845 = vpop.f32.mrf.mxu0
        %v1846 = vadd.f32 %v1757, %v1845
        %v1847 = vpop.f32.mrf.mxu0
        %v1848 = vadd.f32 %v1759, %v1847
        %1849 = vmatmul.bf16.gmra.mxu0 %v1487
        %v1850 = vpop.f32.mrf.mxu0
        %v1851 = vadd.f32 %v1762, %v1850
        %v1852 = vpop.f32.mrf.mxu0
        %v1853 = vadd.f32 %v1764, %v1852
        %1854 = vmatmul.bf16.gmra.mxu0 %v1489
        %v1855 = vpop.f32.mrf.mxu0
        %v1856 = vadd.f32 %v1767, %v1855
        %v1857 = vpop.f32.mrf.mxu0
        %v1858 = vadd.f32 %v1769, %v1857
        %1859 = vdwg.mxu0
        %1860 = vmatpush.bf16.msra.mxu0 %v1633
        %1861 = vmatpush.bf16.msra.mxu0 %v1631
        %1862 = vmatpush.bf16.msra.mxu0 %v1629
        %1863 = vmatpush.bf16.msra.mxu0 %v1627
        %1864 = vmatpush.bf16.msra.mxu0 %v1625
        %1865 = vmatpush.bf16.msra.mxu0 %v1623
        %1866 = vmatpush.bf16.msra.mxu0 %v1621
        %1867 = vmatpush.bf16.msra.mxu0 %v1619
        %1868 = vmatmul.bf16.gmra.mxu0 %v1458
        %v1869 = vpop.f32.mrf.mxu0
        %v1870 = vadd.f32 %v1283, %v1869
        %v1871 = vpop.f32.mrf.mxu0
        %v1872 = vadd.f32 %v1285, %v1871
        %1873 = vmatmul.bf16.gmra.mxu0 %v1460
        %v1874 = vpop.f32.mrf.mxu0
        %v1875 = vadd.f32 %v1288, %v1874
        %v1876 = vpop.f32.mrf.mxu0
        %v1877 = vadd.f32 %v1290, %v1876
        %1878 = vmatmul.bf16.gmra.mxu0 %v1462
        %v1879 = vpop.f32.mrf.mxu0
        %v1880 = vadd.f32 %v1293, %v1879
        %v1881 = vpop.f32.mrf.mxu0
        %v1882 = vadd.f32 %v1295, %v1881
        %1883 = vmatmul.bf16.gmra.mxu0 %v1464
        %v1884 = vpop.f32.mrf.mxu0
        %v1885 = vadd.f32 %v1298, %v1884
        %v1886 = vpop.f32.mrf.mxu0
        %v1887 = vadd.f32 %v1300, %v1886
        %1888 = vmatmul.bf16.gmra.mxu0 %v1466
        %v1889 = vpop.f32.mrf.mxu0
        %v1890 = vadd.f32 %v1303, %v1889
        %v1891 = vpop.f32.mrf.mxu0
        %v1892 = vadd.f32 %v1305, %v1891
        %1893 = vmatmul.bf16.gmra.mxu0 %v1468
        %v1894 = vpop.f32.mrf.mxu0
        %v1895 = vadd.f32 %v1308, %v1894
        %v1896 = vpop.f32.mrf.mxu0
        %v1897 = vadd.f32 %v1310, %v1896
        %1898 = vmatmul.bf16.gmra.mxu0 %v1470
        %v1899 = vpop.f32.mrf.mxu0
        %v1900 = vadd.f32 %v1313, %v1899
        %v1901 = vpop.f32.mrf.mxu0
        %v1902 = vadd.f32 %v1315, %v1901
        %1903 = vmatmul.bf16.gmra.mxu0 %v1472
        %v1904 = vpop.f32.mrf.mxu0
        %v1905 = vadd.f32 %v1318, %v1904
        %v1906 = vpop.f32.mrf.mxu0
        %v1907 = vadd.f32 %v1320, %v1906
        %1908 = vmatmul.bf16.gmra.mxu0 %v1474
        %v1909 = vpop.f32.mrf.mxu0
        %v1910 = vadd.f32 %v1323, %v1909
        %v1911 = vpop.f32.mrf.mxu0
        %v1912 = vadd.f32 %v1325, %v1911
        %1913 = vmatmul.bf16.gmra.mxu0 %v1476
        %v1914 = vpop.f32.mrf.mxu0
        %v1915 = vadd.f32 %v1328, %v1914
        %v1916 = vpop.f32.mrf.mxu0
        %v1917 = vadd.f32 %v1330, %v1916
        %1918 = vmatmul.bf16.gmra.mxu0 %v1478
        %v1919 = vpop.f32.mrf.mxu0
        %v1920 = vadd.f32 %v1333, %v1919
        %v1921 = vpop.f32.mrf.mxu0
        %v1922 = vadd.f32 %v1335, %v1921
        %1923 = vmatmul.bf16.gmra.mxu0 %v1480
        %v1924 = vpop.f32.mrf.mxu0
        %v1925 = vadd.f32 %v1338, %v1924
        %v1926 = vpop.f32.mrf.mxu0
        %v1927 = vadd.f32 %v1340, %v1926
        %1928 = vmatmul.bf16.gmra.mxu0 %v1482
        %v1929 = vpop.f32.mrf.mxu0
        %v1930 = vadd.f32 %v1343, %v1929
        %v1931 = vpop.f32.mrf.mxu0
        %v1932 = vadd.f32 %v1345, %v1931
        %1933 = vmatmul.bf16.gmra.mxu0 %v1484
        %v1934 = vpop.f32.mrf.mxu0
        %v1935 = vadd.f32 %v1348, %v1934
        %v1936 = vpop.f32.mrf.mxu0
        %v1937 = vadd.f32 %v1350, %v1936
        %1938 = vmatmul.bf16.gmra.mxu0 %v1486
        %v1939 = vpop.f32.mrf.mxu0
        %v1940 = vadd.f32 %v1353, %v1939
        %v1941 = vpop.f32.mrf.mxu0
        %v1942 = vadd.f32 %v1355, %v1941
        %1943 = vmatmul.bf16.gmra.mxu0 %v1488
        %v1944 = vpop.f32.mrf.mxu0
        %v1945 = vadd.f32 %v1358, %v1944
        %v1946 = vpop.f32.mrf.mxu0
        %v1947 = vadd.f32 %v1360, %v1946
        %1948 = vdwg.mxu0
        %1949 = vmatpush.bf16.msra.mxu0 %v1649
        %1950 = vmatpush.bf16.msra.mxu0 %v1647
        %1951 = vmatpush.bf16.msra.mxu0 %v1645
        %1952 = vmatpush.bf16.msra.mxu0 %v1643
        %1953 = vmatpush.bf16.msra.mxu0 %v1641
        %1954 = vmatpush.bf16.msra.mxu0 %v1639
        %1955 = vmatpush.bf16.msra.mxu0 %v1637
        %1956 = vmatpush.bf16.msra.mxu0 %v1635
        %1957 = vmatmul.bf16.gmra.mxu0 %v1459
        %v1958 = vpop.f32.mrf.mxu0
        %v1959 = vadd.f32 %v1870, %v1958
        %v1960 = vpop.f32.mrf.mxu0
        %v1961 = vadd.f32 %v1872, %v1960
        %1962 = vmatmul.bf16.gmra.mxu0 %v1461
        %v1963 = vpop.f32.mrf.mxu0
        %v1964 = vadd.f32 %v1875, %v1963
        %v1965 = vpop.f32.mrf.mxu0
        %v1966 = vadd.f32 %v1877, %v1965
        %1967 = vmatmul.bf16.gmra.mxu0 %v1463
        %v1968 = vpop.f32.mrf.mxu0
        %v1969 = vadd.f32 %v1880, %v1968
        %v1970 = vpop.f32.mrf.mxu0
        %v1971 = vadd.f32 %v1882, %v1970
        %1972 = vmatmul.bf16.gmra.mxu0 %v1465
        %v1973 = vpop.f32.mrf.mxu0
        %v1974 = vadd.f32 %v1885, %v1973
        %v1975 = vpop.f32.mrf.mxu0
        %v1976 = vadd.f32 %v1887, %v1975
        %1977 = vmatmul.bf16.gmra.mxu0 %v1467
        %v1978 = vpop.f32.mrf.mxu0
        %v1979 = vadd.f32 %v1890, %v1978
        %v1980 = vpop.f32.mrf.mxu0
        %v1981 = vadd.f32 %v1892, %v1980
        %1982 = vmatmul.bf16.gmra.mxu0 %v1469
        %v1983 = vpop.f32.mrf.mxu0
        %v1984 = vadd.f32 %v1895, %v1983
        %v1985 = vpop.f32.mrf.mxu0
        %v1986 = vadd.f32 %v1897, %v1985
        %1987 = vmatmul.bf16.gmra.mxu0 %v1471
        %v1988 = vpop.f32.mrf.mxu0
        %v1989 = vadd.f32 %v1900, %v1988
        %v1990 = vpop.f32.mrf.mxu0
        %v1991 = vadd.f32 %v1902, %v1990
        %1992 = vmatmul.bf16.gmra.mxu0 %v1473
        %v1993 = vpop.f32.mrf.mxu0
        %v1994 = vadd.f32 %v1905, %v1993
        %v1995 = vpop.f32.mrf.mxu0
        %v1996 = vadd.f32 %v1907, %v1995
        %1997 = vmatmul.bf16.gmra.mxu0 %v1475
        %v1998 = vpop.f32.mrf.mxu0
        %v1999 = vadd.f32 %v1910, %v1998
        %v2000 = vpop.f32.mrf.mxu0
        %v2001 = vadd.f32 %v1912, %v2000
        %2002 = vmatmul.bf16.gmra.mxu0 %v1477
        %v2003 = vpop.f32.mrf.mxu0
        %v2004 = vadd.f32 %v1915, %v2003
        %v2005 = vpop.f32.mrf.mxu0
        %v2006 = vadd.f32 %v1917, %v2005
        %2007 = vmatmul.bf16.gmra.mxu0 %v1479
        %v2008 = vpop.f32.mrf.mxu0
        %v2009 = vadd.f32 %v1920, %v2008
        %v2010 = vpop.f32.mrf.mxu0
        %v2011 = vadd.f32 %v1922, %v2010
        %2012 = vmatmul.bf16.gmra.mxu0 %v1481
        %v2013 = vpop.f32.mrf.mxu0
        %v2014 = vadd.f32 %v1925, %v2013
        %v2015 = vpop.f32.mrf.mxu0
        %v2016 = vadd.f32 %v1927, %v2015
        %2017 = vmatmul.bf16.gmra.mxu0 %v1483
        %v2018 = vpop.f32.mrf.mxu0
        %v2019 = vadd.f32 %v1930, %v2018
        %v2020 = vpop.f32.mrf.mxu0
        %v2021 = vadd.f32 %v1932, %v2020
        %2022 = vmatmul.bf16.gmra.mxu0 %v1485
        %v2023 = vpop.f32.mrf.mxu0
        %v2024 = vadd.f32 %v1935, %v2023
        %v2025 = vpop.f32.mrf.mxu0
        %v2026 = vadd.f32 %v1937, %v2025
        %2027 = vmatmul.bf16.gmra.mxu0 %v1487
        %v2028 = vpop.f32.mrf.mxu0
        %v2029 = vadd.f32 %v1940, %v2028
        %v2030 = vpop.f32.mrf.mxu0
        %v2031 = vadd.f32 %v1942, %v2030
        %2032 = vmatmul.bf16.gmra.mxu0 %v1489
        %v2033 = vpop.f32.mrf.mxu0
        %v2034 = vadd.f32 %v1945, %v2033
        %v2035 = vpop.f32.mrf.mxu0
        %v2036 = vadd.f32 %v1947, %v2035
        %2037 = vdwg.mxu0
        %v2038 = vld [vmem:[%s518] sm:$0xff]
        %v2039 = vld [vmem:[%s518 + $0x8] sm:$0xff]
        %v2040 = vld [vmem:[%s518 + $0x10] sm:$0xff]
        %v2041 = vld [vmem:[%s518 + $0x18] sm:$0xff]
        %v2042 = vld [vmem:[%s518 + $0x20] sm:$0xff]
        %v2043 = vld [vmem:[%s518 + $0x28] sm:$0xff]
        %v2044 = vld [vmem:[%s518 + $0x30] sm:$0xff]
        %v2045 = vld [vmem:[%s518 + $0x38] sm:$0xff]
        %v2046 = vld [vmem:[%s518 + $0x40] sm:$0xff]
        %v2047 = vld [vmem:[%s518 + $0x48] sm:$0xff]
        %v2048 = vld [vmem:[%s518 + $0x50] sm:$0xff]
        %v2049 = vld [vmem:[%s518 + $0x58] sm:$0xff]
        %v2050 = vld [vmem:[%s518 + $0x60] sm:$0xff]
        %v2051 = vld [vmem:[%s518 + $0x68] sm:$0xff]
        %v2052 = vld [vmem:[%s518 + $0x70] sm:$0xff]
        %v2053 = vld [vmem:[%s518 + $0x78] sm:$0xff]
        %v2054 = vld [vmem:[%s518 + $0x80] sm:$0xff]
        %v2055 = vld [vmem:[%s518 + $0x88] sm:$0xff]
        %v2056 = vld [vmem:[%s518 + $0x90] sm:$0xff]
        %v2057 = vld [vmem:[%s518 + $0x98] sm:$0xff]
        %v2058 = vld [vmem:[%s518 + $0xa0] sm:$0xff]
        %v2059 = vld [vmem:[%s518 + $0xa8] sm:$0xff]
        %v2060 = vld [vmem:[%s518 + $0xb0] sm:$0xff]
        %v2061 = vld [vmem:[%s518 + $0xb8] sm:$0xff]
        %v2062 = vld [vmem:[%s518 + $0xc0] sm:$0xff]
        %v2063 = vld [vmem:[%s518 + $0xc8] sm:$0xff]
        %v2064 = vld [vmem:[%s518 + $0xd0] sm:$0xff]
        %v2065 = vld [vmem:[%s518 + $0xd8] sm:$0xff]
        %v2066 = vld [vmem:[%s518 + $0xe0] sm:$0xff]
        %v2067 = vld [vmem:[%s518 + $0xe8] sm:$0xff]
        %v2068 = vld [vmem:[%s518 + $0xf0] sm:$0xff]
        %v2069 = vld [vmem:[%s518 + $0xf8] sm:$0xff]
        %v2070 = vld [vmem:[%s535 + $0x200] sm:$0xff]
        %v2071 = vld [vmem:[%s535 + $0x208] sm:$0xff]
        %v2072 = vld [vmem:[%s535 + $0x210] sm:$0xff]
        %v2073 = vld [vmem:[%s535 + $0x218] sm:$0xff]
        %v2074 = vld [vmem:[%s535 + $0x220] sm:$0xff]
        %v2075 = vld [vmem:[%s535 + $0x228] sm:$0xff]
        %v2076 = vld [vmem:[%s535 + $0x230] sm:$0xff]
        %v2077 = vld [vmem:[%s535 + $0x238] sm:$0xff]
        %v2078 = vld [vmem:[%s535 + $0x240] sm:$0xff]
        %v2079 = vld [vmem:[%s535 + $0x248] sm:$0xff]
        %v2080 = vld [vmem:[%s535 + $0x250] sm:$0xff]
        %v2081 = vld [vmem:[%s535 + $0x258] sm:$0xff]
        %v2082 = vld [vmem:[%s535 + $0x260] sm:$0xff]
        %v2083 = vld [vmem:[%s535 + $0x268] sm:$0xff]
        %v2084 = vld [vmem:[%s535 + $0x270] sm:$0xff]
        %v2085 = vld [vmem:[%s535 + $0x278] sm:$0xff]
        %v2086 = vld [vmem:[%s535 + $0x280] sm:$0xff]
        %v2087 = vld [vmem:[%s535 + $0x288] sm:$0xff]
        %v2088 = vld [vmem:[%s535 + $0x290] sm:$0xff]
        %v2089 = vld [vmem:[%s535 + $0x298] sm:$0xff]
        %v2090 = vld [vmem:[%s535 + $0x2a0] sm:$0xff]
        %v2091 = vld [vmem:[%s535 + $0x2a8] sm:$0xff]
        %v2092 = vld [vmem:[%s535 + $0x2b0] sm:$0xff]
        %v2093 = vld [vmem:[%s535 + $0x2b8] sm:$0xff]
        %v2094 = vld [vmem:[%s535 + $0x2c0] sm:$0xff]
        %v2095 = vld [vmem:[%s535 + $0x2c8] sm:$0xff]
        %v2096 = vld [vmem:[%s535 + $0x2d0] sm:$0xff]
        %v2097 = vld [vmem:[%s535 + $0x2d8] sm:$0xff]
        %v2098 = vld [vmem:[%s535 + $0x2e0] sm:$0xff]
        %v2099 = vld [vmem:[%s535 + $0x2e8] sm:$0xff]
        %v2100 = vld [vmem:[%s535 + $0x2f0] sm:$0xff]
        %v2101 = vld [vmem:[%s535 + $0x2f8] sm:$0xff]
        %v2134 = vunpack.c.l.b16 %v2038
        %v2135 = vunpack.c.h.b16 %v2038
        %v2136 = vunpack.c.l.b16 %v2039
        %v2137 = vunpack.c.h.b16 %v2039
        %v2138 = vunpack.c.l.b16 %v2040
        %v2139 = vunpack.c.h.b16 %v2040
        %v2140 = vunpack.c.l.b16 %v2041
        %v2141 = vunpack.c.h.b16 %v2041
        %v2142 = vunpack.c.l.b16 %v2042
        %v2143 = vunpack.c.h.b16 %v2042
        %v2144 = vunpack.c.l.b16 %v2043
        %v2145 = vunpack.c.h.b16 %v2043
        %v2146 = vunpack.c.l.b16 %v2044
        %v2147 = vunpack.c.h.b16 %v2044
        %v2148 = vunpack.c.l.b16 %v2045
        %v2149 = vunpack.c.h.b16 %v2045
        %v2150 = vunpack.c.l.b16 %v2046
        %v2151 = vunpack.c.h.b16 %v2046
        %v2152 = vunpack.c.l.b16 %v2047
        %v2153 = vunpack.c.h.b16 %v2047
        %v2154 = vunpack.c.l.b16 %v2048
        %v2155 = vunpack.c.h.b16 %v2048
        %v2156 = vunpack.c.l.b16 %v2049
        %v2157 = vunpack.c.h.b16 %v2049
        %v2158 = vunpack.c.l.b16 %v2050
        %v2159 = vunpack.c.h.b16 %v2050
        %v2160 = vunpack.c.l.b16 %v2051
        %v2161 = vunpack.c.h.b16 %v2051
        %v2162 = vunpack.c.l.b16 %v2052
        %v2163 = vunpack.c.h.b16 %v2052
        %v2164 = vunpack.c.l.b16 %v2053
        %v2165 = vunpack.c.h.b16 %v2053
        %v2166 = vunpack.c.l.b16 %v2054
        %v2167 = vunpack.c.h.b16 %v2054
        %v2168 = vunpack.c.l.b16 %v2055
        %v2169 = vunpack.c.h.b16 %v2055
        %v2170 = vunpack.c.l.b16 %v2056
        %v2171 = vunpack.c.h.b16 %v2056
        %v2172 = vunpack.c.l.b16 %v2057
        %v2173 = vunpack.c.h.b16 %v2057
        %v2174 = vunpack.c.l.b16 %v2058
        %v2175 = vunpack.c.h.b16 %v2058
        %v2176 = vunpack.c.l.b16 %v2059
        %v2177 = vunpack.c.h.b16 %v2059
        %v2178 = vunpack.c.l.b16 %v2060
        %v2179 = vunpack.c.h.b16 %v2060
        %v2180 = vunpack.c.l.b16 %v2061
        %v2181 = vunpack.c.h.b16 %v2061
        %v2182 = vunpack.c.l.b16 %v2062
        %v2183 = vunpack.c.h.b16 %v2062
        %v2184 = vunpack.c.l.b16 %v2063
        %v2185 = vunpack.c.h.b16 %v2063
        %v2186 = vunpack.c.l.b16 %v2064
        %v2187 = vunpack.c.h.b16 %v2064
        %v2188 = vunpack.c.l.b16 %v2065
        %v2189 = vunpack.c.h.b16 %v2065
        %v2190 = vunpack.c.l.b16 %v2066
        %v2191 = vunpack.c.h.b16 %v2066
        %v2192 = vunpack.c.l.b16 %v2067
        %v2193 = vunpack.c.h.b16 %v2067
        %v2194 = vunpack.c.l.b16 %v2068
        %v2195 = vunpack.c.h.b16 %v2068
        %v2196 = vunpack.c.l.b16 %v2069
        %v2197 = vunpack.c.h.b16 %v2069
        %v2198 = vpack.c.b16 %v2136, %v2134
        %v2199 = vpack.c.b16 %v2137, %v2135
        %v2200 = vpack.c.b16 %v2140, %v2138
        %v2201 = vpack.c.b16 %v2141, %v2139
        %v2202 = vpack.c.b16 %v2144, %v2142
        %v2203 = vpack.c.b16 %v2145, %v2143
        %v2204 = vpack.c.b16 %v2148, %v2146
        %v2205 = vpack.c.b16 %v2149, %v2147
        %v2206 = vpack.c.b16 %v2152, %v2150
        %v2207 = vpack.c.b16 %v2153, %v2151
        %v2208 = vpack.c.b16 %v2156, %v2154
        %v2209 = vpack.c.b16 %v2157, %v2155
        %v2210 = vpack.c.b16 %v2160, %v2158
        %v2211 = vpack.c.b16 %v2161, %v2159
        %v2212 = vpack.c.b16 %v2164, %v2162
        %v2213 = vpack.c.b16 %v2165, %v2163
        %v2214 = vpack.c.b16 %v2168, %v2166
        %v2215 = vpack.c.b16 %v2169, %v2167
        %v2216 = vpack.c.b16 %v2172, %v2170
        %v2217 = vpack.c.b16 %v2173, %v2171
        %v2218 = vpack.c.b16 %v2176, %v2174
        %v2219 = vpack.c.b16 %v2177, %v2175
        %v2220 = vpack.c.b16 %v2180, %v2178
        %v2221 = vpack.c.b16 %v2181, %v2179
        %v2222 = vpack.c.b16 %v2184, %v2182
        %v2223 = vpack.c.b16 %v2185, %v2183
        %v2224 = vpack.c.b16 %v2188, %v2186
        %v2225 = vpack.c.b16 %v2189, %v2187
        %v2226 = vpack.c.b16 %v2192, %v2190
        %v2227 = vpack.c.b16 %v2193, %v2191
        %v2228 = vpack.c.b16 %v2196, %v2194
        %v2229 = vpack.c.b16 %v2197, %v2195
        %v2294 = vunpack.c.l.b16 %v2070
        %v2295 = vunpack.c.h.b16 %v2070
        %v2296 = vunpack.c.l.b16 %v2071
        %v2297 = vunpack.c.h.b16 %v2071
        %v2298 = vunpack.c.l.b16 %v2072
        %v2299 = vunpack.c.h.b16 %v2072
        %v2300 = vunpack.c.l.b16 %v2073
        %v2301 = vunpack.c.h.b16 %v2073
        %v2302 = vunpack.c.l.b16 %v2074
        %v2303 = vunpack.c.h.b16 %v2074
        %v2304 = vunpack.c.l.b16 %v2075
        %v2305 = vunpack.c.h.b16 %v2075
        %v2306 = vunpack.c.l.b16 %v2076
        %v2307 = vunpack.c.h.b16 %v2076
        %v2308 = vunpack.c.l.b16 %v2077
        %v2309 = vunpack.c.h.b16 %v2077
        %v2310 = vunpack.c.l.b16 %v2078
        %v2311 = vunpack.c.h.b16 %v2078
        %v2312 = vunpack.c.l.b16 %v2079
        %v2313 = vunpack.c.h.b16 %v2079
        %v2314 = vunpack.c.l.b16 %v2080
        %v2315 = vunpack.c.h.b16 %v2080
        %v2316 = vunpack.c.l.b16 %v2081
        %v2317 = vunpack.c.h.b16 %v2081
        %v2318 = vunpack.c.l.b16 %v2082
        %v2319 = vunpack.c.h.b16 %v2082
        %v2320 = vunpack.c.l.b16 %v2083
        %v2321 = vunpack.c.h.b16 %v2083
        %v2322 = vunpack.c.l.b16 %v2084
        %v2323 = vunpack.c.h.b16 %v2084
        %v2324 = vunpack.c.l.b16 %v2085
        %v2325 = vunpack.c.h.b16 %v2085
        %v2326 = vunpack.c.l.b16 %v2086
        %v2327 = vunpack.c.h.b16 %v2086
        %v2328 = vunpack.c.l.b16 %v2087
        %v2329 = vunpack.c.h.b16 %v2087
        %v2330 = vunpack.c.l.b16 %v2088
        %v2331 = vunpack.c.h.b16 %v2088
        %v2332 = vunpack.c.l.b16 %v2089
        %v2333 = vunpack.c.h.b16 %v2089
        %v2334 = vunpack.c.l.b16 %v2090
        %v2335 = vunpack.c.h.b16 %v2090
        %v2336 = vunpack.c.l.b16 %v2091
        %v2337 = vunpack.c.h.b16 %v2091
        %v2338 = vunpack.c.l.b16 %v2092
        %v2339 = vunpack.c.h.b16 %v2092
        %v2340 = vunpack.c.l.b16 %v2093
        %v2341 = vunpack.c.h.b16 %v2093
        %v2342 = vunpack.c.l.b16 %v2094
        %v2343 = vunpack.c.h.b16 %v2094
        %v2344 = vunpack.c.l.b16 %v2095
        %v2345 = vunpack.c.h.b16 %v2095
        %v2346 = vunpack.c.l.b16 %v2096
        %v2347 = vunpack.c.h.b16 %v2096
        %v2348 = vunpack.c.l.b16 %v2097
        %v2349 = vunpack.c.h.b16 %v2097
        %v2350 = vunpack.c.l.b16 %v2098
        %v2351 = vunpack.c.h.b16 %v2098
        %v2352 = vunpack.c.l.b16 %v2099
        %v2353 = vunpack.c.h.b16 %v2099
        %v2354 = vunpack.c.l.b16 %v2100
        %v2355 = vunpack.c.h.b16 %v2100
        %v2356 = vunpack.c.l.b16 %v2101
        %v2357 = vunpack.c.h.b16 %v2101
        %v2358 = vpack.c.b16 %v2296, %v2294
        %v2359 = vpack.c.b16 %v2297, %v2295
        %v2360 = vpack.c.b16 %v2300, %v2298
        %v2361 = vpack.c.b16 %v2301, %v2299
        %v2362 = vpack.c.b16 %v2304, %v2302
        %v2363 = vpack.c.b16 %v2305, %v2303
        %v2364 = vpack.c.b16 %v2308, %v2306
        %v2365 = vpack.c.b16 %v2309, %v2307
        %v2366 = vpack.c.b16 %v2312, %v2310
        %v2367 = vpack.c.b16 %v2313, %v2311
        %v2368 = vpack.c.b16 %v2316, %v2314
        %v2369 = vpack.c.b16 %v2317, %v2315
        %v2370 = vpack.c.b16 %v2320, %v2318
        %v2371 = vpack.c.b16 %v2321, %v2319
        %v2372 = vpack.c.b16 %v2324, %v2322
        %v2373 = vpack.c.b16 %v2325, %v2323
        %v2374 = vpack.c.b16 %v2328, %v2326
        %v2375 = vpack.c.b16 %v2329, %v2327
        %v2376 = vpack.c.b16 %v2332, %v2330
        %v2377 = vpack.c.b16 %v2333, %v2331
        %v2378 = vpack.c.b16 %v2336, %v2334
        %v2379 = vpack.c.b16 %v2337, %v2335
        %v2380 = vpack.c.b16 %v2340, %v2338
        %v2381 = vpack.c.b16 %v2341, %v2339
        %v2382 = vpack.c.b16 %v2344, %v2342
        %v2383 = vpack.c.b16 %v2345, %v2343
        %v2384 = vpack.c.b16 %v2348, %v2346
        %v2385 = vpack.c.b16 %v2349, %v2347
        %v2386 = vpack.c.b16 %v2352, %v2350
        %v2387 = vpack.c.b16 %v2353, %v2351
        %v2388 = vpack.c.b16 %v2356, %v2354
        %v2389 = vpack.c.b16 %v2357, %v2355
        %2422 = vmatpush.bf16.msra.mxu0 %v2372
        %2423 = vmatpush.bf16.msra.mxu0 %v2370
        %2424 = vmatpush.bf16.msra.mxu0 %v2368
        %2425 = vmatpush.bf16.msra.mxu0 %v2366
        %2426 = vmatpush.bf16.msra.mxu0 %v2364
        %2427 = vmatpush.bf16.msra.mxu0 %v2362
        %2428 = vmatpush.bf16.msra.mxu0 %v2360
        %2429 = vmatpush.bf16.msra.mxu0 %v2358
        %2430 = vmatmul.bf16.gmra.mxu0 %v2198
        %v2431 = vpop.f32.mrf.mxu0
        %v2432 = vadd.f32 0.0, %v2431
        %v2433 = vpop.f32.mrf.mxu0
        %v2434 = vadd.f32 0.0, %v2433
        %2435 = vmatmul.bf16.gmra.mxu0 %v2200
        %v2436 = vpop.f32.mrf.mxu0
        %v2437 = vadd.f32 0.0, %v2436
        %v2438 = vpop.f32.mrf.mxu0
        %v2439 = vadd.f32 0.0, %v2438
        %2440 = vmatmul.bf16.gmra.mxu0 %v2202
        %v2441 = vpop.f32.mrf.mxu0
        %v2442 = vadd.f32 0.0, %v2441
        %v2443 = vpop.f32.mrf.mxu0
        %v2444 = vadd.f32 0.0, %v2443
        %2445 = vmatmul.bf16.gmra.mxu0 %v2204
        %v2446 = vpop.f32.mrf.mxu0
        %v2447 = vadd.f32 0.0, %v2446
        %v2448 = vpop.f32.mrf.mxu0
        %v2449 = vadd.f32 0.0, %v2448
        %2450 = vmatmul.bf16.gmra.mxu0 %v2206
        %v2451 = vpop.f32.mrf.mxu0
        %v2452 = vadd.f32 0.0, %v2451
        %v2453 = vpop.f32.mrf.mxu0
        %v2454 = vadd.f32 0.0, %v2453
        %2455 = vmatmul.bf16.gmra.mxu0 %v2208
        %v2456 = vpop.f32.mrf.mxu0
        %v2457 = vadd.f32 0.0, %v2456
        %v2458 = vpop.f32.mrf.mxu0
        %v2459 = vadd.f32 0.0, %v2458
        %2460 = vmatmul.bf16.gmra.mxu0 %v2210
        %v2461 = vpop.f32.mrf.mxu0
        %v2462 = vadd.f32 0.0, %v2461
        %v2463 = vpop.f32.mrf.mxu0
        %v2464 = vadd.f32 0.0, %v2463
        %2465 = vmatmul.bf16.gmra.mxu0 %v2212
        %v2466 = vpop.f32.mrf.mxu0
        %v2467 = vadd.f32 0.0, %v2466
        %v2468 = vpop.f32.mrf.mxu0
        %v2469 = vadd.f32 0.0, %v2468
        %2470 = vmatmul.bf16.gmra.mxu0 %v2214
        %v2471 = vpop.f32.mrf.mxu0
        %v2472 = vadd.f32 0.0, %v2471
        %v2473 = vpop.f32.mrf.mxu0
        %v2474 = vadd.f32 0.0, %v2473
        %2475 = vmatmul.bf16.gmra.mxu0 %v2216
        %v2476 = vpop.f32.mrf.mxu0
        %v2477 = vadd.f32 0.0, %v2476
        %v2478 = vpop.f32.mrf.mxu0
        %v2479 = vadd.f32 0.0, %v2478
        %2480 = vmatmul.bf16.gmra.mxu0 %v2218
        %v2481 = vpop.f32.mrf.mxu0
        %v2482 = vadd.f32 0.0, %v2481
        %v2483 = vpop.f32.mrf.mxu0
        %v2484 = vadd.f32 0.0, %v2483
        %2485 = vmatmul.bf16.gmra.mxu0 %v2220
        %v2486 = vpop.f32.mrf.mxu0
        %v2487 = vadd.f32 0.0, %v2486
        %v2488 = vpop.f32.mrf.mxu0
        %v2489 = vadd.f32 0.0, %v2488
        %2490 = vmatmul.bf16.gmra.mxu0 %v2222
        %v2491 = vpop.f32.mrf.mxu0
        %v2492 = vadd.f32 0.0, %v2491
        %v2493 = vpop.f32.mrf.mxu0
        %v2494 = vadd.f32 0.0, %v2493
        %2495 = vmatmul.bf16.gmra.mxu0 %v2224
        %v2496 = vpop.f32.mrf.mxu0
        %v2497 = vadd.f32 0.0, %v2496
        %v2498 = vpop.f32.mrf.mxu0
        %v2499 = vadd.f32 0.0, %v2498
        %2500 = vmatmul.bf16.gmra.mxu0 %v2226
        %v2501 = vpop.f32.mrf.mxu0
        %v2502 = vadd.f32 0.0, %v2501
        %v2503 = vpop.f32.mrf.mxu0
        %v2504 = vadd.f32 0.0, %v2503
        %2505 = vmatmul.bf16.gmra.mxu0 %v2228
        %v2506 = vpop.f32.mrf.mxu0
        %v2507 = vadd.f32 0.0, %v2506
        %v2508 = vpop.f32.mrf.mxu0
        %v2509 = vadd.f32 0.0, %v2508
        %2510 = vdwg.mxu0
        %2511 = vmatpush.bf16.msra.mxu0 %v2388
        %2512 = vmatpush.bf16.msra.mxu0 %v2386
        %2513 = vmatpush.bf16.msra.mxu0 %v2384
        %2514 = vmatpush.bf16.msra.mxu0 %v2382
        %2515 = vmatpush.bf16.msra.mxu0 %v2380
        %2516 = vmatpush.bf16.msra.mxu0 %v2378
        %2517 = vmatpush.bf16.msra.mxu0 %v2376
        %2518 = vmatpush.bf16.msra.mxu0 %v2374
        %2519 = vmatmul.bf16.gmra.mxu0 %v2199
        %v2520 = vpop.f32.mrf.mxu0
        %v2521 = vadd.f32 %v2432, %v2520
        %v2522 = vpop.f32.mrf.mxu0
        %v2523 = vadd.f32 %v2434, %v2522
        %2524 = vmatmul.bf16.gmra.mxu0 %v2201
        %v2525 = vpop.f32.mrf.mxu0
        %v2526 = vadd.f32 %v2437, %v2525
        %v2527 = vpop.f32.mrf.mxu0
        %v2528 = vadd.f32 %v2439, %v2527
        %2529 = vmatmul.bf16.gmra.mxu0 %v2203
        %v2530 = vpop.f32.mrf.mxu0
        %v2531 = vadd.f32 %v2442, %v2530
        %v2532 = vpop.f32.mrf.mxu0
        %v2533 = vadd.f32 %v2444, %v2532
        %2534 = vmatmul.bf16.gmra.mxu0 %v2205
        %v2535 = vpop.f32.mrf.mxu0
        %v2536 = vadd.f32 %v2447, %v2535
        %v2537 = vpop.f32.mrf.mxu0
        %v2538 = vadd.f32 %v2449, %v2537
        %2539 = vmatmul.bf16.gmra.mxu0 %v2207
        %v2540 = vpop.f32.mrf.mxu0
        %v2541 = vadd.f32 %v2452, %v2540
        %v2542 = vpop.f32.mrf.mxu0
        %v2543 = vadd.f32 %v2454, %v2542
        %2544 = vmatmul.bf16.gmra.mxu0 %v2209
        %v2545 = vpop.f32.mrf.mxu0
        %v2546 = vadd.f32 %v2457, %v2545
        %v2547 = vpop.f32.mrf.mxu0
        %v2548 = vadd.f32 %v2459, %v2547
        %2549 = vmatmul.bf16.gmra.mxu0 %v2211
        %v2550 = vpop.f32.mrf.mxu0
        %v2551 = vadd.f32 %v2462, %v2550
        %v2552 = vpop.f32.mrf.mxu0
        %v2553 = vadd.f32 %v2464, %v2552
        %2554 = vmatmul.bf16.gmra.mxu0 %v2213
        %v2555 = vpop.f32.mrf.mxu0
        %v2556 = vadd.f32 %v2467, %v2555
        %v2557 = vpop.f32.mrf.mxu0
        %v2558 = vadd.f32 %v2469, %v2557
        %2559 = vmatmul.bf16.gmra.mxu0 %v2215
        %v2560 = vpop.f32.mrf.mxu0
        %v2561 = vadd.f32 %v2472, %v2560
        %v2562 = vpop.f32.mrf.mxu0
        %v2563 = vadd.f32 %v2474, %v2562
        %2564 = vmatmul.bf16.gmra.mxu0 %v2217
        %v2565 = vpop.f32.mrf.mxu0
        %v2566 = vadd.f32 %v2477, %v2565
        %v2567 = vpop.f32.mrf.mxu0
        %v2568 = vadd.f32 %v2479, %v2567
        %2569 = vmatmul.bf16.gmra.mxu0 %v2219
        %v2570 = vpop.f32.mrf.mxu0
        %v2571 = vadd.f32 %v2482, %v2570
        %v2572 = vpop.f32.mrf.mxu0
        %v2573 = vadd.f32 %v2484, %v2572
        %2574 = vmatmul.bf16.gmra.mxu0 %v2221
        %v2575 = vpop.f32.mrf.mxu0
        %v2576 = vadd.f32 %v2487, %v2575
        %v2577 = vpop.f32.mrf.mxu0
        %v2578 = vadd.f32 %v2489, %v2577
        %2579 = vmatmul.bf16.gmra.mxu0 %v2223
        %v2580 = vpop.f32.mrf.mxu0
        %v2581 = vadd.f32 %v2492, %v2580
        %v2582 = vpop.f32.mrf.mxu0
        %v2583 = vadd.f32 %v2494, %v2582
        %2584 = vmatmul.bf16.gmra.mxu0 %v2225
        %v2585 = vpop.f32.mrf.mxu0
        %v2586 = vadd.f32 %v2497, %v2585
        %v2587 = vpop.f32.mrf.mxu0
        %v2588 = vadd.f32 %v2499, %v2587
        %2589 = vmatmul.bf16.gmra.mxu0 %v2227
        %v2590 = vpop.f32.mrf.mxu0
        %v2591 = vadd.f32 %v2502, %v2590
        %v2592 = vpop.f32.mrf.mxu0
        %v2593 = vadd.f32 %v2504, %v2592
        %2594 = vmatmul.bf16.gmra.mxu0 %v2229
        %v2595 = vpop.f32.mrf.mxu0
        %v2596 = vadd.f32 %v2507, %v2595
        %v2597 = vpop.f32.mrf.mxu0
        %v2598 = vadd.f32 %v2509, %v2597
        %2599 = vdwg.mxu0
        %2600 = vmatpush.bf16.msra.mxu0 %v2373
        %2601 = vmatpush.bf16.msra.mxu0 %v2371
        %2602 = vmatpush.bf16.msra.mxu0 %v2369
        %2603 = vmatpush.bf16.msra.mxu0 %v2367
        %2604 = vmatpush.bf16.msra.mxu0 %v2365
        %2605 = vmatpush.bf16.msra.mxu0 %v2363
        %2606 = vmatpush.bf16.msra.mxu0 %v2361
        %2607 = vmatpush.bf16.msra.mxu0 %v2359
        %2608 = vmatmul.bf16.gmra.mxu0 %v2198
        %v2609 = vpop.f32.mrf.mxu0
        %v2610 = vadd.f32 0.0, %v2609
        %v2611 = vpop.f32.mrf.mxu0
        %v2612 = vadd.f32 0.0, %v2611
        %2613 = vmatmul.bf16.gmra.mxu0 %v2200
        %v2614 = vpop.f32.mrf.mxu0
        %v2615 = vadd.f32 0.0, %v2614
        %v2616 = vpop.f32.mrf.mxu0
        %v2617 = vadd.f32 0.0, %v2616
        %2618 = vmatmul.bf16.gmra.mxu0 %v2202
        %v2619 = vpop.f32.mrf.mxu0
        %v2620 = vadd.f32 0.0, %v2619
        %v2621 = vpop.f32.mrf.mxu0
        %v2622 = vadd.f32 0.0, %v2621
        %2623 = vmatmul.bf16.gmra.mxu0 %v2204
        %v2624 = vpop.f32.mrf.mxu0
        %v2625 = vadd.f32 0.0, %v2624
        %v2626 = vpop.f32.mrf.mxu0
        %v2627 = vadd.f32 0.0, %v2626
        %2628 = vmatmul.bf16.gmra.mxu0 %v2206
        %v2629 = vpop.f32.mrf.mxu0
        %v2630 = vadd.f32 0.0, %v2629
        %v2631 = vpop.f32.mrf.mxu0
        %v2632 = vadd.f32 0.0, %v2631
        %2633 = vmatmul.bf16.gmra.mxu0 %v2208
        %v2634 = vpop.f32.mrf.mxu0
        %v2635 = vadd.f32 0.0, %v2634
        %v2636 = vpop.f32.mrf.mxu0
        %v2637 = vadd.f32 0.0, %v2636
        %2638 = vmatmul.bf16.gmra.mxu0 %v2210
        %v2639 = vpop.f32.mrf.mxu0
        %v2640 = vadd.f32 0.0, %v2639
        %v2641 = vpop.f32.mrf.mxu0
        %v2642 = vadd.f32 0.0, %v2641
        %2643 = vmatmul.bf16.gmra.mxu0 %v2212
        %v2644 = vpop.f32.mrf.mxu0
        %v2645 = vadd.f32 0.0, %v2644
        %v2646 = vpop.f32.mrf.mxu0
        %v2647 = vadd.f32 0.0, %v2646
        %2648 = vmatmul.bf16.gmra.mxu0 %v2214
        %v2649 = vpop.f32.mrf.mxu0
        %v2650 = vadd.f32 0.0, %v2649
        %v2651 = vpop.f32.mrf.mxu0
        %v2652 = vadd.f32 0.0, %v2651
        %2653 = vmatmul.bf16.gmra.mxu0 %v2216
        %v2654 = vpop.f32.mrf.mxu0
        %v2655 = vadd.f32 0.0, %v2654
        %v2656 = vpop.f32.mrf.mxu0
        %v2657 = vadd.f32 0.0, %v2656
        %2658 = vmatmul.bf16.gmra.mxu0 %v2218
        %v2659 = vpop.f32.mrf.mxu0
        %v2660 = vadd.f32 0.0, %v2659
        %v2661 = vpop.f32.mrf.mxu0
        %v2662 = vadd.f32 0.0, %v2661
        %2663 = vmatmul.bf16.gmra.mxu0 %v2220
        %v2664 = vpop.f32.mrf.mxu0
        %v2665 = vadd.f32 0.0, %v2664
        %v2666 = vpop.f32.mrf.mxu0
        %v2667 = vadd.f32 0.0, %v2666
        %2668 = vmatmul.bf16.gmra.mxu0 %v2222
        %v2669 = vpop.f32.mrf.mxu0
        %v2670 = vadd.f32 0.0, %v2669
        %v2671 = vpop.f32.mrf.mxu0
        %v2672 = vadd.f32 0.0, %v2671
        %2673 = vmatmul.bf16.gmra.mxu0 %v2224
        %v2674 = vpop.f32.mrf.mxu0
        %v2675 = vadd.f32 0.0, %v2674
        %v2676 = vpop.f32.mrf.mxu0
        %v2677 = vadd.f32 0.0, %v2676
        %2678 = vmatmul.bf16.gmra.mxu0 %v2226
        %v2679 = vpop.f32.mrf.mxu0
        %v2680 = vadd.f32 0.0, %v2679
        %v2681 = vpop.f32.mrf.mxu0
        %v2682 = vadd.f32 0.0, %v2681
        %2683 = vmatmul.bf16.gmra.mxu0 %v2228
        %v2684 = vpop.f32.mrf.mxu0
        %v2685 = vadd.f32 0.0, %v2684
        %v2686 = vpop.f32.mrf.mxu0
        %v2687 = vadd.f32 0.0, %v2686
        %2688 = vdwg.mxu0
        %2689 = vmatpush.bf16.msra.mxu0 %v2389
        %2690 = vmatpush.bf16.msra.mxu0 %v2387
        %2691 = vmatpush.bf16.msra.mxu0 %v2385
        %2692 = vmatpush.bf16.msra.mxu0 %v2383
        %2693 = vmatpush.bf16.msra.mxu0 %v2381
        %2694 = vmatpush.bf16.msra.mxu0 %v2379
        %2695 = vmatpush.bf16.msra.mxu0 %v2377
        %2696 = vmatpush.bf16.msra.mxu0 %v2375
        %2697 = vmatmul.bf16.gmra.mxu0 %v2199
        %v2698 = vpop.f32.mrf.mxu0
        %v2699 = vadd.f32 %v2610, %v2698
        %v2700 = vpop.f32.mrf.mxu0
        %v2701 = vadd.f32 %v2612, %v2700
        %2702 = vmatmul.bf16.gmra.mxu0 %v2201
        %v2703 = vpop.f32.mrf.mxu0
        %v2704 = vadd.f32 %v2615, %v2703
        %v2705 = vpop.f32.mrf.mxu0
        %v2706 = vadd.f32 %v2617, %v2705
        %2707 = vmatmul.bf16.gmra.mxu0 %v2203
        %v2708 = vpop.f32.mrf.mxu0
        %v2709 = vadd.f32 %v2620, %v2708
        %v2710 = vpop.f32.mrf.mxu0
        %v2711 = vadd.f32 %v2622, %v2710
        %2712 = vmatmul.bf16.gmra.mxu0 %v2205
        %v2713 = vpop.f32.mrf.mxu0
        %v2714 = vadd.f32 %v2625, %v2713
        %v2715 = vpop.f32.mrf.mxu0
        %v2716 = vadd.f32 %v2627, %v2715
        %2717 = vmatmul.bf16.gmra.mxu0 %v2207
        %v2718 = vpop.f32.mrf.mxu0
        %v2719 = vadd.f32 %v2630, %v2718
        %v2720 = vpop.f32.mrf.mxu0
        %v2721 = vadd.f32 %v2632, %v2720
        %2722 = vmatmul.bf16.gmra.mxu0 %v2209
        %v2723 = vpop.f32.mrf.mxu0
        %v2724 = vadd.f32 %v2635, %v2723
        %v2725 = vpop.f32.mrf.mxu0
        %v2726 = vadd.f32 %v2637, %v2725
        %2727 = vmatmul.bf16.gmra.mxu0 %v2211
        %v2728 = vpop.f32.mrf.mxu0
        %v2729 = vadd.f32 %v2640, %v2728
        %v2730 = vpop.f32.mrf.mxu0
        %v2731 = vadd.f32 %v2642, %v2730
        %2732 = vmatmul.bf16.gmra.mxu0 %v2213
        %v2733 = vpop.f32.mrf.mxu0
        %v2734 = vadd.f32 %v2645, %v2733
        %v2735 = vpop.f32.mrf.mxu0
        %v2736 = vadd.f32 %v2647, %v2735
        %2737 = vmatmul.bf16.gmra.mxu0 %v2215
        %v2738 = vpop.f32.mrf.mxu0
        %v2739 = vadd.f32 %v2650, %v2738
        %v2740 = vpop.f32.mrf.mxu0
        %v2741 = vadd.f32 %v2652, %v2740
        %2742 = vmatmul.bf16.gmra.mxu0 %v2217
        %v2743 = vpop.f32.mrf.mxu0
        %v2744 = vadd.f32 %v2655, %v2743
        %v2745 = vpop.f32.mrf.mxu0
        %v2746 = vadd.f32 %v2657, %v2745
        %2747 = vmatmul.bf16.gmra.mxu0 %v2219
        %v2748 = vpop.f32.mrf.mxu0
        %v2749 = vadd.f32 %v2660, %v2748
        %v2750 = vpop.f32.mrf.mxu0
        %v2751 = vadd.f32 %v2662, %v2750
        %2752 = vmatmul.bf16.gmra.mxu0 %v2221
        %v2753 = vpop.f32.mrf.mxu0
        %v2754 = vadd.f32 %v2665, %v2753
        %v2755 = vpop.f32.mrf.mxu0
        %v2756 = vadd.f32 %v2667, %v2755
        %2757 = vmatmul.bf16.gmra.mxu0 %v2223
        %v2758 = vpop.f32.mrf.mxu0
        %v2759 = vadd.f32 %v2670, %v2758
        %v2760 = vpop.f32.mrf.mxu0
        %v2761 = vadd.f32 %v2672, %v2760
        %2762 = vmatmul.bf16.gmra.mxu0 %v2225
        %v2763 = vpop.f32.mrf.mxu0
        %v2764 = vadd.f32 %v2675, %v2763
        %v2765 = vpop.f32.mrf.mxu0
        %v2766 = vadd.f32 %v2677, %v2765
        %2767 = vmatmul.bf16.gmra.mxu0 %v2227
        %v2768 = vpop.f32.mrf.mxu0
        %v2769 = vadd.f32 %v2680, %v2768
        %v2770 = vpop.f32.mrf.mxu0
        %v2771 = vadd.f32 %v2682, %v2770
        %2772 = vmatmul.bf16.gmra.mxu0 %v2229
        %v2773 = vpop.f32.mrf.mxu0
        %v2774 = vadd.f32 %v2685, %v2773
        %v2775 = vpop.f32.mrf.mxu0
        %v2776 = vadd.f32 %v2687, %v2775
        %2777 = vdwg.mxu0
        %v2778 = vadd.f32 %v1781, %v2521
        %v2779 = vadd.f32 %v1959, %v2699
        %v2780 = vadd.f32 %v1783, %v2523
        %v2781 = vadd.f32 %v1961, %v2701
        %v2782 = vadd.f32 %v1786, %v2526
        %v2783 = vadd.f32 %v1964, %v2704
        %v2784 = vadd.f32 %v1788, %v2528
        %v2785 = vadd.f32 %v1966, %v2706
        %v2786 = vadd.f32 %v1791, %v2531
        %v2787 = vadd.f32 %v1969, %v2709
        %v2788 = vadd.f32 %v1793, %v2533
        %v2789 = vadd.f32 %v1971, %v2711
        %v2790 = vadd.f32 %v1796, %v2536
        %v2791 = vadd.f32 %v1974, %v2714
        %v2792 = vadd.f32 %v1798, %v2538
        %v2793 = vadd.f32 %v1976, %v2716
        %v2794 = vadd.f32 %v1801, %v2541
        %v2795 = vadd.f32 %v1979, %v2719
        %v2796 = vadd.f32 %v1803, %v2543
        %v2797 = vadd.f32 %v1981, %v2721
        %v2798 = vadd.f32 %v1806, %v2546
        %v2799 = vadd.f32 %v1984, %v2724
        %v2800 = vadd.f32 %v1808, %v2548
        %v2801 = vadd.f32 %v1986, %v2726
        %v2802 = vadd.f32 %v1811, %v2551
        %v2803 = vadd.f32 %v1989, %v2729
        %v2804 = vadd.f32 %v1813, %v2553
        %v2805 = vadd.f32 %v1991, %v2731
        %v2806 = vadd.f32 %v1816, %v2556
        %v2807 = vadd.f32 %v1994, %v2734
        %v2808 = vadd.f32 %v1818, %v2558
        %v2809 = vadd.f32 %v1996, %v2736
        %v2810 = vadd.f32 %v1821, %v2561
        %v2811 = vadd.f32 %v1999, %v2739
        %v2812 = vadd.f32 %v1823, %v2563
        %v2813 = vadd.f32 %v2001, %v2741
        %v2814 = vadd.f32 %v1826, %v2566
        %v2815 = vadd.f32 %v2004, %v2744
        %v2816 = vadd.f32 %v1828, %v2568
        %v2817 = vadd.f32 %v2006, %v2746
        %v2818 = vadd.f32 %v1831, %v2571
        %v2819 = vadd.f32 %v2009, %v2749
        %v2820 = vadd.f32 %v1833, %v2573
        %v2821 = vadd.f32 %v2011, %v2751
        %v2822 = vadd.f32 %v1836, %v2576
        %v2823 = vadd.f32 %v2014, %v2754
        %v2824 = vadd.f32 %v1838, %v2578
        %v2825 = vadd.f32 %v2016, %v2756
        %v2826 = vadd.f32 %v1841, %v2581
        %v2827 = vadd.f32 %v2019, %v2759
        %v2828 = vadd.f32 %v1843, %v2583
        %v2829 = vadd.f32 %v2021, %v2761
        %v2830 = vadd.f32 %v1846, %v2586
        %v2831 = vadd.f32 %v2024, %v2764
        %v2832 = vadd.f32 %v1848, %v2588
        %v2833 = vadd.f32 %v2026, %v2766
        %v2834 = vadd.f32 %v1851, %v2591
        %v2835 = vadd.f32 %v2029, %v2769
        %v2836 = vadd.f32 %v1853, %v2593
        %v2837 = vadd.f32 %v2031, %v2771
        %v2838 = vadd.f32 %v1856, %v2596
        %v2839 = vadd.f32 %v2034, %v2774
        %v2840 = vadd.f32 %v1858, %v2598
        %v2841 = vadd.f32 %v2036, %v2776
        %v2842 = vld [vmem:[%s529] sm:$0xff]
        %v2843 = vld [vmem:[%s529 + $0x8] sm:$0xff]
        %v2844 = vld [vmem:[%s529 + $0x10] sm:$0xff]
        %v2845 = vld [vmem:[%s529 + $0x18] sm:$0xff]
        %v2846 = vld [vmem:[%s529 + $0x20] sm:$0xff]
        %v2847 = vld [vmem:[%s529 + $0x28] sm:$0xff]
        %v2848 = vld [vmem:[%s529 + $0x30] sm:$0xff]
        %v2849 = vld [vmem:[%s529 + $0x38] sm:$0xff]
        %v2850 = vld [vmem:[%s529 + $0x40] sm:$0xff]
        %v2851 = vld [vmem:[%s529 + $0x48] sm:$0xff]
        %v2852 = vld [vmem:[%s529 + $0x50] sm:$0xff]
        %v2853 = vld [vmem:[%s529 + $0x58] sm:$0xff]
        %v2854 = vld [vmem:[%s529 + $0x60] sm:$0xff]
        %v2855 = vld [vmem:[%s529 + $0x68] sm:$0xff]
        %v2856 = vld [vmem:[%s529 + $0x70] sm:$0xff]
        %v2857 = vld [vmem:[%s529 + $0x78] sm:$0xff]
        %v2858 = vld [vmem:[%s529 + $0x80] sm:$0xff]
        %v2859 = vld [vmem:[%s529 + $0x88] sm:$0xff]
        %v2860 = vld [vmem:[%s529 + $0x90] sm:$0xff]
        %v2861 = vld [vmem:[%s529 + $0x98] sm:$0xff]
        %v2862 = vld [vmem:[%s529 + $0xa0] sm:$0xff]
        %v2863 = vld [vmem:[%s529 + $0xa8] sm:$0xff]
        %v2864 = vld [vmem:[%s529 + $0xb0] sm:$0xff]
        %v2865 = vld [vmem:[%s529 + $0xb8] sm:$0xff]
        %v2866 = vld [vmem:[%s529 + $0xc0] sm:$0xff]
        %v2867 = vld [vmem:[%s529 + $0xc8] sm:$0xff]
        %v2868 = vld [vmem:[%s529 + $0xd0] sm:$0xff]
        %v2869 = vld [vmem:[%s529 + $0xd8] sm:$0xff]
        %v2870 = vld [vmem:[%s529 + $0xe0] sm:$0xff]
        %v2871 = vld [vmem:[%s529 + $0xe8] sm:$0xff]
        %v2872 = vld [vmem:[%s529 + $0xf0] sm:$0xff]
        %v2873 = vld [vmem:[%s529 + $0xf8] sm:$0xff]
        %v2874 = vld [vmem:[%s535 + $0x300] sm:$0xff]
        %v2875 = vld [vmem:[%s535 + $0x308] sm:$0xff]
        %v2876 = vld [vmem:[%s535 + $0x310] sm:$0xff]
        %v2877 = vld [vmem:[%s535 + $0x318] sm:$0xff]
        %v2878 = vld [vmem:[%s535 + $0x320] sm:$0xff]
        %v2879 = vld [vmem:[%s535 + $0x328] sm:$0xff]
        %v2880 = vld [vmem:[%s535 + $0x330] sm:$0xff]
        %v2881 = vld [vmem:[%s535 + $0x338] sm:$0xff]
        %v2882 = vld [vmem:[%s535 + $0x340] sm:$0xff]
        %v2883 = vld [vmem:[%s535 + $0x348] sm:$0xff]
        %v2884 = vld [vmem:[%s535 + $0x350] sm:$0xff]
        %v2885 = vld [vmem:[%s535 + $0x358] sm:$0xff]
        %v2886 = vld [vmem:[%s535 + $0x360] sm:$0xff]
        %v2887 = vld [vmem:[%s535 + $0x368] sm:$0xff]
        %v2888 = vld [vmem:[%s535 + $0x370] sm:$0xff]
        %v2889 = vld [vmem:[%s535 + $0x378] sm:$0xff]
        %v2890 = vld [vmem:[%s535 + $0x380] sm:$0xff]
        %v2891 = vld [vmem:[%s535 + $0x388] sm:$0xff]
        %v2892 = vld [vmem:[%s535 + $0x390] sm:$0xff]
        %v2893 = vld [vmem:[%s535 + $0x398] sm:$0xff]
        %v2894 = vld [vmem:[%s535 + $0x3a0] sm:$0xff]
        %v2895 = vld [vmem:[%s535 + $0x3a8] sm:$0xff]
        %v2896 = vld [vmem:[%s535 + $0x3b0] sm:$0xff]
        %v2897 = vld [vmem:[%s535 + $0x3b8] sm:$0xff]
        %v2898 = vld [vmem:[%s535 + $0x3c0] sm:$0xff]
        %v2899 = vld [vmem:[%s535 + $0x3c8] sm:$0xff]
        %v2900 = vld [vmem:[%s535 + $0x3d0] sm:$0xff]
        %v2901 = vld [vmem:[%s535 + $0x3d8] sm:$0xff]
        %v2902 = vld [vmem:[%s535 + $0x3e0] sm:$0xff]
        %v2903 = vld [vmem:[%s535 + $0x3e8] sm:$0xff]
        %v2904 = vld [vmem:[%s535 + $0x3f0] sm:$0xff]
        %v2905 = vld [vmem:[%s535 + $0x3f8] sm:$0xff]
        %v2938 = vunpack.c.l.b16 %v2842
        %v2939 = vunpack.c.h.b16 %v2842
        %v2940 = vunpack.c.l.b16 %v2843
        %v2941 = vunpack.c.h.b16 %v2843
        %v2942 = vunpack.c.l.b16 %v2844
        %v2943 = vunpack.c.h.b16 %v2844
        %v2944 = vunpack.c.l.b16 %v2845
        %v2945 = vunpack.c.h.b16 %v2845
        %v2946 = vunpack.c.l.b16 %v2846
        %v2947 = vunpack.c.h.b16 %v2846
        %v2948 = vunpack.c.l.b16 %v2847
        %v2949 = vunpack.c.h.b16 %v2847
        %v2950 = vunpack.c.l.b16 %v2848
        %v2951 = vunpack.c.h.b16 %v2848
        %v2952 = vunpack.c.l.b16 %v2849
        %v2953 = vunpack.c.h.b16 %v2849
        %v2954 = vunpack.c.l.b16 %v2850
        %v2955 = vunpack.c.h.b16 %v2850
        %v2956 = vunpack.c.l.b16 %v2851
        %v2957 = vunpack.c.h.b16 %v2851
        %v2958 = vunpack.c.l.b16 %v2852
        %v2959 = vunpack.c.h.b16 %v2852
        %v2960 = vunpack.c.l.b16 %v2853
        %v2961 = vunpack.c.h.b16 %v2853
        %v2962 = vunpack.c.l.b16 %v2854
        %v2963 = vunpack.c.h.b16 %v2854
        %v2964 = vunpack.c.l.b16 %v2855
        %v2965 = vunpack.c.h.b16 %v2855
        %v2966 = vunpack.c.l.b16 %v2856
        %v2967 = vunpack.c.h.b16 %v2856
        %v2968 = vunpack.c.l.b16 %v2857
        %v2969 = vunpack.c.h.b16 %v2857
        %v2970 = vunpack.c.l.b16 %v2858
        %v2971 = vunpack.c.h.b16 %v2858
        %v2972 = vunpack.c.l.b16 %v2859
        %v2973 = vunpack.c.h.b16 %v2859
        %v2974 = vunpack.c.l.b16 %v2860
        %v2975 = vunpack.c.h.b16 %v2860
        %v2976 = vunpack.c.l.b16 %v2861
        %v2977 = vunpack.c.h.b16 %v2861
        %v2978 = vunpack.c.l.b16 %v2862
        %v2979 = vunpack.c.h.b16 %v2862
        %v2980 = vunpack.c.l.b16 %v2863
        %v2981 = vunpack.c.h.b16 %v2863
        %v2982 = vunpack.c.l.b16 %v2864
        %v2983 = vunpack.c.h.b16 %v2864
        %v2984 = vunpack.c.l.b16 %v2865
        %v2985 = vunpack.c.h.b16 %v2865
        %v2986 = vunpack.c.l.b16 %v2866
        %v2987 = vunpack.c.h.b16 %v2866
        %v2988 = vunpack.c.l.b16 %v2867
        %v2989 = vunpack.c.h.b16 %v2867
        %v2990 = vunpack.c.l.b16 %v2868
        %v2991 = vunpack.c.h.b16 %v2868
        %v2992 = vunpack.c.l.b16 %v2869
        %v2993 = vunpack.c.h.b16 %v2869
        %v2994 = vunpack.c.l.b16 %v2870
        %v2995 = vunpack.c.h.b16 %v2870
        %v2996 = vunpack.c.l.b16 %v2871
        %v2997 = vunpack.c.h.b16 %v2871
        %v2998 = vunpack.c.l.b16 %v2872
        %v2999 = vunpack.c.h.b16 %v2872
        %v3000 = vunpack.c.l.b16 %v2873
        %v3001 = vunpack.c.h.b16 %v2873
        %v3002 = vpack.c.b16 %v2940, %v2938
        %v3003 = vpack.c.b16 %v2941, %v2939
        %v3004 = vpack.c.b16 %v2944, %v2942
        %v3005 = vpack.c.b16 %v2945, %v2943
        %v3006 = vpack.c.b16 %v2948, %v2946
        %v3007 = vpack.c.b16 %v2949, %v2947
        %v3008 = vpack.c.b16 %v2952, %v2950
        %v3009 = vpack.c.b16 %v2953, %v2951
        %v3010 = vpack.c.b16 %v2956, %v2954
        %v3011 = vpack.c.b16 %v2957, %v2955
        %v3012 = vpack.c.b16 %v2960, %v2958
        %v3013 = vpack.c.b16 %v2961, %v2959
        %v3014 = vpack.c.b16 %v2964, %v2962
        %v3015 = vpack.c.b16 %v2965, %v2963
        %v3016 = vpack.c.b16 %v2968, %v2966
        %v3017 = vpack.c.b16 %v2969, %v2967
        %v3018 = vpack.c.b16 %v2972, %v2970
        %v3019 = vpack.c.b16 %v2973, %v2971
        %v3020 = vpack.c.b16 %v2976, %v2974
        %v3021 = vpack.c.b16 %v2977, %v2975
        %v3022 = vpack.c.b16 %v2980, %v2978
        %v3023 = vpack.c.b16 %v2981, %v2979
        %v3024 = vpack.c.b16 %v2984, %v2982
        %v3025 = vpack.c.b16 %v2985, %v2983
        %v3026 = vpack.c.b16 %v2988, %v2986
        %v3027 = vpack.c.b16 %v2989, %v2987
        %v3028 = vpack.c.b16 %v2992, %v2990
        %v3029 = vpack.c.b16 %v2993, %v2991
        %v3030 = vpack.c.b16 %v2996, %v2994
        %v3031 = vpack.c.b16 %v2997, %v2995
        %v3032 = vpack.c.b16 %v3000, %v2998
        %v3033 = vpack.c.b16 %v3001, %v2999
        %v3098 = vunpack.c.l.b16 %v2874
        %v3099 = vunpack.c.h.b16 %v2874
        %v3100 = vunpack.c.l.b16 %v2875
        %v3101 = vunpack.c.h.b16 %v2875
        %v3102 = vunpack.c.l.b16 %v2876
        %v3103 = vunpack.c.h.b16 %v2876
        %v3104 = vunpack.c.l.b16 %v2877
        %v3105 = vunpack.c.h.b16 %v2877
        %v3106 = vunpack.c.l.b16 %v2878
        %v3107 = vunpack.c.h.b16 %v2878
        %v3108 = vunpack.c.l.b16 %v2879
        %v3109 = vunpack.c.h.b16 %v2879
        %v3110 = vunpack.c.l.b16 %v2880
        %v3111 = vunpack.c.h.b16 %v2880
        %v3112 = vunpack.c.l.b16 %v2881
        %v3113 = vunpack.c.h.b16 %v2881
        %v3114 = vunpack.c.l.b16 %v2882
        %v3115 = vunpack.c.h.b16 %v2882
        %v3116 = vunpack.c.l.b16 %v2883
        %v3117 = vunpack.c.h.b16 %v2883
        %v3118 = vunpack.c.l.b16 %v2884
        %v3119 = vunpack.c.h.b16 %v2884
        %v3120 = vunpack.c.l.b16 %v2885
        %v3121 = vunpack.c.h.b16 %v2885
        %v3122 = vunpack.c.l.b16 %v2886
        %v3123 = vunpack.c.h.b16 %v2886
        %v3124 = vunpack.c.l.b16 %v2887
        %v3125 = vunpack.c.h.b16 %v2887
        %v3126 = vunpack.c.l.b16 %v2888
        %v3127 = vunpack.c.h.b16 %v2888
        %v3128 = vunpack.c.l.b16 %v2889
        %v3129 = vunpack.c.h.b16 %v2889
        %v3130 = vunpack.c.l.b16 %v2890
        %v3131 = vunpack.c.h.b16 %v2890
        %v3132 = vunpack.c.l.b16 %v2891
        %v3133 = vunpack.c.h.b16 %v2891
        %v3134 = vunpack.c.l.b16 %v2892
        %v3135 = vunpack.c.h.b16 %v2892
        %v3136 = vunpack.c.l.b16 %v2893
        %v3137 = vunpack.c.h.b16 %v2893
        %v3138 = vunpack.c.l.b16 %v2894
        %v3139 = vunpack.c.h.b16 %v2894
        %v3140 = vunpack.c.l.b16 %v2895
        %v3141 = vunpack.c.h.b16 %v2895
        %v3142 = vunpack.c.l.b16 %v2896
        %v3143 = vunpack.c.h.b16 %v2896
        %v3144 = vunpack.c.l.b16 %v2897
        %v3145 = vunpack.c.h.b16 %v2897
        %v3146 = vunpack.c.l.b16 %v2898
        %v3147 = vunpack.c.h.b16 %v2898
        %v3148 = vunpack.c.l.b16 %v2899
        %v3149 = vunpack.c.h.b16 %v2899
        %v3150 = vunpack.c.l.b16 %v2900
        %v3151 = vunpack.c.h.b16 %v2900
        %v3152 = vunpack.c.l.b16 %v2901
        %v3153 = vunpack.c.h.b16 %v2901
        %v3154 = vunpack.c.l.b16 %v2902
        %v3155 = vunpack.c.h.b16 %v2902
        %v3156 = vunpack.c.l.b16 %v2903
        %v3157 = vunpack.c.h.b16 %v2903
        %v3158 = vunpack.c.l.b16 %v2904
        %v3159 = vunpack.c.h.b16 %v2904
        %v3160 = vunpack.c.l.b16 %v2905
        %v3161 = vunpack.c.h.b16 %v2905
        %v3162 = vpack.c.b16 %v3100, %v3098
        %v3163 = vpack.c.b16 %v3101, %v3099
        %v3164 = vpack.c.b16 %v3104, %v3102
        %v3165 = vpack.c.b16 %v3105, %v3103
        %v3166 = vpack.c.b16 %v3108, %v3106
        %v3167 = vpack.c.b16 %v3109, %v3107
        %v3168 = vpack.c.b16 %v3112, %v3110
        %v3169 = vpack.c.b16 %v3113, %v3111
        %v3170 = vpack.c.b16 %v3116, %v3114
        %v3171 = vpack.c.b16 %v3117, %v3115
        %v3172 = vpack.c.b16 %v3120, %v3118
        %v3173 = vpack.c.b16 %v3121, %v3119
        %v3174 = vpack.c.b16 %v3124, %v3122
        %v3175 = vpack.c.b16 %v3125, %v3123
        %v3176 = vpack.c.b16 %v3128, %v3126
        %v3177 = vpack.c.b16 %v3129, %v3127
        %v3178 = vpack.c.b16 %v3132, %v3130
        %v3179 = vpack.c.b16 %v3133, %v3131
        %v3180 = vpack.c.b16 %v3136, %v3134
        %v3181 = vpack.c.b16 %v3137, %v3135
        %v3182 = vpack.c.b16 %v3140, %v3138
        %v3183 = vpack.c.b16 %v3141, %v3139
        %v3184 = vpack.c.b16 %v3144, %v3142
        %v3185 = vpack.c.b16 %v3145, %v3143
        %v3186 = vpack.c.b16 %v3148, %v3146
        %v3187 = vpack.c.b16 %v3149, %v3147
        %v3188 = vpack.c.b16 %v3152, %v3150
        %v3189 = vpack.c.b16 %v3153, %v3151
        %v3190 = vpack.c.b16 %v3156, %v3154
        %v3191 = vpack.c.b16 %v3157, %v3155
        %v3192 = vpack.c.b16 %v3160, %v3158
        %v3193 = vpack.c.b16 %v3161, %v3159
        %3226 = vmatpush.bf16.msra.mxu0 %v3176
        %3227 = vmatpush.bf16.msra.mxu0 %v3174
        %3228 = vmatpush.bf16.msra.mxu0 %v3172
        %3229 = vmatpush.bf16.msra.mxu0 %v3170
        %3230 = vmatpush.bf16.msra.mxu0 %v3168
        %3231 = vmatpush.bf16.msra.mxu0 %v3166
        %3232 = vmatpush.bf16.msra.mxu0 %v3164
        %3233 = vmatpush.bf16.msra.mxu0 %v3162
        %3234 = vmatmul.bf16.gmra.mxu0 %v3002
        %v3235 = vpop.f32.mrf.mxu0
        %v3236 = vadd.f32 0.0, %v3235
        %v3237 = vpop.f32.mrf.mxu0
        %v3238 = vadd.f32 0.0, %v3237
        %3239 = vmatmul.bf16.gmra.mxu0 %v3004
        %v3240 = vpop.f32.mrf.mxu0
        %v3241 = vadd.f32 0.0, %v3240
        %v3242 = vpop.f32.mrf.mxu0
        %v3243 = vadd.f32 0.0, %v3242
        %3244 = vmatmul.bf16.gmra.mxu0 %v3006
        %v3245 = vpop.f32.mrf.mxu0
        %v3246 = vadd.f32 0.0, %v3245
        %v3247 = vpop.f32.mrf.mxu0
        %v3248 = vadd.f32 0.0, %v3247
        %3249 = vmatmul.bf16.gmra.mxu0 %v3008
        %v3250 = vpop.f32.mrf.mxu0
        %v3251 = vadd.f32 0.0, %v3250
        %v3252 = vpop.f32.mrf.mxu0
        %v3253 = vadd.f32 0.0, %v3252
        %3254 = vmatmul.bf16.gmra.mxu0 %v3010
        %v3255 = vpop.f32.mrf.mxu0
        %v3256 = vadd.f32 0.0, %v3255
        %v3257 = vpop.f32.mrf.mxu0
        %v3258 = vadd.f32 0.0, %v3257
        %3259 = vmatmul.bf16.gmra.mxu0 %v3012
        %v3260 = vpop.f32.mrf.mxu0
        %v3261 = vadd.f32 0.0, %v3260
        %v3262 = vpop.f32.mrf.mxu0
        %v3263 = vadd.f32 0.0, %v3262
        %3264 = vmatmul.bf16.gmra.mxu0 %v3014
        %v3265 = vpop.f32.mrf.mxu0
        %v3266 = vadd.f32 0.0, %v3265
        %v3267 = vpop.f32.mrf.mxu0
        %v3268 = vadd.f32 0.0, %v3267
        %3269 = vmatmul.bf16.gmra.mxu0 %v3016
        %v3270 = vpop.f32.mrf.mxu0
        %v3271 = vadd.f32 0.0, %v3270
        %v3272 = vpop.f32.mrf.mxu0
        %v3273 = vadd.f32 0.0, %v3272
        %3274 = vmatmul.bf16.gmra.mxu0 %v3018
        %v3275 = vpop.f32.mrf.mxu0
        %v3276 = vadd.f32 0.0, %v3275
        %v3277 = vpop.f32.mrf.mxu0
        %v3278 = vadd.f32 0.0, %v3277
        %3279 = vmatmul.bf16.gmra.mxu0 %v3020
        %v3280 = vpop.f32.mrf.mxu0
        %v3281 = vadd.f32 0.0, %v3280
        %v3282 = vpop.f32.mrf.mxu0
        %v3283 = vadd.f32 0.0, %v3282
        %3284 = vmatmul.bf16.gmra.mxu0 %v3022
        %v3285 = vpop.f32.mrf.mxu0
        %v3286 = vadd.f32 0.0, %v3285
        %v3287 = vpop.f32.mrf.mxu0
        %v3288 = vadd.f32 0.0, %v3287
        %3289 = vmatmul.bf16.gmra.mxu0 %v3024
        %v3290 = vpop.f32.mrf.mxu0
        %v3291 = vadd.f32 0.0, %v3290
        %v3292 = vpop.f32.mrf.mxu0
        %v3293 = vadd.f32 0.0, %v3292
        %3294 = vmatmul.bf16.gmra.mxu0 %v3026
        %v3295 = vpop.f32.mrf.mxu0
        %v3296 = vadd.f32 0.0, %v3295
        %v3297 = vpop.f32.mrf.mxu0
        %v3298 = vadd.f32 0.0, %v3297
        %3299 = vmatmul.bf16.gmra.mxu0 %v3028
        %v3300 = vpop.f32.mrf.mxu0
        %v3301 = vadd.f32 0.0, %v3300
        %v3302 = vpop.f32.mrf.mxu0
        %v3303 = vadd.f32 0.0, %v3302
        %3304 = vmatmul.bf16.gmra.mxu0 %v3030
        %v3305 = vpop.f32.mrf.mxu0
        %v3306 = vadd.f32 0.0, %v3305
        %v3307 = vpop.f32.mrf.mxu0
        %v3308 = vadd.f32 0.0, %v3307
        %3309 = vmatmul.bf16.gmra.mxu0 %v3032
        %v3310 = vpop.f32.mrf.mxu0
        %v3311 = vadd.f32 0.0, %v3310
        %v3312 = vpop.f32.mrf.mxu0
        %v3313 = vadd.f32 0.0, %v3312
        %3314 = vdwg.mxu0
        %3315 = vmatpush.bf16.msra.mxu0 %v3192
        %3316 = vmatpush.bf16.msra.mxu0 %v3190
        %3317 = vmatpush.bf16.msra.mxu0 %v3188
        %3318 = vmatpush.bf16.msra.mxu0 %v3186
        %3319 = vmatpush.bf16.msra.mxu0 %v3184
        %3320 = vmatpush.bf16.msra.mxu0 %v3182
        %3321 = vmatpush.bf16.msra.mxu0 %v3180
        %3322 = vmatpush.bf16.msra.mxu0 %v3178
        %3323 = vmatmul.bf16.gmra.mxu0 %v3003
        %v3324 = vpop.f32.mrf.mxu0
        %v3325 = vadd.f32 %v3236, %v3324
        %v3326 = vpop.f32.mrf.mxu0
        %v3327 = vadd.f32 %v3238, %v3326
        %3328 = vmatmul.bf16.gmra.mxu0 %v3005
        %v3329 = vpop.f32.mrf.mxu0
        %v3330 = vadd.f32 %v3241, %v3329
        %v3331 = vpop.f32.mrf.mxu0
        %v3332 = vadd.f32 %v3243, %v3331
        %3333 = vmatmul.bf16.gmra.mxu0 %v3007
        %v3334 = vpop.f32.mrf.mxu0
        %v3335 = vadd.f32 %v3246, %v3334
        %v3336 = vpop.f32.mrf.mxu0
        %v3337 = vadd.f32 %v3248, %v3336
        %3338 = vmatmul.bf16.gmra.mxu0 %v3009
        %v3339 = vpop.f32.mrf.mxu0
        %v3340 = vadd.f32 %v3251, %v3339
        %v3341 = vpop.f32.mrf.mxu0
        %v3342 = vadd.f32 %v3253, %v3341
        %3343 = vmatmul.bf16.gmra.mxu0 %v3011
        %v3344 = vpop.f32.mrf.mxu0
        %v3345 = vadd.f32 %v3256, %v3344
        %v3346 = vpop.f32.mrf.mxu0
        %v3347 = vadd.f32 %v3258, %v3346
        %3348 = vmatmul.bf16.gmra.mxu0 %v3013
        %v3349 = vpop.f32.mrf.mxu0
        %v3350 = vadd.f32 %v3261, %v3349
        %v3351 = vpop.f32.mrf.mxu0
        %v3352 = vadd.f32 %v3263, %v3351
        %3353 = vmatmul.bf16.gmra.mxu0 %v3015
        %v3354 = vpop.f32.mrf.mxu0
        %v3355 = vadd.f32 %v3266, %v3354
        %v3356 = vpop.f32.mrf.mxu0
        %v3357 = vadd.f32 %v3268, %v3356
        %3358 = vmatmul.bf16.gmra.mxu0 %v3017
        %v3359 = vpop.f32.mrf.mxu0
        %v3360 = vadd.f32 %v3271, %v3359
        %v3361 = vpop.f32.mrf.mxu0
        %v3362 = vadd.f32 %v3273, %v3361
        %3363 = vmatmul.bf16.gmra.mxu0 %v3019
        %v3364 = vpop.f32.mrf.mxu0
        %v3365 = vadd.f32 %v3276, %v3364
        %v3366 = vpop.f32.mrf.mxu0
        %v3367 = vadd.f32 %v3278, %v3366
        %3368 = vmatmul.bf16.gmra.mxu0 %v3021
        %v3369 = vpop.f32.mrf.mxu0
        %v3370 = vadd.f32 %v3281, %v3369
        %v3371 = vpop.f32.mrf.mxu0
        %v3372 = vadd.f32 %v3283, %v3371
        %3373 = vmatmul.bf16.gmra.mxu0 %v3023
        %v3374 = vpop.f32.mrf.mxu0
        %v3375 = vadd.f32 %v3286, %v3374
        %v3376 = vpop.f32.mrf.mxu0
        %v3377 = vadd.f32 %v3288, %v3376
        %3378 = vmatmul.bf16.gmra.mxu0 %v3025
        %v3379 = vpop.f32.mrf.mxu0
        %v3380 = vadd.f32 %v3291, %v3379
        %v3381 = vpop.f32.mrf.mxu0
        %v3382 = vadd.f32 %v3293, %v3381
        %3383 = vmatmul.bf16.gmra.mxu0 %v3027
        %v3384 = vpop.f32.mrf.mxu0
        %v3385 = vadd.f32 %v3296, %v3384
        %v3386 = vpop.f32.mrf.mxu0
        %v3387 = vadd.f32 %v3298, %v3386
        %3388 = vmatmul.bf16.gmra.mxu0 %v3029
        %v3389 = vpop.f32.mrf.mxu0
        %v3390 = vadd.f32 %v3301, %v3389
        %v3391 = vpop.f32.mrf.mxu0
        %v3392 = vadd.f32 %v3303, %v3391
        %3393 = vmatmul.bf16.gmra.mxu0 %v3031
        %v3394 = vpop.f32.mrf.mxu0
        %v3395 = vadd.f32 %v3306, %v3394
        %v3396 = vpop.f32.mrf.mxu0
        %v3397 = vadd.f32 %v3308, %v3396
        %3398 = vmatmul.bf16.gmra.mxu0 %v3033
        %v3399 = vpop.f32.mrf.mxu0
        %v3400 = vadd.f32 %v3311, %v3399
        %v3401 = vpop.f32.mrf.mxu0
        %v3402 = vadd.f32 %v3313, %v3401
        %3403 = vdwg.mxu0
        %3404 = vmatpush.bf16.msra.mxu0 %v3177
        %3405 = vmatpush.bf16.msra.mxu0 %v3175
        %3406 = vmatpush.bf16.msra.mxu0 %v3173
        %3407 = vmatpush.bf16.msra.mxu0 %v3171
        %3408 = vmatpush.bf16.msra.mxu0 %v3169
        %3409 = vmatpush.bf16.msra.mxu0 %v3167
        %3410 = vmatpush.bf16.msra.mxu0 %v3165
        %3411 = vmatpush.bf16.msra.mxu0 %v3163
        %3412 = vmatmul.bf16.gmra.mxu0 %v3002
        %v3413 = vpop.f32.mrf.mxu0
        %v3414 = vadd.f32 0.0, %v3413
        %v3415 = vpop.f32.mrf.mxu0
        %v3416 = vadd.f32 0.0, %v3415
        %3417 = vmatmul.bf16.gmra.mxu0 %v3004
        %v3418 = vpop.f32.mrf.mxu0
        %v3419 = vadd.f32 0.0, %v3418
        %v3420 = vpop.f32.mrf.mxu0
        %v3421 = vadd.f32 0.0, %v3420
        %3422 = vmatmul.bf16.gmra.mxu0 %v3006
        %v3423 = vpop.f32.mrf.mxu0
        %v3424 = vadd.f32 0.0, %v3423
        %v3425 = vpop.f32.mrf.mxu0
        %v3426 = vadd.f32 0.0, %v3425
        %3427 = vmatmul.bf16.gmra.mxu0 %v3008
        %v3428 = vpop.f32.mrf.mxu0
        %v3429 = vadd.f32 0.0, %v3428
        %v3430 = vpop.f32.mrf.mxu0
        %v3431 = vadd.f32 0.0, %v3430
        %3432 = vmatmul.bf16.gmra.mxu0 %v3010
        %v3433 = vpop.f32.mrf.mxu0
        %v3434 = vadd.f32 0.0, %v3433
        %v3435 = vpop.f32.mrf.mxu0
        %v3436 = vadd.f32 0.0, %v3435
        %3437 = vmatmul.bf16.gmra.mxu0 %v3012
        %v3438 = vpop.f32.mrf.mxu0
        %v3439 = vadd.f32 0.0, %v3438
        %v3440 = vpop.f32.mrf.mxu0
        %v3441 = vadd.f32 0.0, %v3440
        %3442 = vmatmul.bf16.gmra.mxu0 %v3014
        %v3443 = vpop.f32.mrf.mxu0
        %v3444 = vadd.f32 0.0, %v3443
        %v3445 = vpop.f32.mrf.mxu0
        %v3446 = vadd.f32 0.0, %v3445
        %3447 = vmatmul.bf16.gmra.mxu0 %v3016
        %v3448 = vpop.f32.mrf.mxu0
        %v3449 = vadd.f32 0.0, %v3448
        %v3450 = vpop.f32.mrf.mxu0
        %v3451 = vadd.f32 0.0, %v3450
        %3452 = vmatmul.bf16.gmra.mxu0 %v3018
        %v3453 = vpop.f32.mrf.mxu0
        %v3454 = vadd.f32 0.0, %v3453
        %v3455 = vpop.f32.mrf.mxu0
        %v3456 = vadd.f32 0.0, %v3455
        %3457 = vmatmul.bf16.gmra.mxu0 %v3020
        %v3458 = vpop.f32.mrf.mxu0
        %v3459 = vadd.f32 0.0, %v3458
        %v3460 = vpop.f32.mrf.mxu0
        %v3461 = vadd.f32 0.0, %v3460
        %3462 = vmatmul.bf16.gmra.mxu0 %v3022
        %v3463 = vpop.f32.mrf.mxu0
        %v3464 = vadd.f32 0.0, %v3463
        %v3465 = vpop.f32.mrf.mxu0
        %v3466 = vadd.f32 0.0, %v3465
        %3467 = vmatmul.bf16.gmra.mxu0 %v3024
        %v3468 = vpop.f32.mrf.mxu0
        %v3469 = vadd.f32 0.0, %v3468
        %v3470 = vpop.f32.mrf.mxu0
        %v3471 = vadd.f32 0.0, %v3470
        %3472 = vmatmul.bf16.gmra.mxu0 %v3026
        %v3473 = vpop.f32.mrf.mxu0
        %v3474 = vadd.f32 0.0, %v3473
        %v3475 = vpop.f32.mrf.mxu0
        %v3476 = vadd.f32 0.0, %v3475
        %3477 = vmatmul.bf16.gmra.mxu0 %v3028
        %v3478 = vpop.f32.mrf.mxu0
        %v3479 = vadd.f32 0.0, %v3478
        %v3480 = vpop.f32.mrf.mxu0
        %v3481 = vadd.f32 0.0, %v3480
        %3482 = vmatmul.bf16.gmra.mxu0 %v3030
        %v3483 = vpop.f32.mrf.mxu0
        %v3484 = vadd.f32 0.0, %v3483
        %v3485 = vpop.f32.mrf.mxu0
        %v3486 = vadd.f32 0.0, %v3485
        %3487 = vmatmul.bf16.gmra.mxu0 %v3032
        %v3488 = vpop.f32.mrf.mxu0
        %v3489 = vadd.f32 0.0, %v3488
        %v3490 = vpop.f32.mrf.mxu0
        %v3491 = vadd.f32 0.0, %v3490
        %3492 = vdwg.mxu0
        %3493 = vmatpush.bf16.msra.mxu0 %v3193
        %3494 = vmatpush.bf16.msra.mxu0 %v3191
        %3495 = vmatpush.bf16.msra.mxu0 %v3189
        %3496 = vmatpush.bf16.msra.mxu0 %v3187
        %3497 = vmatpush.bf16.msra.mxu0 %v3185
        %3498 = vmatpush.bf16.msra.mxu0 %v3183
        %3499 = vmatpush.bf16.msra.mxu0 %v3181
        %3500 = vmatpush.bf16.msra.mxu0 %v3179
        %3501 = vmatmul.bf16.gmra.mxu0 %v3003
        %v3502 = vpop.f32.mrf.mxu0
        %v3503 = vadd.f32 %v3414, %v3502
        %v3504 = vpop.f32.mrf.mxu0
        %v3505 = vadd.f32 %v3416, %v3504
        %3506 = vmatmul.bf16.gmra.mxu0 %v3005
        %v3507 = vpop.f32.mrf.mxu0
        %v3508 = vadd.f32 %v3419, %v3507
        %v3509 = vpop.f32.mrf.mxu0
        %v3510 = vadd.f32 %v3421, %v3509
        %3511 = vmatmul.bf16.gmra.mxu0 %v3007
        %v3512 = vpop.f32.mrf.mxu0
        %v3513 = vadd.f32 %v3424, %v3512
        %v3514 = vpop.f32.mrf.mxu0
        %v3515 = vadd.f32 %v3426, %v3514
        %3516 = vmatmul.bf16.gmra.mxu0 %v3009
        %v3517 = vpop.f32.mrf.mxu0
        %v3518 = vadd.f32 %v3429, %v3517
        %v3519 = vpop.f32.mrf.mxu0
        %v3520 = vadd.f32 %v3431, %v3519
        %3521 = vmatmul.bf16.gmra.mxu0 %v3011
        %v3522 = vpop.f32.mrf.mxu0
        %v3523 = vadd.f32 %v3434, %v3522
        %v3524 = vpop.f32.mrf.mxu0
        %v3525 = vadd.f32 %v3436, %v3524
        %3526 = vmatmul.bf16.gmra.mxu0 %v3013
        %v3527 = vpop.f32.mrf.mxu0
        %v3528 = vadd.f32 %v3439, %v3527
        %v3529 = vpop.f32.mrf.mxu0
        %v3530 = vadd.f32 %v3441, %v3529
        %3531 = vmatmul.bf16.gmra.mxu0 %v3015
        %v3532 = vpop.f32.mrf.mxu0
        %v3533 = vadd.f32 %v3444, %v3532
        %v3534 = vpop.f32.mrf.mxu0
        %v3535 = vadd.f32 %v3446, %v3534
        %3536 = vmatmul.bf16.gmra.mxu0 %v3017
        %v3537 = vpop.f32.mrf.mxu0
        %v3538 = vadd.f32 %v3449, %v3537
        %v3539 = vpop.f32.mrf.mxu0
        %v3540 = vadd.f32 %v3451, %v3539
        %3541 = vmatmul.bf16.gmra.mxu0 %v3019
        %v3542 = vpop.f32.mrf.mxu0
        %v3543 = vadd.f32 %v3454, %v3542
        %v3544 = vpop.f32.mrf.mxu0
        %v3545 = vadd.f32 %v3456, %v3544
        %3546 = vmatmul.bf16.gmra.mxu0 %v3021
        %v3547 = vpop.f32.mrf.mxu0
        %v3548 = vadd.f32 %v3459, %v3547
        %v3549 = vpop.f32.mrf.mxu0
        %v3550 = vadd.f32 %v3461, %v3549
        %3551 = vmatmul.bf16.gmra.mxu0 %v3023
        %v3552 = vpop.f32.mrf.mxu0
        %v3553 = vadd.f32 %v3464, %v3552
        %v3554 = vpop.f32.mrf.mxu0
        %v3555 = vadd.f32 %v3466, %v3554
        %3556 = vmatmul.bf16.gmra.mxu0 %v3025
        %v3557 = vpop.f32.mrf.mxu0
        %v3558 = vadd.f32 %v3469, %v3557
        %v3559 = vpop.f32.mrf.mxu0
        %v3560 = vadd.f32 %v3471, %v3559
        %3561 = vmatmul.bf16.gmra.mxu0 %v3027
        %v3562 = vpop.f32.mrf.mxu0
        %v3563 = vadd.f32 %v3474, %v3562
        %v3564 = vpop.f32.mrf.mxu0
        %v3565 = vadd.f32 %v3476, %v3564
        %3566 = vmatmul.bf16.gmra.mxu0 %v3029
        %v3567 = vpop.f32.mrf.mxu0
        %v3568 = vadd.f32 %v3479, %v3567
        %v3569 = vpop.f32.mrf.mxu0
        %v3570 = vadd.f32 %v3481, %v3569
        %3571 = vmatmul.bf16.gmra.mxu0 %v3031
        %v3572 = vpop.f32.mrf.mxu0
        %v3573 = vadd.f32 %v3484, %v3572
        %v3574 = vpop.f32.mrf.mxu0
        %v3575 = vadd.f32 %v3486, %v3574
        %3576 = vmatmul.bf16.gmra.mxu0 %v3033
        %v3577 = vpop.f32.mrf.mxu0
        %v3578 = vadd.f32 %v3489, %v3577
        %v3579 = vpop.f32.mrf.mxu0
        %v3580 = vadd.f32 %v3491, %v3579
        %3581 = vdwg.mxu0
        %v3582 = vadd.f32 %v2778, %v3325
        %v3583 = vadd.f32 %v2779, %v3503
        %v3584 = vadd.f32 %v2780, %v3327
        %v3585 = vadd.f32 %v2781, %v3505
        %v3586 = vadd.f32 %v2782, %v3330
        %v3587 = vadd.f32 %v2783, %v3508
        %v3588 = vadd.f32 %v2784, %v3332
        %v3589 = vadd.f32 %v2785, %v3510
        %v3590 = vadd.f32 %v2786, %v3335
        %v3591 = vadd.f32 %v2787, %v3513
        %v3592 = vadd.f32 %v2788, %v3337
        %v3593 = vadd.f32 %v2789, %v3515
        %v3594 = vadd.f32 %v2790, %v3340
        %v3595 = vadd.f32 %v2791, %v3518
        %v3596 = vadd.f32 %v2792, %v3342
        %v3597 = vadd.f32 %v2793, %v3520
        %v3598 = vadd.f32 %v2794, %v3345
        %v3599 = vadd.f32 %v2795, %v3523
        %v3600 = vadd.f32 %v2796, %v3347
        %v3601 = vadd.f32 %v2797, %v3525
        %v3602 = vadd.f32 %v2798, %v3350
        %v3603 = vadd.f32 %v2799, %v3528
        %v3604 = vadd.f32 %v2800, %v3352
        %v3605 = vadd.f32 %v2801, %v3530
        %v3606 = vadd.f32 %v2802, %v3355
        %v3607 = vadd.f32 %v2803, %v3533
        %v3608 = vadd.f32 %v2804, %v3357
        %v3609 = vadd.f32 %v2805, %v3535
        %v3610 = vadd.f32 %v2806, %v3360
        %v3611 = vadd.f32 %v2807, %v3538
        %v3612 = vadd.f32 %v2808, %v3362
        %v3613 = vadd.f32 %v2809, %v3540
        %v3614 = vadd.f32 %v2810, %v3365
        %v3615 = vadd.f32 %v2811, %v3543
        %v3616 = vadd.f32 %v2812, %v3367
        %v3617 = vadd.f32 %v2813, %v3545
        %v3618 = vadd.f32 %v2814, %v3370
        %v3619 = vadd.f32 %v2815, %v3548
        %v3620 = vadd.f32 %v2816, %v3372
        %v3621 = vadd.f32 %v2817, %v3550
        %v3622 = vadd.f32 %v2818, %v3375
        %v3623 = vadd.f32 %v2819, %v3553
        %v3624 = vadd.f32 %v2820, %v3377
        %v3625 = vadd.f32 %v2821, %v3555
        %v3626 = vadd.f32 %v2822, %v3380
        %v3627 = vadd.f32 %v2823, %v3558
        %v3628 = vadd.f32 %v2824, %v3382
        %v3629 = vadd.f32 %v2825, %v3560
        %v3630 = vadd.f32 %v2826, %v3385
        %v3631 = vadd.f32 %v2827, %v3563
        %v3632 = vadd.f32 %v2828, %v3387
        %v3633 = vadd.f32 %v2829, %v3565
        %v3634 = vadd.f32 %v2830, %v3390
        %v3635 = vadd.f32 %v2831, %v3568
        %v3636 = vadd.f32 %v2832, %v3392
        %v3637 = vadd.f32 %v2833, %v3570
        %v3638 = vadd.f32 %v2834, %v3395
        %v3639 = vadd.f32 %v2835, %v3573
        %v3640 = vadd.f32 %v2836, %v3397
        %v3641 = vadd.f32 %v2837, %v3575
        %v3642 = vadd.f32 %v2838, %v3400
        %v3643 = vadd.f32 %v2839, %v3578
        %v3644 = vadd.f32 %v2840, %v3402
        %v3645 = vadd.f32 %v2841, %v3580
        %v3646 = vld [vmem:[%s554] sm:$0x3]
        %v3648 = vperm.slane %v3646, 0
        %v3649 = vperm.slane %v3646, 1
        %v3652 = vadd.f32 %v3582, %v3648
        %v3653 = vadd.f32 %v3583, %v3649
        %v3654 = vadd.f32 %v3584, %v3648
        %v3655 = vadd.f32 %v3585, %v3649
        %v3656 = vadd.f32 %v3586, %v3648
        %v3657 = vadd.f32 %v3587, %v3649
        %v3658 = vadd.f32 %v3588, %v3648
        %v3659 = vadd.f32 %v3589, %v3649
        %v3660 = vadd.f32 %v3590, %v3648
        %v3661 = vadd.f32 %v3591, %v3649
        %v3662 = vadd.f32 %v3592, %v3648
        %v3663 = vadd.f32 %v3593, %v3649
        %v3664 = vadd.f32 %v3594, %v3648
        %v3665 = vadd.f32 %v3595, %v3649
        %v3666 = vadd.f32 %v3596, %v3648
        %v3667 = vadd.f32 %v3597, %v3649
        %v3668 = vadd.f32 %v3598, %v3648
        %v3669 = vadd.f32 %v3599, %v3649
        %v3670 = vadd.f32 %v3600, %v3648
        %v3671 = vadd.f32 %v3601, %v3649
        %v3672 = vadd.f32 %v3602, %v3648
        %v3673 = vadd.f32 %v3603, %v3649
        %v3674 = vadd.f32 %v3604, %v3648
        %v3675 = vadd.f32 %v3605, %v3649
        %v3676 = vadd.f32 %v3606, %v3648
        %v3677 = vadd.f32 %v3607, %v3649
        %v3678 = vadd.f32 %v3608, %v3648
        %v3679 = vadd.f32 %v3609, %v3649
        %v3680 = vadd.f32 %v3610, %v3648
        %v3681 = vadd.f32 %v3611, %v3649
        %v3682 = vadd.f32 %v3612, %v3648
        %v3683 = vadd.f32 %v3613, %v3649
        %v3684 = vadd.f32 %v3614, %v3648
        %v3685 = vadd.f32 %v3615, %v3649
        %v3686 = vadd.f32 %v3616, %v3648
        %v3687 = vadd.f32 %v3617, %v3649
        %v3688 = vadd.f32 %v3618, %v3648
        %v3689 = vadd.f32 %v3619, %v3649
        %v3690 = vadd.f32 %v3620, %v3648
        %v3691 = vadd.f32 %v3621, %v3649
        %v3692 = vadd.f32 %v3622, %v3648
        %v3693 = vadd.f32 %v3623, %v3649
        %v3694 = vadd.f32 %v3624, %v3648
        %v3695 = vadd.f32 %v3625, %v3649
        %v3696 = vadd.f32 %v3626, %v3648
        %v3697 = vadd.f32 %v3627, %v3649
        %v3698 = vadd.f32 %v3628, %v3648
        %v3699 = vadd.f32 %v3629, %v3649
        %v3700 = vadd.f32 %v3630, %v3648
        %v3701 = vadd.f32 %v3631, %v3649
        %v3702 = vadd.f32 %v3632, %v3648
        %v3703 = vadd.f32 %v3633, %v3649
        %v3704 = vadd.f32 %v3634, %v3648
        %v3705 = vadd.f32 %v3635, %v3649
        %v3706 = vadd.f32 %v3636, %v3648
        %v3707 = vadd.f32 %v3637, %v3649
        %v3708 = vadd.f32 %v3638, %v3648
        %v3709 = vadd.f32 %v3639, %v3649
        %v3710 = vadd.f32 %v3640, %v3648
        %v3711 = vadd.f32 %v3641, %v3649
        %v3712 = vadd.f32 %v3642, %v3648
        %v3713 = vadd.f32 %v3643, %v3649
        %v3714 = vadd.f32 %v3644, %v3648
        %v3715 = vadd.f32 %v3645, %v3649
        %v3716 = vld [vmem:[%s540] sm:$0x3]
        %v3718 = vperm.slane %v3716, 0
        %v3719 = vperm.slane %v3716, 1
        %v3722 = vmul.f32 %v3652, %v3718
        %v3723 = vmul.f32 %v3653, %v3719
        %v3724 = vmul.f32 %v3654, %v3718
        %v3725 = vmul.f32 %v3655, %v3719
        %v3726 = vmul.f32 %v3656, %v3718
        %v3727 = vmul.f32 %v3657, %v3719
        %v3728 = vmul.f32 %v3658, %v3718
        %v3729 = vmul.f32 %v3659, %v3719
        %v3730 = vmul.f32 %v3660, %v3718
        %v3731 = vmul.f32 %v3661, %v3719
        %v3732 = vmul.f32 %v3662, %v3718
        %v3733 = vmul.f32 %v3663, %v3719
        %v3734 = vmul.f32 %v3664, %v3718
        %v3735 = vmul.f32 %v3665, %v3719
        %v3736 = vmul.f32 %v3666, %v3718
        %v3737 = vmul.f32 %v3667, %v3719
        %v3738 = vmul.f32 %v3668, %v3718
        %v3739 = vmul.f32 %v3669, %v3719
        %v3740 = vmul.f32 %v3670, %v3718
        %v3741 = vmul.f32 %v3671, %v3719
        %v3742 = vmul.f32 %v3672, %v3718
        %v3743 = vmul.f32 %v3673, %v3719
        %v3744 = vmul.f32 %v3674, %v3718
        %v3745 = vmul.f32 %v3675, %v3719
        %v3746 = vmul.f32 %v3676, %v3718
        %v3747 = vmul.f32 %v3677, %v3719
        %v3748 = vmul.f32 %v3678, %v3718
        %v3749 = vmul.f32 %v3679, %v3719
        %v3750 = vmul.f32 %v3680, %v3718
        %v3751 = vmul.f32 %v3681, %v3719
        %v3752 = vmul.f32 %v3682, %v3718
        %v3753 = vmul.f32 %v3683, %v3719
        %v3754 = vmul.f32 %v3684, %v3718
        %v3755 = vmul.f32 %v3685, %v3719
        %v3756 = vmul.f32 %v3686, %v3718
        %v3757 = vmul.f32 %v3687, %v3719
        %v3758 = vmul.f32 %v3688, %v3718
        %v3759 = vmul.f32 %v3689, %v3719
        %v3760 = vmul.f32 %v3690, %v3718
        %v3761 = vmul.f32 %v3691, %v3719
        %v3762 = vmul.f32 %v3692, %v3718
        %v3763 = vmul.f32 %v3693, %v3719
        %v3764 = vmul.f32 %v3694, %v3718
        %v3765 = vmul.f32 %v3695, %v3719
        %v3766 = vmul.f32 %v3696, %v3718
        %v3767 = vmul.f32 %v3697, %v3719
        %v3768 = vmul.f32 %v3698, %v3718
        %v3769 = vmul.f32 %v3699, %v3719
        %v3770 = vmul.f32 %v3700, %v3718
        %v3771 = vmul.f32 %v3701, %v3719
        %v3772 = vmul.f32 %v3702, %v3718
        %v3773 = vmul.f32 %v3703, %v3719
        %v3774 = vmul.f32 %v3704, %v3718
        %v3775 = vmul.f32 %v3705, %v3719
        %v3776 = vmul.f32 %v3706, %v3718
        %v3777 = vmul.f32 %v3707, %v3719
        %v3778 = vmul.f32 %v3708, %v3718
        %v3779 = vmul.f32 %v3709, %v3719
        %v3780 = vmul.f32 %v3710, %v3718
        %v3781 = vmul.f32 %v3711, %v3719
        %v3782 = vmul.f32 %v3712, %v3718
        %v3783 = vmul.f32 %v3713, %v3719
        %v3784 = vmul.f32 %v3714, %v3718
        %v3785 = vmul.f32 %v3715, %v3719
        %v3786 = vld [vmem:[%s545] sm:$0x3]
        %v3788 = vperm.slane %v3786, 0
        %v3789 = vperm.slane %v3786, 1
        %v3792 = vadd.f32 %v3722, %v3788
        %v3793 = vadd.f32 %v3723, %v3789
        %v3794 = vadd.f32 %v3724, %v3788
        %v3795 = vadd.f32 %v3725, %v3789
        %v3796 = vadd.f32 %v3726, %v3788
        %v3797 = vadd.f32 %v3727, %v3789
        %v3798 = vadd.f32 %v3728, %v3788
        %v3799 = vadd.f32 %v3729, %v3789
        %v3800 = vadd.f32 %v3730, %v3788
        %v3801 = vadd.f32 %v3731, %v3789
        %v3802 = vadd.f32 %v3732, %v3788
        %v3803 = vadd.f32 %v3733, %v3789
        %v3804 = vadd.f32 %v3734, %v3788
        %v3805 = vadd.f32 %v3735, %v3789
        %v3806 = vadd.f32 %v3736, %v3788
        %v3807 = vadd.f32 %v3737, %v3789
        %v3808 = vadd.f32 %v3738, %v3788
        %v3809 = vadd.f32 %v3739, %v3789
        %v3810 = vadd.f32 %v3740, %v3788
        %v3811 = vadd.f32 %v3741, %v3789
        %v3812 = vadd.f32 %v3742, %v3788
        %v3813 = vadd.f32 %v3743, %v3789
        %v3814 = vadd.f32 %v3744, %v3788
        %v3815 = vadd.f32 %v3745, %v3789
        %v3816 = vadd.f32 %v3746, %v3788
        %v3817 = vadd.f32 %v3747, %v3789
        %v3818 = vadd.f32 %v3748, %v3788
        %v3819 = vadd.f32 %v3749, %v3789
        %v3820 = vadd.f32 %v3750, %v3788
        %v3821 = vadd.f32 %v3751, %v3789
        %v3822 = vadd.f32 %v3752, %v3788
        %v3823 = vadd.f32 %v3753, %v3789
        %v3824 = vadd.f32 %v3754, %v3788
        %v3825 = vadd.f32 %v3755, %v3789
        %v3826 = vadd.f32 %v3756, %v3788
        %v3827 = vadd.f32 %v3757, %v3789
        %v3828 = vadd.f32 %v3758, %v3788
        %v3829 = vadd.f32 %v3759, %v3789
        %v3830 = vadd.f32 %v3760, %v3788
        %v3831 = vadd.f32 %v3761, %v3789
        %v3832 = vadd.f32 %v3762, %v3788
        %v3833 = vadd.f32 %v3763, %v3789
        %v3834 = vadd.f32 %v3764, %v3788
        %v3835 = vadd.f32 %v3765, %v3789
        %v3836 = vadd.f32 %v3766, %v3788
        %v3837 = vadd.f32 %v3767, %v3789
        %v3838 = vadd.f32 %v3768, %v3788
        %v3839 = vadd.f32 %v3769, %v3789
        %v3840 = vadd.f32 %v3770, %v3788
        %v3841 = vadd.f32 %v3771, %v3789
        %v3842 = vadd.f32 %v3772, %v3788
        %v3843 = vadd.f32 %v3773, %v3789
        %v3844 = vadd.f32 %v3774, %v3788
        %v3845 = vadd.f32 %v3775, %v3789
        %v3846 = vadd.f32 %v3776, %v3788
        %v3847 = vadd.f32 %v3777, %v3789
        %v3848 = vadd.f32 %v3778, %v3788
        %v3849 = vadd.f32 %v3779, %v3789
        %v3850 = vadd.f32 %v3780, %v3788
        %v3851 = vadd.f32 %v3781, %v3789
        %v3852 = vadd.f32 %v3782, %v3788
        %v3853 = vadd.f32 %v3783, %v3789
        %v3854 = vadd.f32 %v3784, %v3788
        %v3855 = vadd.f32 %v3785, %v3789
        %v3856 = vmax.f32 %v3792, 0.0
        %v3857 = vmax.f32 %v3793, 0.0
        %v3858 = vmax.f32 %v3794, 0.0
        %v3859 = vmax.f32 %v3795, 0.0
        %v3860 = vmax.f32 %v3796, 0.0
        %v3861 = vmax.f32 %v3797, 0.0
        %v3862 = vmax.f32 %v3798, 0.0
        %v3863 = vmax.f32 %v3799, 0.0
        %v3864 = vmax.f32 %v3800, 0.0
        %v3865 = vmax.f32 %v3801, 0.0
        %v3866 = vmax.f32 %v3802, 0.0
        %v3867 = vmax.f32 %v3803, 0.0
        %v3868 = vmax.f32 %v3804, 0.0
        %v3869 = vmax.f32 %v3805, 0.0
        %v3870 = vmax.f32 %v3806, 0.0
        %v3871 = vmax.f32 %v3807, 0.0
        %v3872 = vmax.f32 %v3808, 0.0
        %v3873 = vmax.f32 %v3809, 0.0
        %v3874 = vmax.f32 %v3810, 0.0
        %v3875 = vmax.f32 %v3811, 0.0
        %v3876 = vmax.f32 %v3812, 0.0
        %v3877 = vmax.f32 %v3813, 0.0
        %v3878 = vmax.f32 %v3814, 0.0
        %v3879 = vmax.f32 %v3815, 0.0
        %v3880 = vmax.f32 %v3816, 0.0
        %v3881 = vmax.f32 %v3817, 0.0
        %v3882 = vmax.f32 %v3818, 0.0
        %v3883 = vmax.f32 %v3819, 0.0
        %v3884 = vmax.f32 %v3820, 0.0
        %v3885 = vmax.f32 %v3821, 0.0
        %v3886 = vmax.f32 %v3822, 0.0
        %v3887 = vmax.f32 %v3823, 0.0
        %v3888 = vmax.f32 %v3824, 0.0
        %v3889 = vmax.f32 %v3825, 0.0
        %v3890 = vmax.f32 %v3826, 0.0
        %v3891 = vmax.f32 %v3827, 0.0
        %v3892 = vmax.f32 %v3828, 0.0
        %v3893 = vmax.f32 %v3829, 0.0
        %v3894 = vmax.f32 %v3830, 0.0
        %v3895 = vmax.f32 %v3831, 0.0
        %v3896 = vmax.f32 %v3832, 0.0
        %v3897 = vmax.f32 %v3833, 0.0
        %v3898 = vmax.f32 %v3834, 0.0
        %v3899 = vmax.f32 %v3835, 0.0
        %v3900 = vmax.f32 %v3836, 0.0
        %v3901 = vmax.f32 %v3837, 0.0
        %v3902 = vmax.f32 %v3838, 0.0
        %v3903 = vmax.f32 %v3839, 0.0
        %v3904 = vmax.f32 %v3840, 0.0
        %v3905 = vmax.f32 %v3841, 0.0
        %v3906 = vmax.f32 %v3842, 0.0
        %v3907 = vmax.f32 %v3843, 0.0
        %v3908 = vmax.f32 %v3844, 0.0
        %v3909 = vmax.f32 %v3845, 0.0
        %v3910 = vmax.f32 %v3846, 0.0
        %v3911 = vmax.f32 %v3847, 0.0
        %v3912 = vmax.f32 %v3848, 0.0
        %v3913 = vmax.f32 %v3849, 0.0
        %v3914 = vmax.f32 %v3850, 0.0
        %v3915 = vmax.f32 %v3851, 0.0
        %v3916 = vmax.f32 %v3852, 0.0
        %v3917 = vmax.f32 %v3853, 0.0
        %v3918 = vmax.f32 %v3854, 0.0
        %v3919 = vmax.f32 %v3855, 0.0
        %3920 = vst [vmem:[%s486] sm:$0xff] %v3856
        %3921 = vst [vmem:[%s486 + $0x8] sm:$0xff] %v3857
        %3922 = vst [vmem:[%s486 + $0x10] sm:$0xff] %v3858
        %3923 = vst [vmem:[%s486 + $0x18] sm:$0xff] %v3859
        %3924 = vst [vmem:[%s486 + $0x20] sm:$0xff] %v3860
        %3925 = vst [vmem:[%s486 + $0x28] sm:$0xff] %v3861
        %3926 = vst [vmem:[%s486 + $0x30] sm:$0xff] %v3862
        %3927 = vst [vmem:[%s486 + $0x38] sm:$0xff] %v3863
        %3928 = vst [vmem:[%s486 + $0x40] sm:$0xff] %v3864
        %3929 = vst [vmem:[%s486 + $0x48] sm:$0xff] %v3865
        %3930 = vst [vmem:[%s486 + $0x50] sm:$0xff] %v3866
        %3931 = vst [vmem:[%s486 + $0x58] sm:$0xff] %v3867
        %3932 = vst [vmem:[%s486 + $0x60] sm:$0xff] %v3868
        %3933 = vst [vmem:[%s486 + $0x68] sm:$0xff] %v3869
        %3934 = vst [vmem:[%s486 + $0x70] sm:$0xff] %v3870
        %3935 = vst [vmem:[%s486 + $0x78] sm:$0xff] %v3871
        %3936 = vst [vmem:[%s486 + $0x80] sm:$0xff] %v3872
        %3937 = vst [vmem:[%s486 + $0x88] sm:$0xff] %v3873
        %3938 = vst [vmem:[%s486 + $0x90] sm:$0xff] %v3874
        %3939 = vst [vmem:[%s486 + $0x98] sm:$0xff] %v3875
        %3940 = vst [vmem:[%s486 + $0xa0] sm:$0xff] %v3876
        %3941 = vst [vmem:[%s486 + $0xa8] sm:$0xff] %v3877
        %3942 = vst [vmem:[%s486 + $0xb0] sm:$0xff] %v3878
        %3943 = vst [vmem:[%s486 + $0xb8] sm:$0xff] %v3879
        %3944 = vst [vmem:[%s486 + $0xc0] sm:$0xff] %v3880
        %3945 = vst [vmem:[%s486 + $0xc8] sm:$0xff] %v3881
        %3946 = vst [vmem:[%s486 + $0xd0] sm:$0xff] %v3882
        %3947 = vst [vmem:[%s486 + $0xd8] sm:$0xff] %v3883
        %3948 = vst [vmem:[%s486 + $0xe0] sm:$0xff] %v3884
        %3949 = vst [vmem:[%s486 + $0xe8] sm:$0xff] %v3885
        %3950 = vst [vmem:[%s486 + $0xf0] sm:$0xff] %v3886
        %3951 = vst [vmem:[%s486 + $0xf8] sm:$0xff] %v3887
        %3952 = vst [vmem:[%s486 + $0x100] sm:$0xff] %v3888
        %3953 = vst [vmem:[%s486 + $0x108] sm:$0xff] %v3889
        %3954 = vst [vmem:[%s486 + $0x110] sm:$0xff] %v3890
        %3955 = vst [vmem:[%s486 + $0x118] sm:$0xff] %v3891
        %3956 = vst [vmem:[%s486 + $0x120] sm:$0xff] %v3892
        %3957 = vst [vmem:[%s486 + $0x128] sm:$0xff] %v3893
        %3958 = vst [vmem:[%s486 + $0x130] sm:$0xff] %v3894
        %3959 = vst [vmem:[%s486 + $0x138] sm:$0xff] %v3895
        %3960 = vst [vmem:[%s486 + $0x140] sm:$0xff] %v3896
        %3961 = vst [vmem:[%s486 + $0x148] sm:$0xff] %v3897
        %3962 = vst [vmem:[%s486 + $0x150] sm:$0xff] %v3898
        %3963 = vst [vmem:[%s486 + $0x158] sm:$0xff] %v3899
        %3964 = vst [vmem:[%s486 + $0x160] sm:$0xff] %v3900
        %3965 = vst [vmem:[%s486 + $0x168] sm:$0xff] %v3901
        %3966 = vst [vmem:[%s486 + $0x170] sm:$0xff] %v3902
        %3967 = vst [vmem:[%s486 + $0x178] sm:$0xff] %v3903
        %3968 = vst [vmem:[%s486 + $0x180] sm:$0xff] %v3904
        %3969 = vst [vmem:[%s486 + $0x188] sm:$0xff] %v3905
        %3970 = vst [vmem:[%s486 + $0x190] sm:$0xff] %v3906
        %3971 = vst [vmem:[%s486 + $0x198] sm:$0xff] %v3907
        %3972 = vst [vmem:[%s486 + $0x1a0] sm:$0xff] %v3908
        %3973 = vst [vmem:[%s486 + $0x1a8] sm:$0xff] %v3909
        %3974 = vst [vmem:[%s486 + $0x1b0] sm:$0xff] %v3910
        %3975 = vst [vmem:[%s486 + $0x1b8] sm:$0xff] %v3911
        %3976 = vst [vmem:[%s486 + $0x1c0] sm:$0xff] %v3912
        %3977 = vst [vmem:[%s486 + $0x1c8] sm:$0xff] %v3913
        %3978 = vst [vmem:[%s486 + $0x1d0] sm:$0xff] %v3914
        %3979 = vst [vmem:[%s486 + $0x1d8] sm:$0xff] %v3915
        %3980 = vst [vmem:[%s486 + $0x1e0] sm:$0xff] %v3916
        %3981 = vst [vmem:[%s486 + $0x1e8] sm:$0xff] %v3917
        %3982 = vst [vmem:[%s486 + $0x1f0] sm:$0xff] %v3918
        %3983 = vst [vmem:[%s486 + $0x1f8] sm:$0xff] %v3919
        %s3984 = sand.u32 %s271, 1
        %s3985 = scalar_lea.sflag [#allocation3], %s3984
        %s3986 = sand.u32 %s271, 1
        %s3987 = smul.addr %s3986, 512
        %s3988 = scalar_lea.vmem [#allocation2], %s3987
        // Predicated region
        $region53: #{aspp_forward.9} parent=51 // pred_check
          %p3989 = pneg %p281
        $region54: #{aspp_forward.9} parent=51 // pred_check_branch
          %3991 = sbr.rel (%p3989) target = $region56
        $region55: #{aspp_forward.9} parent=51 // pred_region
          %s3992 = smul.u32 32, %s28
          %s3993 = smul.u32 2, %s29
          %3995 = vsyncadd %s3985, 0
          %s3996 = smul.addr %s3992, 2
          %s3997 = sadd.s32 %s3993, %s3996
          %s3998 = smul.addr %s27, 64
          %s3999 = sadd.s32 %s3997, %s3998
          %s4000 = smul.addr %s3999, 8
          %s4001 = scalar_lea.hbm %s8, %s4000
          %s4002 = sshll.u32 %s3988, 4
          %s4003 = int_to_ptr.vmem [resolvable:$true] %s4002
          %s4004 = sshll.u32 %s4001, 4
          %s4005 = int_to_ptr.hbm [resolvable:$true] %s4004
          %4010 = dma.vmem_to_hbm [thread:$0]  %s4003, 8192, %s4005, %s3985, 256, 256, 16
        $region56: #{aspp_forward.9} parent=51 // pred_fallthru
          _
      $region52: #{aspp_forward.9} parent=5 // pred_fallthru
        _
      %p4011 = scmp.le.s32.totalorder 2, %s17
      // Predicated region
      $region57: #{aspp_forward.9} parent=5 // pred_check
        %p4012 = pneg %p4011
      $region58: #{aspp_forward.9} parent=5 // pred_check_branch
        %4014 = sbr.rel (%p4012) target = $region60
      $region59: #{aspp_forward.9} parent=5 // pred_region
        %s4015 = ssub.s32 %s17, 2
        // Predicated region
        $region61: #{aspp_forward.9} parent=59 // pred_check
          %p4016 = pneg %p287
        $region62: #{aspp_forward.9} parent=59 // pred_check_branch
          %4018 = sbr.rel (%p4016) target = $region64
        $region63: #{aspp_forward.9} parent=59 // pred_region
          %s4019 = sand.u32 %s272, 1
          %s4020 = scalar_lea.sflag [#allocation3], %s4019
          %s4021 = sand.u32 %s272, 1
          %s4022 = smul.addr %s4021, 512
          %s4023 = scalar_lea.vmem [#allocation2], %s4022
          %4025 = dma.done %s4020, 8192
        $region64: #{aspp_forward.9} parent=59 // pred_fallthru
          _
      $region60: #{aspp_forward.9} parent=5 // pred_fallthru
        _
    $region6: #{aspp_forward.9} parent=1 // loop_footer
      %s21 = sadd.s32 1, %s17
    $region7: #{aspp_forward.9} parent=1 // loop_footer_branch
      %16 = sbr.rel target = $region3
    $region8: #{aspp_forward.9} parent=1 // loop_exit
      _
    %4026 = vsyncpa [#allocation3], 1
    %s4027 = scalar_lea.sflag [#allocation3], 1
    %4028 = vsyncpa %s4027, 1

</llo_original>
